<compile_context>
chip_gen: v7x
topology: tpu7x:2x2x1
jax: 0.10.0
libtpu: 0.0.40
codegen_flags: <defaults>
</compile_context>

<pallas_src>
import jax
import jax.numpy as jnp
from jax.experimental import pallas as pl
from jax.experimental.pallas import tpu as pltpu

# Module constructor args: SFTLayer(s1, s2, k, p)
S1, STRIDE, K, PAD = 1, 1, 3, 1
CIN = 32
COUT = 64 * S1
CF = 2 * CIN                    # fused (scale|shift) intermediate channels = 64
NTAPS = K * K
NT = 16                         # mask lanes (NTAPS padded up)
assert STRIDE == 1              # TODO(synk): general stride s2 > 1 (strided output) not implemented
assert PAD == (K - 1) // 2      # "same" convolution assumed (spatial preserved)


def _pick_nb(n, hw):
    """Batch elements per grid step: VMEM-budgeted, and >=2 grid steps when possible."""
    per_row_bytes = 4608            # dbl-buffered I/O blocks + halo scratch + f32 temporaries
    budget = 12 << 20               # conservative: fits v7x (64 MiB VMEM, 2 cores) with headroom
    rows_cap = max(1, budget // (per_row_bytes * hw))
    par_cap = max(1, n // 2)        # keep >=2 'parallel' steps (v7x megacore + pipelining)
    cap = max(1, min(rows_cap, par_cap, n))
    nb = 1
    for d in range(1, cap + 1):
        if n % d == 0:
            nb = d
    return nb
    # TODO(synk): for very large H*W an additional spatial tile axis (with halo rows) is needed.


@jax.jit
def sft_layer(x0, x1, params):
    N, H, W, _ = x1.shape
    HW = H * W
    NB = _pick_nb(N, HW)
    R = NB * HW                          # matmul M dimension per grid step
    HALO = PAD * W + PAD                 # max |row offset| of any tap in the flat layout
    BASE = -(-HALO // 16) * 16           # aligned start of the valid region in the halo scratch

    # ---- wrapper-side weight fusion -------------------------------------------------
    w0 = jnp.concatenate([params["w0s"], params["w0h"]], axis=1).astype(jnp.bfloat16)   # (32, 64)
    b0 = jnp.concatenate([params["b0s"], params["b0h"]], axis=1).astype(jnp.float32)    # (1, 64)

    w1s = params["w1s"].reshape(NTAPS, CIN, COUT)
    w1h = params["w1h"].reshape(NTAPS, CIN, COUT)
    z = jnp.zeros_like(w1s)
    # per tap: rows 0:32 = scale-branch channels -> cols 0:64; rows 32:64 = shift-branch -> cols 64:128
    w1t = jnp.concatenate(
        [jnp.concatenate([w1s, z], axis=-1),
         jnp.concatenate([z, w1h], axis=-1)],
        axis=1).astype(jnp.bfloat16)                                                     # (9, 64, 128)
    b1 = jnp.concatenate([params["b1s"], params["b1h"]], axis=1).astype(jnp.float32)     # (1, 128)

    # ---- wrapper-side per-tap border masks (no in-kernel iota / div / mod) -----------
    ii = jnp.arange(HW, dtype=jnp.int32) // W
    jj = jnp.arange(HW, dtype=jnp.int32) % W
    cols = []
    for a in range(K):
        for b in range(K):
            da, db = a - PAD, b - PAD
            cols.append((ii + da >= 0) & (ii + da < H) & (jj + db >= 0) & (jj + db < W))
    tapmask = jnp.stack(cols, axis=-1).astype(jnp.float32)                               # (HW, 9)
    tapmask = jnp.pad(tapmask, ((0, 0), (0, NT - NTAPS)))                                # (HW, 16)
    tapmask = jnp.broadcast_to(tapmask[None], (NB, HW, NT))                              # (NB, HW, 16)

    x0r = x0.reshape(N, HW, COUT)
    x1r = x1.reshape(N, HW, CIN).astype(jnp.bfloat16)

    def kernel(x0_ref, x1_ref, w0_ref, b0_ref, w1_ref, b1_ref, mask_ref,
               out_ref, scale_ref, shift_ref, yhalo_ref):
        # ---- fused 1x1 conv (+ bias + leaky_relu(0.1)) for both branches -> (R, 64) f32 ----
        x1f = x1_ref[...].reshape(R, CIN)
        y = jnp.dot(x1f, w0_ref[...], preferred_element_type=jnp.float32) + b0_ref[...]
        y = jnp.where(y >= 0.0, y, 0.1 * y)

        # ---- halo scratch: write y once; every 3x3 tap is a static-offset slice read ----
        yhalo_ref[pl.ds(0, BASE), :] = jnp.zeros((BASE, CF), jnp.float32)
        yhalo_ref[pl.ds(BASE + R, BASE), :] = jnp.zeros((BASE, CF), jnp.float32)
        yhalo_ref[pl.ds(BASE, R), :] = y

        tm = mask_ref[...].reshape(R, NT)        # per-tap border masks (built in the wrapper)
        y_center = y.astype(jnp.bfloat16)

        # ---- both 3x3 convs: 9 per-tap matmuls, register-accumulated (no patch matrix) ----
        acc = jnp.zeros((R, 2 * COUT), jnp.float32)
        t = 0
        for a in range(K):
            for b in range(K):
                da, db = a - PAD, b - PAD
                off = da * W + db
                if off == 0:
                    tap = y_center                               # center tap: always valid
                else:
                    ysl = yhalo_ref[pl.ds(BASE + off, R), :]     # shifted read, no roll
                    tap = (ysl * tm[:, t:t + 1]).astype(jnp.bfloat16)
                acc = acc + jnp.dot(tap, w1_ref[t], preferred_element_type=jnp.float32)
                t += 1
        ss = acc + b1_ref[...]                                   # (R, 128) = [scale | shift]

        # ---- SFT fuse: out = x0 * (scale + 1) + shift ----
        scale = ss[:, :COUT]
        shift = ss[:, COUT:]
        x0v = x0_ref[...].reshape(R, COUT)
        outv = x0v * (scale + 1.0) + shift

        # TODO(synk): stores are 64 lanes wide; a lane-dense (R//2, 128) repack would need an
        # in-kernel minor-dim reshape whose lowering is not guaranteed, so it is skipped.
        out_ref[...] = outv.reshape(NB, HW, COUT).astype(out_ref.dtype)
        scale_ref[...] = scale.reshape(NB, HW, COUT)
        shift_ref[...] = shift.reshape(NB, HW, COUT)

    def bspec(c):
        return pl.BlockSpec((NB, HW, c), lambda n: (n, 0, 0))

    def cspec(shp):
        return pl.BlockSpec(shp, lambda n, _r=len(shp): (0,) * _r)

    grid_spec = pltpu.PrefetchScalarGridSpec(
        num_scalar_prefetch=0,
        grid=(N // NB,),
        in_specs=[
            bspec(COUT),                      # x0
            bspec(CIN),                       # x1 (bf16)
            cspec((CIN, CF)),                 # fused 1x1 weights
            cspec((1, CF)),                   # fused 1x1 bias
            cspec((NTAPS, CF, 2 * COUT)),     # per-tap block-diagonal 3x3 weights
            cspec((1, 2 * COUT)),             # fused 3x3 bias
            cspec((NB, HW, NT)),              # per-tap border masks
        ],
        out_specs=[bspec(COUT), bspec(COUT), bspec(COUT)],
        scratch_shapes=[pltpu.VMEM((R + 2 * BASE, CF), jnp.float32)],   # halo-padded y
    )

    out_shapes = (
        jax.ShapeDtypeStruct((N, HW, COUT), x0.dtype),
        jax.ShapeDtypeStruct((N, HW, COUT), jnp.float32),
        jax.ShapeDtypeStruct((N, HW, COUT), jnp.float32),
    )

    out_f, scale_f, shift_f = pl.pallas_call(
        kernel,
        out_shape=out_shapes,
        grid_spec=grid_spec,
        compiler_params=pltpu.CompilerParams(
            dimension_semantics=("parallel",),
            vmem_limit_bytes=32 * 1024 * 1024),
    )(x0r, x1r, w0, b0, w1t, b1, tapmask)

    out = out_f.reshape(N, H, W, COUT)
    scale = scale_f.reshape(N, H, W, COUT)
    shift = shift_f.reshape(N, H, W, COUT)
    return out, scale, shift


def ref_forward(x0, x1, params):
    """Pure-JAX f32 reference (NHWC / HWIO), mirrors the PyTorch module."""
    dn = ("NHWC", "HWIO", "NHWC")

    def branch(w0, b0, w1, b1):
        y = jnp.einsum("nhwc,cd->nhwd", x1, w0) + b0[0]
        y = jnp.where(y >= 0.0, y, 0.1 * y)
        z = jax.lax.conv_general_dilated(
            y, w1, window_strides=(STRIDE, STRIDE),
            padding=[(PAD, PAD), (PAD, PAD)], dimension_numbers=dn)
        return z + b1[0]

    scale = branch(params["w0s"], params["b0s"], params["w1s"], params["b1s"])
    shift = branch(params["w0h"], params["b0h"], params["w1h"], params["b1h"])
    return x0 * (scale + 1.0) + shift, scale, shift


if __name__ == "__main__":
    key = jax.random.PRNGKey(0)
    keys = jax.random.split(key, 10)

    N, H, W = 2, 16, 16
    params = {
        "w0s": jax.random.normal(keys[0], (CIN, CIN), jnp.float32) * 0.1,
        "b0s": jax.random.normal(keys[1], (1, CIN), jnp.float32) * 0.1,
        "w1s": jax.random.normal(keys[2], (K, K, CIN, COUT), jnp.float32) * 0.05,
        "b1s": jax.random.normal(keys[3], (1, COUT), jnp.float32) * 0.1,
        "w0h": jax.random.normal(keys[4], (CIN, CIN), jnp.float32) * 0.1,
        "b0h": jax.random.normal(keys[5], (1, CIN), jnp.float32) * 0.1,
        "w1h": jax.random.normal(keys[6], (K, K, CIN, COUT), jnp.float32) * 0.05,
        "b1h": jax.random.normal(keys[7], (1, COUT), jnp.float32) * 0.1,
    }
    x0 = jax.random.normal(keys[8], (N, H, W, COUT), jnp.float32)
    x1 = jax.random.normal(keys[9], (N, H, W, CIN), jnp.float32)

    out, scale, shift = sft_layer(x0, x1, params)
    jax.block_until_ready((out, scale, shift))

    ref_out, ref_scale, ref_shift = ref_forward(x0, x1, params)
    # bf16 MXU operands -> slightly looser tolerance than pure-f32; structural bugs
    # (wrong tap / mask / weight placement) would be off by O(0.1-1.0).
    assert jnp.allclose(scale, ref_scale, rtol=5e-2, atol=5e-2)
    assert jnp.allclose(shift, ref_shift, rtol=5e-2, atol=5e-2)
    assert jnp.allclose(out, ref_out, rtol=5e-2, atol=5e-2)

    print("KERNEL_OK")
</pallas_src>

<mosaic_0001>
module attributes {stable_mosaic.version = 11 : i64} {
  func.func @kernel(%arg0: i32, %arg1: memref<1x256x64xf32, #tpu.memory_space<vmem>>, %arg2: memref<1x256x32xbf16, #tpu.memory_space<vmem>>, %arg3: memref<32x64xbf16, #tpu.memory_space<vmem>>, %arg4: memref<1x64xf32, #tpu.memory_space<vmem>>, %arg5: memref<9x64x128xbf16, #tpu.memory_space<vmem>>, %arg6: memref<1x128xf32, #tpu.memory_space<vmem>>, %arg7: memref<1x256x16xf32, #tpu.memory_space<vmem>>, %arg8: memref<1x256x64xf32, #tpu.memory_space<vmem>>, %arg9: memref<1x256x64xf32, #tpu.memory_space<vmem>>, %arg10: memref<1x256x64xf32, #tpu.memory_space<vmem>>, %arg11: memref<320x64xf32, #tpu.memory_space<vmem>>) attributes {dimension_semantics = [#tpu.dimension_semantics<parallel>], iteration_bounds = array<i64: 2>, scalar_prefetch = 0 : i64, scratch_operands = 1 : i64, tpu.core_type = #tpu.core_type<tc>, window_params = [{transform_indices = @transform_0, window_bounds = array<i64: 1, 256, 64>}, {transform_indices = @transform_1, window_bounds = array<i64: 1, 256, 32>}, {pipeline_mode = #tpu.pipeline_mode<synchronous>, transform_indices = @transform_2, window_bounds = array<i64: 32, 64>}, {pipeline_mode = #tpu.pipeline_mode<synchronous>, transform_indices = @transform_3, window_bounds = array<i64: 1, 64>}, {pipeline_mode = #tpu.pipeline_mode<synchronous>, transform_indices = @transform_4, window_bounds = array<i64: 9, 64, 128>}, {pipeline_mode = #tpu.pipeline_mode<synchronous>, transform_indices = @transform_5, window_bounds = array<i64: 1, 128>}, {pipeline_mode = #tpu.pipeline_mode<synchronous>, transform_indices = @transform_6, window_bounds = array<i64: 1, 256, 16>}, {transform_indices = @transform_7, window_bounds = array<i64: 1, 256, 64>}, {transform_indices = @transform_8, window_bounds = array<i64: 1, 256, 64>}, {transform_indices = @transform_9, window_bounds = array<i64: 1, 256, 64>}]} {
    %c0 = arith.constant 0 : index
    %c0_0 = arith.constant 0 : index
    %c0_1 = arith.constant 0 : index
    %0 = vector.load %arg2[%c0, %c0_0, %c0_1] : memref<1x256x32xbf16, #tpu.memory_space<vmem>>, vector<1x256x32xbf16>
    %1 = vector.shape_cast %0 : vector<1x256x32xbf16> to vector<256x32xbf16>
    %c0_2 = arith.constant 0 : index
    %c0_3 = arith.constant 0 : index
    %2 = vector.load %arg3[%c0_2, %c0_3] : memref<32x64xbf16, #tpu.memory_space<vmem>>, vector<32x64xbf16>
    %cst = arith.constant dense<0.000000e+00> : vector<256x64xf32>
    %3 = tpu.matmul %1, %2, %cst {dimension_numbers = #tpu.dot_dimension_numbers<[1], [0], [0], [1], [0, 0, 1, 1], [], []>} : vector<256x32xbf16>, vector<32x64xbf16>, vector<256x64xf32> -> vector<256x64xf32>
    %c0_4 = arith.constant 0 : index
    %c0_5 = arith.constant 0 : index
    %4 = vector.load %arg4[%c0_4, %c0_5] : memref<1x64xf32, #tpu.memory_space<vmem>>, vector<1x64xf32>
    %5 = vector.broadcast %4 : vector<1x64xf32> to vector<256x64xf32>
    %6 = arith.addf %3, %5 : vector<256x64xf32>
    %cst_6 = arith.constant 0.000000e+00 : f32
    %7 = vector.broadcast %cst_6 : f32 to vector<256x64xf32>
    %8 = arith.cmpf oge, %6, %7 : vector<256x64xf32>
    %cst_7 = arith.constant 1.000000e-01 : f32
    %9 = vector.broadcast %cst_7 : f32 to vector<256x64xf32>
    %10 = arith.mulf %9, %6 : vector<256x64xf32>
    %11 = arith.select %8, %6, %10 : vector<256x64xi1>, vector<256x64xf32>
    %cst_8 = arith.constant 0.000000e+00 : f32
    %12 = vector.broadcast %cst_8 : f32 to vector<32x64xf32>
    %c0_9 = arith.constant 0 : index
    %c0_10 = arith.constant 0 : index
    %13 = vector.load %arg11[%c0_9, %c0_10] : memref<320x64xf32, #tpu.memory_space<vmem>>, vector<32x64xf32>
    tpu.vector_store %arg11[%c0_9, %c0_10], %12 {strides = array<i32>} : memref<320x64xf32, #tpu.memory_space<vmem>>, vector<32x64xf32>,
    %cst_11 = arith.constant 0.000000e+00 : f32
    %14 = vector.broadcast %cst_11 : f32 to vector<32x64xf32>
    %c288 = arith.constant 288 : index
    %c0_12 = arith.constant 0 : index
    %15 = vector.load %arg11[%c288, %c0_12] : memref<320x64xf32, #tpu.memory_space<vmem>>, vector<32x64xf32>
    tpu.vector_store %arg11[%c288, %c0_12], %14 {strides = array<i32>} : memref<320x64xf32, #tpu.memory_space<vmem>>, vector<32x64xf32>,
    %c32 = arith.constant 32 : index
    %c0_13 = arith.constant 0 : index
    %16 = vector.load %arg11[%c32, %c0_13] : memref<320x64xf32, #tpu.memory_space<vmem>>, vector<256x64xf32>
    tpu.vector_store %arg11[%c32, %c0_13], %11 {strides = array<i32>} : memref<320x64xf32, #tpu.memory_space<vmem>>, vector<256x64xf32>,
    %c0_14 = arith.constant 0 : index
    %c0_15 = arith.constant 0 : index
    %c0_16 = arith.constant 0 : index
    %17 = vector.load %arg7[%c0_14, %c0_15, %c0_16] : memref<1x256x16xf32, #tpu.memory_space<vmem>>, vector<1x256x16xf32>
    %18 = vector.shape_cast %17 : vector<1x256x16xf32> to vector<256x16xf32>
    %19 = arith.truncf %11 : vector<256x64xf32> to vector<256x64xbf16>
    %cst_17 = arith.constant 0.000000e+00 : f32
    %20 = vector.broadcast %cst_17 : f32 to vector<256x128xf32>
    %c15 = arith.constant 15 : index
    %c0_18 = arith.constant 0 : index
    %21 = vector.load %arg11[%c15, %c0_18] : memref<320x64xf32, #tpu.memory_space<vmem>>, vector<256x64xf32>
    %22 = vector.extract_strided_slice %18 {offsets = [0, 0], sizes = [256, 1], strides = [1, 1]} : vector<256x16xf32> to vector<256x1xf32>
    %23 = vector.broadcast %22 : vector<256x1xf32> to vector<256x64xf32>
    %24 = arith.mulf %21, %23 : vector<256x64xf32>
    %25 = arith.truncf %24 : vector<256x64xf32> to vector<256x64xbf16>
    %c0_19 = arith.constant 0 : index
    %c0_20 = arith.constant 0 : index
    %c0_21 = arith.constant 0 : index
    %26 = vector.load %arg5[%c0_19, %c0_20, %c0_21] : memref<9x64x128xbf16, #tpu.memory_space<vmem>>, vector<1x64x128xbf16>
    %27 = vector.shape_cast %26 : vector<1x64x128xbf16> to vector<64x128xbf16>
    %cst_22 = arith.constant dense<0.000000e+00> : vector<256x128xf32>
    %28 = tpu.matmul %25, %27, %cst_22 {dimension_numbers = #tpu.dot_dimension_numbers<[1], [0], [0], [1], [0, 0, 1, 1], [], []>} : vector<256x64xbf16>, vector<64x128xbf16>, vector<256x128xf32> -> vector<256x128xf32>
    %29 = arith.addf %20, %28 : vector<256x128xf32>
    %c16 = arith.constant 16 : index
    %c0_23 = arith.constant 0 : index
    %30 = vector.load %arg11[%c16, %c0_23] : memref<320x64xf32, #tpu.memory_space<vmem>>, vector<256x64xf32>
    %31 = vector.extract_strided_slice %18 {offsets = [0, 1], sizes = [256, 1], strides = [1, 1]} : vector<256x16xf32> to vector<256x1xf32>
    %32 = vector.broadcast %31 : vector<256x1xf32> to vector<256x64xf32>
    %33 = arith.mulf %30, %32 : vector<256x64xf32>
    %34 = arith.truncf %33 : vector<256x64xf32> to vector<256x64xbf16>
    %c1 = arith.constant 1 : index
    %c0_24 = arith.constant 0 : index
    %c0_25 = arith.constant 0 : index
    %35 = vector.load %arg5[%c1, %c0_24, %c0_25] : memref<9x64x128xbf16, #tpu.memory_space<vmem>>, vector<1x64x128xbf16>
    %36 = vector.shape_cast %35 : vector<1x64x128xbf16> to vector<64x128xbf16>
    %cst_26 = arith.constant dense<0.000000e+00> : vector<256x128xf32>
    %37 = tpu.matmul %34, %36, %cst_26 {dimension_numbers = #tpu.dot_dimension_numbers<[1], [0], [0], [1], [0, 0, 1, 1], [], []>} : vector<256x64xbf16>, vector<64x128xbf16>, vector<256x128xf32> -> vector<256x128xf32>
    %38 = arith.addf %29, %37 : vector<256x128xf32>
    %c17 = arith.constant 17 : index
    %c0_27 = arith.constant 0 : index
    %39 = vector.load %arg11[%c17, %c0_27] : memref<320x64xf32, #tpu.memory_space<vmem>>, vector<256x64xf32>
    %40 = vector.extract_strided_slice %18 {offsets = [0, 2], sizes = [256, 1], strides = [1, 1]} : vector<256x16xf32> to vector<256x1xf32>
    %41 = vector.broadcast %40 : vector<256x1xf32> to vector<256x64xf32>
    %42 = arith.mulf %39, %41 : vector<256x64xf32>
    %43 = arith.truncf %42 : vector<256x64xf32> to vector<256x64xbf16>
    %c2 = arith.constant 2 : index
    %c0_28 = arith.constant 0 : index
    %c0_29 = arith.constant 0 : index
    %44 = vector.load %arg5[%c2, %c0_28, %c0_29] : memref<9x64x128xbf16, #tpu.memory_space<vmem>>, vector<1x64x128xbf16>
    %45 = vector.shape_cast %44 : vector<1x64x128xbf16> to vector<64x128xbf16>
    %cst_30 = arith.constant dense<0.000000e+00> : vector<256x128xf32>
    %46 = tpu.matmul %43, %45, %cst_30 {dimension_numbers = #tpu.dot_dimension_numbers<[1], [0], [0], [1], [0, 0, 1, 1], [], []>} : vector<256x64xbf16>, vector<64x128xbf16>, vector<256x128xf32> -> vector<256x128xf32>
    %47 = arith.addf %38, %46 : vector<256x128xf32>
    %c31 = arith.constant 31 : index
    %c0_31 = arith.constant 0 : index
    %48 = vector.load %arg11[%c31, %c0_31] : memref<320x64xf32, #tpu.memory_space<vmem>>, vector<256x64xf32>
    %49 = vector.extract_strided_slice %18 {offsets = [0, 3], sizes = [256, 1], strides = [1, 1]} : vector<256x16xf32> to vector<256x1xf32>
    %50 = vector.broadcast %49 : vector<256x1xf32> to vector<256x64xf32>
    %51 = arith.mulf %48, %50 : vector<256x64xf32>
    %52 = arith.truncf %51 : vector<256x64xf32> to vector<256x64xbf16>
    %c3 = arith.constant 3 : index
    %c0_32 = arith.constant 0 : index
    %c0_33 = arith.constant 0 : index
    %53 = vector.load %arg5[%c3, %c0_32, %c0_33] : memref<9x64x128xbf16, #tpu.memory_space<vmem>>, vector<1x64x128xbf16>
    %54 = vector.shape_cast %53 : vector<1x64x128xbf16> to vector<64x128xbf16>
    %cst_34 = arith.constant dense<0.000000e+00> : vector<256x128xf32>
    %55 = tpu.matmul %52, %54, %cst_34 {dimension_numbers = #tpu.dot_dimension_numbers<[1], [0], [0], [1], [0, 0, 1, 1], [], []>} : vector<256x64xbf16>, vector<64x128xbf16>, vector<256x128xf32> -> vector<256x128xf32>
    %56 = arith.addf %47, %55 : vector<256x128xf32>
    %c4 = arith.constant 4 : index
    %c0_35 = arith.constant 0 : index
    %c0_36 = arith.constant 0 : index
    %57 = vector.load %arg5[%c4, %c0_35, %c0_36] : memref<9x64x128xbf16, #tpu.memory_space<vmem>>, vector<1x64x128xbf16>
    %58 = vector.shape_cast %57 : vector<1x64x128xbf16> to vector<64x128xbf16>
    %cst_37 = arith.constant dense<0.000000e+00> : vector<256x128xf32>
    %59 = tpu.matmul %19, %58, %cst_37 {dimension_numbers = #tpu.dot_dimension_numbers<[1], [0], [0], [1], [0, 0, 1, 1], [], []>} : vector<256x64xbf16>, vector<64x128xbf16>, vector<256x128xf32> -> vector<256x128xf32>
    %60 = arith.addf %56, %59 : vector<256x128xf32>
    %c33 = arith.constant 33 : index
    %c0_38 = arith.constant 0 : index
    %61 = vector.load %arg11[%c33, %c0_38] : memref<320x64xf32, #tpu.memory_space<vmem>>, vector<256x64xf32>
    %62 = vector.extract_strided_slice %18 {offsets = [0, 5], sizes = [256, 1], strides = [1, 1]} : vector<256x16xf32> to vector<256x1xf32>
    %63 = vector.broadcast %62 : vector<256x1xf32> to vector<256x64xf32>
    %64 = arith.mulf %61, %63 : vector<256x64xf32>
    %65 = arith.truncf %64 : vector<256x64xf32> to vector<256x64xbf16>
    %c5 = arith.constant 5 : index
    %c0_39 = arith.constant 0 : index
    %c0_40 = arith.constant 0 : index
    %66 = vector.load %arg5[%c5, %c0_39, %c0_40] : memref<9x64x128xbf16, #tpu.memory_space<vmem>>, vector<1x64x128xbf16>
    %67 = vector.shape_cast %66 : vector<1x64x128xbf16> to vector<64x128xbf16>
    %cst_41 = arith.constant dense<0.000000e+00> : vector<256x128xf32>
    %68 = tpu.matmul %65, %67, %cst_41 {dimension_numbers = #tpu.dot_dimension_numbers<[1], [0], [0], [1], [0, 0, 1, 1], [], []>} : vector<256x64xbf16>, vector<64x128xbf16>, vector<256x128xf32> -> vector<256x128xf32>
    %69 = arith.addf %60, %68 : vector<256x128xf32>
    %c47 = arith.constant 47 : index
    %c0_42 = arith.constant 0 : index
    %70 = vector.load %arg11[%c47, %c0_42] : memref<320x64xf32, #tpu.memory_space<vmem>>, vector<256x64xf32>
    %71 = vector.extract_strided_slice %18 {offsets = [0, 6], sizes = [256, 1], strides = [1, 1]} : vector<256x16xf32> to vector<256x1xf32>
    %72 = vector.broadcast %71 : vector<256x1xf32> to vector<256x64xf32>
    %73 = arith.mulf %70, %72 : vector<256x64xf32>
    %74 = arith.truncf %73 : vector<256x64xf32> to vector<256x64xbf16>
    %c6 = arith.constant 6 : index
    %c0_43 = arith.constant 0 : index
    %c0_44 = arith.constant 0 : index
    %75 = vector.load %arg5[%c6, %c0_43, %c0_44] : memref<9x64x128xbf16, #tpu.memory_space<vmem>>, vector<1x64x128xbf16>
    %76 = vector.shape_cast %75 : vector<1x64x128xbf16> to vector<64x128xbf16>
    %cst_45 = arith.constant dense<0.000000e+00> : vector<256x128xf32>
    %77 = tpu.matmul %74, %76, %cst_45 {dimension_numbers = #tpu.dot_dimension_numbers<[1], [0], [0], [1], [0, 0, 1, 1], [], []>} : vector<256x64xbf16>, vector<64x128xbf16>, vector<256x128xf32> -> vector<256x128xf32>
    %78 = arith.addf %69, %77 : vector<256x128xf32>
    %c48 = arith.constant 48 : index
    %c0_46 = arith.constant 0 : index
    %79 = vector.load %arg11[%c48, %c0_46] : memref<320x64xf32, #tpu.memory_space<vmem>>, vector<256x64xf32>
    %80 = vector.extract_strided_slice %18 {offsets = [0, 7], sizes = [256, 1], strides = [1, 1]} : vector<256x16xf32> to vector<256x1xf32>
    %81 = vector.broadcast %80 : vector<256x1xf32> to vector<256x64xf32>
    %82 = arith.mulf %79, %81 : vector<256x64xf32>
    %83 = arith.truncf %82 : vector<256x64xf32> to vector<256x64xbf16>
    %c7 = arith.constant 7 : index
    %c0_47 = arith.constant 0 : index
    %c0_48 = arith.constant 0 : index
    %84 = vector.load %arg5[%c7, %c0_47, %c0_48] : memref<9x64x128xbf16, #tpu.memory_space<vmem>>, vector<1x64x128xbf16>
    %85 = vector.shape_cast %84 : vector<1x64x128xbf16> to vector<64x128xbf16>
    %cst_49 = arith.constant dense<0.000000e+00> : vector<256x128xf32>
    %86 = tpu.matmul %83, %85, %cst_49 {dimension_numbers = #tpu.dot_dimension_numbers<[1], [0], [0], [1], [0, 0, 1, 1], [], []>} : vector<256x64xbf16>, vector<64x128xbf16>, vector<256x128xf32> -> vector<256x128xf32>
    %87 = arith.addf %78, %86 : vector<256x128xf32>
    %c49 = arith.constant 49 : index
    %c0_50 = arith.constant 0 : index
    %88 = vector.load %arg11[%c49, %c0_50] : memref<320x64xf32, #tpu.memory_space<vmem>>, vector<256x64xf32>
    %89 = vector.extract_strided_slice %18 {offsets = [0, 8], sizes = [256, 1], strides = [1, 1]} : vector<256x16xf32> to vector<256x1xf32>
    %90 = vector.broadcast %89 : vector<256x1xf32> to vector<256x64xf32>
    %91 = arith.mulf %88, %90 : vector<256x64xf32>
    %92 = arith.truncf %91 : vector<256x64xf32> to vector<256x64xbf16>
    %c8 = arith.constant 8 : index
    %c0_51 = arith.constant 0 : index
    %c0_52 = arith.constant 0 : index
    %93 = vector.load %arg5[%c8, %c0_51, %c0_52] : memref<9x64x128xbf16, #tpu.memory_space<vmem>>, vector<1x64x128xbf16>
    %94 = vector.shape_cast %93 : vector<1x64x128xbf16> to vector<64x128xbf16>
    %cst_53 = arith.constant dense<0.000000e+00> : vector<256x128xf32>
    %95 = tpu.matmul %92, %94, %cst_53 {dimension_numbers = #tpu.dot_dimension_numbers<[1], [0], [0], [1], [0, 0, 1, 1], [], []>} : vector<256x64xbf16>, vector<64x128xbf16>, vector<256x128xf32> -> vector<256x128xf32>
    %96 = arith.addf %87, %95 : vector<256x128xf32>
    %c0_54 = arith.constant 0 : index
    %c0_55 = arith.constant 0 : index
    %97 = vector.load %arg6[%c0_54, %c0_55] : memref<1x128xf32, #tpu.memory_space<vmem>>, vector<1x128xf32>
    %98 = vector.broadcast %97 : vector<1x128xf32> to vector<256x128xf32>
    %99 = arith.addf %96, %98 : vector<256x128xf32>
    %100 = vector.extract_strided_slice %99 {offsets = [0, 0], sizes = [256, 64], strides = [1, 1]} : vector<256x128xf32> to vector<256x64xf32>
    %101 = vector.extract_strided_slice %99 {offsets = [0, 64], sizes = [256, 64], strides = [1, 1]} : vector<256x128xf32> to vector<256x64xf32>
    %c0_56 = arith.constant 0 : index
    %c0_57 = arith.constant 0 : index
    %c0_58 = arith.constant 0 : index
    %102 = vector.load %arg1[%c0_56, %c0_57, %c0_58] : memref<1x256x64xf32, #tpu.memory_space<vmem>>, vector<1x256x64xf32>
    %103 = vector.shape_cast %102 : vector<1x256x64xf32> to vector<256x64xf32>
    %cst_59 = arith.constant 1.000000e+00 : f32
    %104 = vector.broadcast %cst_59 : f32 to vector<256x64xf32>
    %105 = arith.addf %100, %104 : vector<256x64xf32>
    %106 = arith.mulf %103, %105 : vector<256x64xf32>
    %107 = arith.addf %106, %101 : vector<256x64xf32>
    %108 = vector.shape_cast %107 : vector<256x64xf32> to vector<1x256x64xf32>
    %c0_60 = arith.constant 0 : index
    %c0_61 = arith.constant 0 : index
    %c0_62 = arith.constant 0 : index
    %109 = vector.load %arg8[%c0_60, %c0_61, %c0_62] : memref<1x256x64xf32, #tpu.memory_space<vmem>>, vector<1x256x64xf32>
    tpu.vector_store %arg8[%c0_60, %c0_61, %c0_62], %108 {strides = array<i32>} : memref<1x256x64xf32, #tpu.memory_space<vmem>>, vector<1x256x64xf32>,
    %110 = vector.shape_cast %100 : vector<256x64xf32> to vector<1x256x64xf32>
    %c0_63 = arith.constant 0 : index
    %c0_64 = arith.constant 0 : index
    %c0_65 = arith.constant 0 : index
    %111 = vector.load %arg9[%c0_63, %c0_64, %c0_65] : memref<1x256x64xf32, #tpu.memory_space<vmem>>, vector<1x256x64xf32>
    tpu.vector_store %arg9[%c0_63, %c0_64, %c0_65], %110 {strides = array<i32>} : memref<1x256x64xf32, #tpu.memory_space<vmem>>, vector<1x256x64xf32>,
    %112 = vector.shape_cast %101 : vector<256x64xf32> to vector<1x256x64xf32>
    %c0_66 = arith.constant 0 : index
    %c0_67 = arith.constant 0 : index
    %c0_68 = arith.constant 0 : index
    %113 = vector.load %arg10[%c0_66, %c0_67, %c0_68] : memref<1x256x64xf32, #tpu.memory_space<vmem>>, vector<1x256x64xf32>
    tpu.vector_store %arg10[%c0_66, %c0_67, %c0_68], %112 {strides = array<i32>} : memref<1x256x64xf32, #tpu.memory_space<vmem>>, vector<1x256x64xf32>,
    return
  }
  func.func @transform_0(%arg0: i32) -> (i32, i32, i32) {
    %c0_i32 = arith.constant 0 : i32
    %c0_i32_0 = arith.constant 0 : i32
    %c0_i32_1 = arith.constant 0 : i32
    return %arg0, %c0_i32, %c0_i32_0 : i32, i32, i32
  }
  func.func @transform_1(%arg0: i32) -> (i32, i32, i32) {
    %c0_i32 = arith.constant 0 : i32
    %c0_i32_0 = arith.constant 0 : i32
    %c0_i32_1 = arith.constant 0 : i32
    return %arg0, %c0_i32, %c0_i32_0 : i32, i32, i32
  }
  func.func @transform_2(%arg0: i32) -> (i32, i32) {
    %c0_i32 = arith.constant 0 : i32
    %c0_i32_0 = arith.constant 0 : i32
    %c0_i32_1 = arith.constant 0 : i32
    return %c0_i32, %c0_i32_0 : i32, i32
  }
  func.func @transform_3(%arg0: i32) -> (i32, i32) {
    %c0_i32 = arith.constant 0 : i32
    %c0_i32_0 = arith.constant 0 : i32
    %c0_i32_1 = arith.constant 0 : i32
    return %c0_i32, %c0_i32_0 : i32, i32
  }
  func.func @transform_4(%arg0: i32) -> (i32, i32, i32) {
    %c0_i32 = arith.constant 0 : i32
    %c0_i32_0 = arith.constant 0 : i32
    %c0_i32_1 = arith.constant 0 : i32
    %c0_i32_2 = arith.constant 0 : i32
    return %c0_i32, %c0_i32_0, %c0_i32_1 : i32, i32, i32
  }
  func.func @transform_5(%arg0: i32) -> (i32, i32) {
    %c0_i32 = arith.constant 0 : i32
    %c0_i32_0 = arith.constant 0 : i32
    %c0_i32_1 = arith.constant 0 : i32
    return %c0_i32, %c0_i32_0 : i32, i32
  }
  func.func @transform_6(%arg0: i32) -> (i32, i32, i32) {
    %c0_i32 = arith.constant 0 : i32
    %c0_i32_0 = arith.constant 0 : i32
    %c0_i32_1 = arith.constant 0 : i32
    %c0_i32_2 = arith.constant 0 : i32
    return %c0_i32, %c0_i32_0, %c0_i32_1 : i32, i32, i32
  }
  func.func @transform_7(%arg0: i32) -> (i32, i32, i32) {
    %c0_i32 = arith.constant 0 : i32
    %c0_i32_0 = arith.constant 0 : i32
    %c0_i32_1 = arith.constant 0 : i32
    return %arg0, %c0_i32, %c0_i32_0 : i32, i32, i32
  }
  func.func @transform_8(%arg0: i32) -> (i32, i32, i32) {
    %c0_i32 = arith.constant 0 : i32
    %c0_i32_0 = arith.constant 0 : i32
    %c0_i32_1 = arith.constant 0 : i32
    return %arg0, %c0_i32, %c0_i32_0 : i32, i32, i32
  }
  func.func @transform_9(%arg0: i32) -> (i32, i32, i32) {
    %c0_i32 = arith.constant 0 : i32
    %c0_i32_0 = arith.constant 0 : i32
    %c0_i32_1 = arith.constant 0 : i32
    return %arg0, %c0_i32, %c0_i32_0 : i32, i32, i32
  }
}

</mosaic_0001>

<llo_original>
// kernel: sft_layer.1
$region0: #{sft_layer.1}
  #allocation0 [shape = 'u32[]', space=smem, size = 0x4, offset = 0x4, fixed_abs, tag = 'smem constant byte address 0x4 - core index']
  #allocation1 [shape = 'u32[144,128]{1,0:T(1,128)}', space=vmem, size = 0x12000, scoped, tag = 'internal scratch']
  #allocation2 [shape = 'f32[320,64]{1,0:T(8,128)}', space=vmem, size = 0x28000, scoped, tag = 'scratch operand']
  %s0 = inlined_call_operand.vmem [shape: f32[2,256,64], index: 0, kind: input, shape index: {}]
  %s1 = inlined_call_operand.vmem [shape: bf16[2,256,32], index: 1, kind: input, shape index: {}]
  %s2 = inlined_call_operand.vmem [shape: bf16[32,64], index: 2, kind: input, shape index: {}]
  %s3 = inlined_call_operand.vmem [shape: f32[1,64], index: 3, kind: input, shape index: {}]
  %s4 = inlined_call_operand.vmem [shape: bf16[9,64,128], index: 4, kind: input, shape index: {}]
  %s5 = inlined_call_operand.vmem [shape: f32[1,128], index: 5, kind: input, shape index: {}]
  %s6 = inlined_call_operand.vmem [shape: f32[1,256,16], index: 6, kind: input, shape index: {}]
  %s7 = inlined_call_operand.hbm [shape: f32[2,256,64], index: 7, kind: output, shape index: {0}]
  %s8 = inlined_call_operand.hbm [shape: f32[2,256,64], index: 8, kind: output, shape index: {1}]
  %s9 = inlined_call_operand.hbm [shape: f32[2,256,64], index: 9, kind: output, shape index: {2}]
  %10 = xla_tuple %s7, %s8, %s9
  %s11 = sld [smem:[#allocation0]]
  $region77: #{sft_layer.1} parent=0
    _
  %s13 = ssub.s32 1, %s11
  %s14 = scalar_select 0, %s13, %s11
  $region1: #{sft_layer.1} parent=0
    #allocation3 [shape = 'u8[262144]{0}', space=vmem, size = 0x40000, scoped, tag = 'output window, operand 0']
    #allocation4 [shape = 's32[2]{0}', space=sflag, size = 0x8, scoped, tag = 'scoped memory for sft_layer.1']
    #allocation5 [shape = 'u8[262144]{0}', space=vmem, size = 0x40000, scoped, tag = 'output window, operand 1']
    #allocation6 [shape = 's32[2]{0}', space=sflag, size = 0x8, scoped, tag = 'scoped memory for sft_layer.1']
    #allocation7 [shape = 'u8[262144]{0}', space=vmem, size = 0x40000, scoped, tag = 'output window, operand 2']
    %15 = vsyncpa [#allocation4], 0
    %s16 = scalar_lea.sflag [#allocation4], 1
    %17 = vsyncpa %s16, 0
    %18 = vsyncpa [#allocation6], 0
    %s19 = scalar_lea.sflag [#allocation6], 1
    %20 = vsyncpa %s19, 0
    loop: start=0, step=1, limit=4
    $region2: #{sft_layer.1} parent=1 // loop_pre_header
      _
    $region3: #{sft_layer.1} parent=1 // loop_header
      %s22 = sphi 0, %s26
      %p23 = scmp.ge.s32.totalorder %s22, 4
      %s32 = sphi 0, %s34
      %s35 = sphi 0, %s32
      %s36 = sphi 0, %s35
      %s52 = sphi 0, %s36
      %s58 = sphi 0, %s60
      %s61 = sphi 0, %s58
      %s62 = sphi 0, %s61
      %s78 = sphi 0, %s62
      %s82 = sphi 0, %s82
      %s84 = sphi 0, %s82
      %s85 = sphi 0, %s84
      %s99 = sphi 0, %s85
      %s103 = sphi 0, %s103
      %s105 = sphi 0, %s103
      %s106 = sphi 0, %s105
      %s120 = sphi 0, %s106
      %s124 = sphi 0, %s124
      %s126 = sphi 0, %s124
      %s127 = sphi 0, %s126
      %s141 = sphi 0, %s127
      %s145 = sphi 0, %s145
      %s147 = sphi 0, %s145
      %s148 = sphi 0, %s147
      %s162 = sphi 0, %s148
      %s166 = sphi 0, %s166
      %s168 = sphi 0, %s166
      %s169 = sphi 0, %s168
      %s183 = sphi 0, %s169
      %s189 = sphi 0, %s191
      %s192 = sphi 0, %s189
      %s193 = sphi 0, %s192
      %s209 = sphi 0, %s193
      %s215 = sphi 0, %s217
      %s218 = sphi 0, %s215
      %s219 = sphi 0, %s218
      %s235 = sphi 0, %s219
      %s241 = sphi 0, %s243
      %s244 = sphi 0, %s241
      %s245 = sphi 0, %s244
      %s261 = sphi 0, %s245
    $region4: #{sft_layer.1} parent=1 // loop_header_branch
      %25 = sbr.rel (%p23) target = $region8
    $region5: #{sft_layer.1} parent=1 // loop_body
      %s27 = ssub.s32 %s22, 1
      %s28 = ssub.s32 %s22, 2
      %s29 = sadd.s32 %s22, 1
      %s30 = ssub.s32 %s22, %s29
      %p31 = scmp.eq.s32.totalorder %s30, 0
      %s33 = sadd.s32 %s32, 1
      %s34 = scalar_select %p31, %s32, %s33
      %p37 = pneg %p31
      %p38 = scmp.eq.s32.totalorder %s22, 1
      %p39 = por %p37, %p38
      %p40 = scmp.ne.s32.totalorder %s32, %s35
      %p41 = scmp.eq.s32.totalorder %s22, 0
      %p42 = por %p40, %p41
      %p43 = scmp.ne.s32.totalorder %s32, %s35
      %p44 = scmp.eq.s32.totalorder %s27, 1
      %p45 = por %p43, %p44
      %p46 = scmp.ne.s32.totalorder %s35, %s36
      %p47 = scmp.eq.s32.totalorder %s27, 0
      %p48 = por %p46, %p47
      %p49 = scmp.ne.s32.totalorder %s35, %s36
      %p50 = scmp.eq.s32.totalorder %s28, 1
      %p51 = por %p49, %p50
      %p53 = scmp.ne.s32.totalorder %s36, %s52
      %p54 = scmp.eq.s32.totalorder %s28, 0
      %p55 = por %p53, %p54
      %s56 = ssub.s32 %s22, %s29
      %p57 = scmp.eq.s32.totalorder %s56, 0
      %s59 = sadd.s32 %s58, 1
      %s60 = scalar_select %p57, %s58, %s59
      %p63 = pneg %p57
      %p64 = scmp.eq.s32.totalorder %s22, 1
      %p65 = por %p63, %p64
      %p66 = scmp.ne.s32.totalorder %s58, %s61
      %p67 = scmp.eq.s32.totalorder %s22, 0
      %p68 = por %p66, %p67
      %p69 = scmp.ne.s32.totalorder %s58, %s61
      %p70 = scmp.eq.s32.totalorder %s27, 1
      %p71 = por %p69, %p70
      %p72 = scmp.ne.s32.totalorder %s61, %s62
      %p73 = scmp.eq.s32.totalorder %s27, 0
      %p74 = por %p72, %p73
      %p75 = scmp.ne.s32.totalorder %s61, %s62
      %p76 = scmp.eq.s32.totalorder %s28, 1
      %p77 = por %p75, %p76
      %p79 = scmp.ne.s32.totalorder %s62, %s78
      %p80 = scmp.eq.s32.totalorder %s28, 0
      %p81 = por %p79, %p80
      %s83 = sadd.s32 %s82, 1
      %p86 = scmp.eq.s32.totalorder %s22, 1
      %p87 = scmp.ne.s32.totalorder %s82, %s84
      %p88 = scmp.eq.s32.totalorder %s22, 0
      %p89 = por %p87, %p88
      %p90 = scmp.ne.s32.totalorder %s82, %s84
      %p91 = scmp.eq.s32.totalorder %s27, 1
      %p92 = por %p90, %p91
      %p93 = scmp.ne.s32.totalorder %s84, %s85
      %p94 = scmp.eq.s32.totalorder %s27, 0
      %p95 = por %p93, %p94
      %p96 = scmp.ne.s32.totalorder %s84, %s85
      %p97 = scmp.eq.s32.totalorder %s28, 1
      %p98 = por %p96, %p97
      %p100 = scmp.ne.s32.totalorder %s85, %s99
      %p101 = scmp.eq.s32.totalorder %s28, 0
      %p102 = por %p100, %p101
      %s104 = sadd.s32 %s103, 1
      %p107 = scmp.eq.s32.totalorder %s22, 1
      %p108 = scmp.ne.s32.totalorder %s103, %s105
      %p109 = scmp.eq.s32.totalorder %s22, 0
      %p110 = por %p108, %p109
      %p111 = scmp.ne.s32.totalorder %s103, %s105
      %p112 = scmp.eq.s32.totalorder %s27, 1
      %p113 = por %p111, %p112
      %p114 = scmp.ne.s32.totalorder %s105, %s106
      %p115 = scmp.eq.s32.totalorder %s27, 0
      %p116 = por %p114, %p115
      %p117 = scmp.ne.s32.totalorder %s105, %s106
      %p118 = scmp.eq.s32.totalorder %s28, 1
      %p119 = por %p117, %p118
      %p121 = scmp.ne.s32.totalorder %s106, %s120
      %p122 = scmp.eq.s32.totalorder %s28, 0
      %p123 = por %p121, %p122
      %s125 = sadd.s32 %s124, 1
      %p128 = scmp.eq.s32.totalorder %s22, 1
      %p129 = scmp.ne.s32.totalorder %s124, %s126
      %p130 = scmp.eq.s32.totalorder %s22, 0
      %p131 = por %p129, %p130
      %p132 = scmp.ne.s32.totalorder %s124, %s126
      %p133 = scmp.eq.s32.totalorder %s27, 1
      %p134 = por %p132, %p133
      %p135 = scmp.ne.s32.totalorder %s126, %s127
      %p136 = scmp.eq.s32.totalorder %s27, 0
      %p137 = por %p135, %p136
      %p138 = scmp.ne.s32.totalorder %s126, %s127
      %p139 = scmp.eq.s32.totalorder %s28, 1
      %p140 = por %p138, %p139
      %p142 = scmp.ne.s32.totalorder %s127, %s141
      %p143 = scmp.eq.s32.totalorder %s28, 0
      %p144 = por %p142, %p143
      %s146 = sadd.s32 %s145, 1
      %p149 = scmp.eq.s32.totalorder %s22, 1
      %p150 = scmp.ne.s32.totalorder %s145, %s147
      %p151 = scmp.eq.s32.totalorder %s22, 0
      %p152 = por %p150, %p151
      %p153 = scmp.ne.s32.totalorder %s145, %s147
      %p154 = scmp.eq.s32.totalorder %s27, 1
      %p155 = por %p153, %p154
      %p156 = scmp.ne.s32.totalorder %s147, %s148
      %p157 = scmp.eq.s32.totalorder %s27, 0
      %p158 = por %p156, %p157
      %p159 = scmp.ne.s32.totalorder %s147, %s148
      %p160 = scmp.eq.s32.totalorder %s28, 1
      %p161 = por %p159, %p160
      %p163 = scmp.ne.s32.totalorder %s148, %s162
      %p164 = scmp.eq.s32.totalorder %s28, 0
      %p165 = por %p163, %p164
      %s167 = sadd.s32 %s166, 1
      %p170 = scmp.eq.s32.totalorder %s22, 1
      %p171 = scmp.ne.s32.totalorder %s166, %s168
      %p172 = scmp.eq.s32.totalorder %s22, 0
      %p173 = por %p171, %p172
      %p174 = scmp.ne.s32.totalorder %s166, %s168
      %p175 = scmp.eq.s32.totalorder %s27, 1
      %p176 = por %p174, %p175
      %p177 = scmp.ne.s32.totalorder %s168, %s169
      %p178 = scmp.eq.s32.totalorder %s27, 0
      %p179 = por %p177, %p178
      %p180 = scmp.ne.s32.totalorder %s168, %s169
      %p181 = scmp.eq.s32.totalorder %s28, 1
      %p182 = por %p180, %p181
      %p184 = scmp.ne.s32.totalorder %s169, %s183
      %p185 = scmp.eq.s32.totalorder %s28, 0
      %p186 = por %p184, %p185
      %s187 = ssub.s32 %s22, %s29
      %p188 = scmp.eq.s32.totalorder %s187, 0
      %s190 = sadd.s32 %s189, 1
      %s191 = scalar_select %p188, %s189, %s190
      %p194 = pneg %p188
      %p195 = scmp.eq.s32.totalorder %s22, 1
      %p196 = por %p194, %p195
      %p197 = scmp.ne.s32.totalorder %s189, %s192
      %p198 = scmp.eq.s32.totalorder %s22, 0
      %p199 = por %p197, %p198
      %p200 = scmp.ne.s32.totalorder %s189, %s192
      %p201 = scmp.eq.s32.totalorder %s27, 1
      %p202 = por %p200, %p201
      %p203 = scmp.ne.s32.totalorder %s192, %s193
      %p204 = scmp.eq.s32.totalorder %s27, 0
      %p205 = por %p203, %p204
      %p206 = scmp.ne.s32.totalorder %s192, %s193
      %p207 = scmp.eq.s32.totalorder %s28, 1
      %p208 = por %p206, %p207
      %p210 = scmp.ne.s32.totalorder %s193, %s209
      %p211 = scmp.eq.s32.totalorder %s28, 0
      %p212 = por %p210, %p211
      %s213 = ssub.s32 %s22, %s29
      %p214 = scmp.eq.s32.totalorder %s213, 0
      %s216 = sadd.s32 %s215, 1
      %s217 = scalar_select %p214, %s215, %s216
      %p220 = pneg %p214
      %p221 = scmp.eq.s32.totalorder %s22, 1
      %p222 = por %p220, %p221
      %p223 = scmp.ne.s32.totalorder %s215, %s218
      %p224 = scmp.eq.s32.totalorder %s22, 0
      %p225 = por %p223, %p224
      %p226 = scmp.ne.s32.totalorder %s215, %s218
      %p227 = scmp.eq.s32.totalorder %s27, 1
      %p228 = por %p226, %p227
      %p229 = scmp.ne.s32.totalorder %s218, %s219
      %p230 = scmp.eq.s32.totalorder %s27, 0
      %p231 = por %p229, %p230
      %p232 = scmp.ne.s32.totalorder %s218, %s219
      %p233 = scmp.eq.s32.totalorder %s28, 1
      %p234 = por %p232, %p233
      %p236 = scmp.ne.s32.totalorder %s219, %s235
      %p237 = scmp.eq.s32.totalorder %s28, 0
      %p238 = por %p236, %p237
      %s239 = ssub.s32 %s22, %s29
      %p240 = scmp.eq.s32.totalorder %s239, 0
      %s242 = sadd.s32 %s241, 1
      %s243 = scalar_select %p240, %s241, %s242
      %p246 = pneg %p240
      %p247 = scmp.eq.s32.totalorder %s22, 1
      %p248 = por %p246, %p247
      %p249 = scmp.ne.s32.totalorder %s241, %s244
      %p250 = scmp.eq.s32.totalorder %s22, 0
      %p251 = por %p249, %p250
      %p252 = scmp.ne.s32.totalorder %s241, %s244
      %p253 = scmp.eq.s32.totalorder %s27, 1
      %p254 = por %p252, %p253
      %p255 = scmp.ne.s32.totalorder %s244, %s245
      %p256 = scmp.eq.s32.totalorder %s27, 0
      %p257 = por %p255, %p256
      %p258 = scmp.ne.s32.totalorder %s244, %s245
      %p259 = scmp.eq.s32.totalorder %s28, 1
      %p260 = por %p258, %p259
      %p262 = scmp.ne.s32.totalorder %s245, %s261
      %p263 = scmp.eq.s32.totalorder %s28, 0
      %p264 = por %p262, %p263
      %p265 = scmp.le.s32.totalorder 1, %s22
      %p266 = scmp.lt.s32.totalorder %s22, 3
      %p267 = pnand %p265, %p266
      %p268 = pneg %p267
      // Predicated region
      $region9: #{sft_layer.1} parent=5 // pred_check
        _
      $region10: #{sft_layer.1} parent=5 // pred_check_branch
        %270 = sbr.rel (%p267) target = $region12
      $region11: #{sft_layer.1} parent=5 // pred_region
        %s271 = ssub.s32 %s22, 1
        // Predicated region
        $region13: #{sft_layer.1} parent=11 // pred_check
          %p272 = pneg %p95
        $region14: #{sft_layer.1} parent=11 // pred_check_branch
          %274 = sbr.rel (%p272) target = $region16
        $region15: #{sft_layer.1} parent=11 // pred_region
          _
        $region16: #{sft_layer.1} parent=11 // pred_fallthru
          _
        // Predicated region
        $region17: #{sft_layer.1} parent=11 // pred_check
          %p275 = pneg %p116
        $region18: #{sft_layer.1} parent=11 // pred_check_branch
          %277 = sbr.rel (%p275) target = $region20
        $region19: #{sft_layer.1} parent=11 // pred_region
          _
        $region20: #{sft_layer.1} parent=11 // pred_fallthru
          _
        // Predicated region
        $region21: #{sft_layer.1} parent=11 // pred_check
          %p278 = pneg %p137
        $region22: #{sft_layer.1} parent=11 // pred_check_branch
          %280 = sbr.rel (%p278) target = $region24
        $region23: #{sft_layer.1} parent=11 // pred_region
          _
        $region24: #{sft_layer.1} parent=11 // pred_fallthru
          _
        // Predicated region
        $region25: #{sft_layer.1} parent=11 // pred_check
          %p281 = pneg %p158
        $region26: #{sft_layer.1} parent=11 // pred_check_branch
          %283 = sbr.rel (%p281) target = $region28
        $region27: #{sft_layer.1} parent=11 // pred_region
          _
        $region28: #{sft_layer.1} parent=11 // pred_fallthru
          _
        // Predicated region
        $region29: #{sft_layer.1} parent=11 // pred_check
          %p284 = pneg %p179
        $region30: #{sft_layer.1} parent=11 // pred_check_branch
          %286 = sbr.rel (%p284) target = $region32
        $region31: #{sft_layer.1} parent=11 // pred_region
          _
        $region32: #{sft_layer.1} parent=11 // pred_fallthru
          _
      $region12: #{sft_layer.1} parent=5 // pred_fallthru
        _
      %p287 = scmp.lt.s32.totalorder %s22, 2
      // Predicated region
      $region33: #{sft_layer.1} parent=5 // pred_check
        %p288 = pneg %p287
      $region34: #{sft_layer.1} parent=5 // pred_check_branch
        %290 = sbr.rel (%p288) target = $region36
      $region35: #{sft_layer.1} parent=5 // pred_region
        // Predicated region
        $region37: #{sft_layer.1} parent=35 // pred_check
          %p291 = pneg %p42
        $region38: #{sft_layer.1} parent=35 // pred_check_branch
          %293 = sbr.rel (%p291) target = $region40
        $region39: #{sft_layer.1} parent=35 // pred_region
          %p294 = scmp.lt.s32.totalorder %s22, 1
          %s295 = scalar_select %p294, %s22, 1
          %s296 = smul.addr %s295, 32
          %s297 = smul.addr %s296, 8
          %s298 = scalar_lea.vmem %s0, %s297
        $region40: #{sft_layer.1} parent=35 // pred_fallthru
          _
        // Predicated region
        $region41: #{sft_layer.1} parent=35 // pred_check
          %p299 = pneg %p68
        $region42: #{sft_layer.1} parent=35 // pred_check_branch
          %301 = sbr.rel (%p299) target = $region44
        $region43: #{sft_layer.1} parent=35 // pred_region
          %p302 = scmp.lt.s32.totalorder %s22, 1
          %s303 = scalar_select %p302, %s22, 1
          %s304 = smul.addr %s303, 32
          %s305 = smul.addr %s304, 4
          %s306 = scalar_lea.vmem %s1, %s305
        $region44: #{sft_layer.1} parent=35 // pred_fallthru
          _
      $region36: #{sft_layer.1} parent=5 // pred_fallthru
        _
      %p307 = scmp.le.s32.totalorder 1, %s22
      %p308 = scmp.lt.s32.totalorder %s22, 3
      %p309 = pnand %p307, %p308
      %p310 = pneg %p309
      // Predicated region
      $region45: #{sft_layer.1} parent=5 // pred_check
        _
      $region46: #{sft_layer.1} parent=5 // pred_check_branch
        %312 = sbr.rel (%p309) target = $region48
      $region47: #{sft_layer.1} parent=5 // pred_region
        %s313 = ssub.s32 %s22, 1
        %p314 = scmp.lt.s32.totalorder %s27, 1
        %s315 = scalar_select %p314, %s27, 1
        %s316 = smul.addr %s315, 32
        %s317 = smul.addr %s316, 8
        %s318 = scalar_lea.vmem %s0, %s317
        %p319 = pneg %p48
        %p320 = pneg %p45
        %p321 = scmp.lt.s32.totalorder %s27, 1
        %s322 = scalar_select %p321, %s27, 1
        %s323 = smul.addr %s322, 32
        %s324 = smul.addr %s323, 4
        %s325 = scalar_lea.vmem %s1, %s324
        %p326 = pneg %p74
        %p327 = pneg %p71
        %p328 = pneg %p95
        %p329 = pneg %p92
        %p330 = pneg %p116
        %p331 = pneg %p113
        %p332 = pneg %p137
        %p333 = pneg %p134
        %p334 = pneg %p158
        %p335 = pneg %p155
        %p336 = pneg %p179
        %p337 = pneg %p176
        %p338 = pneg %p205
        %p339 = pneg %p202
        %s340 = sand.u32 %s192, 1
        %s341 = scalar_lea.sflag [#allocation4], %s340
        %s342 = sand.u32 %s192, 1
        %s343 = smul.addr %s342, 256
        %s344 = scalar_lea.vmem [#allocation3], %s343
        %p345 = pneg %p231
        %p346 = pneg %p228
        %s347 = sand.u32 %s27, 1
        %s348 = scalar_lea.sflag [#allocation6], %s347
        %s349 = sand.u32 %s218, 1
        %s350 = smul.addr %s349, 256
        %s351 = scalar_lea.vmem [#allocation5], %s350
        %p352 = pneg %p257
        %p353 = pneg %p254
        %s354 = sand.u32 %s27, 1
        %s355 = scalar_lea.sflag [#allocation6], %s354
        %s356 = sand.u32 %s244, 1
        %s357 = smul.addr %s356, 256
        %s358 = scalar_lea.vmem [#allocation7], %s357
        %p359 = scmp.lt.s32.totalorder %s27, 1
        %s360 = scalar_select %p359, %s27, 1
        %s361 = smul.addr %s360, 32
        %s362 = smul.addr %s361, 8
        %s363 = scalar_lea.vmem %s0, %s362
        %p364 = scmp.lt.s32.totalorder %s27, 1
        %s365 = scalar_select %p364, %s27, 1
        %s366 = smul.addr %s365, 32
        %s367 = smul.addr %s366, 4
        %s368 = scalar_lea.vmem %s1, %s367
        %v370 = vld [vmem:[%s368] sm:$0xf]
        %v371 = vld [vmem:[%s368 + $0x4] sm:$0xf]
        %v372 = vld [vmem:[%s368 + $0x8] sm:$0xf]
        %v373 = vld [vmem:[%s368 + $0xc] sm:$0xf]
        %v374 = vld [vmem:[%s368 + $0x10] sm:$0xf]
        %v375 = vld [vmem:[%s368 + $0x14] sm:$0xf]
        %v376 = vld [vmem:[%s368 + $0x18] sm:$0xf]
        %v377 = vld [vmem:[%s368 + $0x1c] sm:$0xf]
        %v378 = vld [vmem:[%s368 + $0x20] sm:$0xf]
        %v379 = vld [vmem:[%s368 + $0x24] sm:$0xf]
        %v380 = vld [vmem:[%s368 + $0x28] sm:$0xf]
        %v381 = vld [vmem:[%s368 + $0x2c] sm:$0xf]
        %v382 = vld [vmem:[%s368 + $0x30] sm:$0xf]
        %v383 = vld [vmem:[%s368 + $0x34] sm:$0xf]
        %v384 = vld [vmem:[%s368 + $0x38] sm:$0xf]
        %v385 = vld [vmem:[%s368 + $0x3c] sm:$0xf]
        %v386 = vld [vmem:[%s368 + $0x40] sm:$0xf]
        %v387 = vld [vmem:[%s368 + $0x44] sm:$0xf]
        %v388 = vld [vmem:[%s368 + $0x48] sm:$0xf]
        %v389 = vld [vmem:[%s368 + $0x4c] sm:$0xf]
        %v390 = vld [vmem:[%s368 + $0x50] sm:$0xf]
        %v391 = vld [vmem:[%s368 + $0x54] sm:$0xf]
        %v392 = vld [vmem:[%s368 + $0x58] sm:$0xf]
        %v393 = vld [vmem:[%s368 + $0x5c] sm:$0xf]
        %v394 = vld [vmem:[%s368 + $0x60] sm:$0xf]
        %v395 = vld [vmem:[%s368 + $0x64] sm:$0xf]
        %v396 = vld [vmem:[%s368 + $0x68] sm:$0xf]
        %v397 = vld [vmem:[%s368 + $0x6c] sm:$0xf]
        %v398 = vld [vmem:[%s368 + $0x70] sm:$0xf]
        %v399 = vld [vmem:[%s368 + $0x74] sm:$0xf]
        %v400 = vld [vmem:[%s368 + $0x78] sm:$0xf]
        %v401 = vld [vmem:[%s368 + $0x7c] sm:$0xf]
        %v402 = vld [vmem:[%s2] sm:$0xf]
        %v403 = vld [vmem:[%s2 + $0x4] sm:$0xf]
        %v404 = vld [vmem:[%s2 + $0x8] sm:$0xf]
        %v405 = vld [vmem:[%s2 + $0xc] sm:$0xf]
        %v406 = vld [vmem:[%s3] sm:$0x1]
        %v408 = vlaneseq
        %v409 = vshrl.u32 %v408, 7
        %v410 = vsub.s32 0, %v409
        %v411 = vrot.slane %v406, %v410
        %v445 = vunpack.c.l.b16 %v370
        %v446 = vunpack.c.l.b16 %v371
        %v447 = vunpack.c.l.b16 %v372
        %v448 = vunpack.c.l.b16 %v373
        %v449 = vunpack.c.l.b16 %v374
        %v450 = vunpack.c.l.b16 %v375
        %v451 = vunpack.c.l.b16 %v376
        %v452 = vunpack.c.l.b16 %v377
        %v453 = vunpack.c.l.b16 %v378
        %v454 = vunpack.c.l.b16 %v379
        %v455 = vunpack.c.l.b16 %v380
        %v456 = vunpack.c.l.b16 %v381
        %v457 = vunpack.c.l.b16 %v382
        %v458 = vunpack.c.l.b16 %v383
        %v459 = vunpack.c.l.b16 %v384
        %v460 = vunpack.c.l.b16 %v385
        %v461 = vunpack.c.l.b16 %v386
        %v462 = vunpack.c.l.b16 %v387
        %v463 = vunpack.c.l.b16 %v388
        %v464 = vunpack.c.l.b16 %v389
        %v465 = vunpack.c.l.b16 %v390
        %v466 = vunpack.c.l.b16 %v391
        %v467 = vunpack.c.l.b16 %v392
        %v468 = vunpack.c.l.b16 %v393
        %v469 = vunpack.c.l.b16 %v394
        %v470 = vunpack.c.l.b16 %v395
        %v471 = vunpack.c.l.b16 %v396
        %v472 = vunpack.c.l.b16 %v397
        %v473 = vunpack.c.l.b16 %v398
        %v474 = vunpack.c.l.b16 %v399
        %v475 = vunpack.c.l.b16 %v400
        %v476 = vunpack.c.l.b16 %v401
        %v477 = vpack.c.b16 %v446, %v445
        %v478 = vpack.c.b16 %v448, %v447
        %v479 = vpack.c.b16 %v450, %v449
        %v480 = vpack.c.b16 %v452, %v451
        %v481 = vpack.c.b16 %v454, %v453
        %v482 = vpack.c.b16 %v456, %v455
        %v483 = vpack.c.b16 %v458, %v457
        %v484 = vpack.c.b16 %v460, %v459
        %v485 = vpack.c.b16 %v462, %v461
        %v486 = vpack.c.b16 %v464, %v463
        %v487 = vpack.c.b16 %v466, %v465
        %v488 = vpack.c.b16 %v468, %v467
        %v489 = vpack.c.b16 %v470, %v469
        %v490 = vpack.c.b16 %v472, %v471
        %v491 = vpack.c.b16 %v474, %v473
        %v492 = vpack.c.b16 %v476, %v475
        %v497 = vunpack.c.l.b16 %v402
        %v498 = vunpack.c.l.b16 %v403
        %v499 = vunpack.c.l.b16 %v404
        %v500 = vunpack.c.l.b16 %v405
        %v501 = vpack.c.b16 %v498, %v497
        %v502 = vpack.c.b16 %v500, %v499
        %vm505 = vcmask 261120
        %v507 = vsel %vm505, %v477, 0
        %v510 = vsel %vm505, %v478, 0
        %v513 = vsel %vm505, %v479, 0
        %v516 = vsel %vm505, %v480, 0
        %v519 = vsel %vm505, %v481, 0
        %v522 = vsel %vm505, %v482, 0
        %v525 = vsel %vm505, %v483, 0
        %v528 = vsel %vm505, %v484, 0
        %v531 = vsel %vm505, %v485, 0
        %v534 = vsel %vm505, %v486, 0
        %v537 = vsel %vm505, %v487, 0
        %v540 = vsel %vm505, %v488, 0
        %v543 = vsel %vm505, %v489, 0
        %v546 = vsel %vm505, %v490, 0
        %v549 = vsel %vm505, %v491, 0
        %v552 = vsel %vm505, %v492, 0
        %554 = vmatprep.subr.bf16.mxu0 0
        %555 = vmatpush1.bf16.msra.mxu0 %v501
        %556 = vmatprep.subr.bf16.mxu0 0
        %557 = vmatpush1.bf16.msra.mxu0 %v502
        %558 = vmatprep.subr.bf16.mxu0 0
        %559 = vmatpush1.bf16.msra.mxu0 0
        %560 = vmatprep.subr.bf16.mxu0 0
        %561 = vmatpush1.bf16.msra.mxu0 0
        %562 = vmatprep.subr.bf16.mxu0 0
        %563 = vmatpush1.bf16.msra.mxu0 0
        %564 = vmatprep.subr.bf16.mxu0 0
        %565 = vmatpush1.bf16.msra.mxu0 0
        %566 = vmatprep.subr.bf16.mxu0 0
        %567 = vmatpush1.bf16.msra.mxu0 0
        %568 = vmatprep.subr.bf16.mxu0 0
        %569 = vmatpush1.bf16.msra.mxu0 0
        %570 = vmatprep.subr.bf16.mxu0 0
        %571 = vmatpush1.bf16.msra.mxu0 0
        %572 = vmatprep.subr.bf16.mxu0 0
        %573 = vmatpush1.bf16.msra.mxu0 0
        %574 = vmatprep.subr.bf16.mxu0 0
        %575 = vmatpush1.bf16.msra.mxu0 0
        %576 = vmatprep.subr.bf16.mxu0 0
        %577 = vmatpush1.bf16.msra.mxu0 0
        %578 = vmatprep.subr.bf16.mxu0 0
        %579 = vmatpush1.bf16.msra.mxu0 0
        %580 = vmatprep.subr.bf16.mxu0 0
        %581 = vmatpush1.bf16.msra.mxu0 0
        %582 = vmatprep.subr.bf16.mxu0 0
        %583 = vmatpush1.bf16.msra.mxu0 0
        %584 = vmatprep.subr.bf16.mxu0 0
        %585 = vmatpush1.bf16.msra.mxu0 0
        %586 = vmatprep.mubr.bf16.mxu0 0
        %587 = vmatmul.mubr.bf16.gmra.mrb[0].mxu0 %v507
        %v588 = vpop.f32.mrb[0].mxu0
        %v589 = vadd.f32 %v411, %v588
        %v590 = vpop.f32.mrb[0].mxu0
        %v591 = vpop.f32.mrb[0].mxu0
        %v592 = vadd.f32 %v411, %v591
        %v593 = vpop.f32.mrb[0].mxu0
        %594 = vmatprep.mubr.bf16.mxu0 0
        %595 = vmatmul.mubr.bf16.gmra.mrb[0].mxu0 %v510
        %v596 = vpop.f32.mrb[0].mxu0
        %v597 = vadd.f32 %v411, %v596
        %v598 = vpop.f32.mrb[0].mxu0
        %v599 = vpop.f32.mrb[0].mxu0
        %v600 = vadd.f32 %v411, %v599
        %v601 = vpop.f32.mrb[0].mxu0
        %602 = vmatprep.mubr.bf16.mxu0 0
        %603 = vmatmul.mubr.bf16.gmra.mrb[0].mxu0 %v513
        %v604 = vpop.f32.mrb[0].mxu0
        %v605 = vadd.f32 %v411, %v604
        %v606 = vpop.f32.mrb[0].mxu0
        %v607 = vpop.f32.mrb[0].mxu0
        %v608 = vadd.f32 %v411, %v607
        %v609 = vpop.f32.mrb[0].mxu0
        %610 = vmatprep.mubr.bf16.mxu0 0
        %611 = vmatmul.mubr.bf16.gmra.mrb[0].mxu0 %v516
        %v612 = vpop.f32.mrb[0].mxu0
        %v613 = vadd.f32 %v411, %v612
        %v614 = vpop.f32.mrb[0].mxu0
        %v615 = vpop.f32.mrb[0].mxu0
        %v616 = vadd.f32 %v411, %v615
        %v617 = vpop.f32.mrb[0].mxu0
        %618 = vmatprep.mubr.bf16.mxu0 0
        %619 = vmatmul.mubr.bf16.gmra.mrb[0].mxu0 %v519
        %v620 = vpop.f32.mrb[0].mxu0
        %v621 = vadd.f32 %v411, %v620
        %v622 = vpop.f32.mrb[0].mxu0
        %v623 = vpop.f32.mrb[0].mxu0
        %v624 = vadd.f32 %v411, %v623
        %v625 = vpop.f32.mrb[0].mxu0
        %626 = vmatprep.mubr.bf16.mxu0 0
        %627 = vmatmul.mubr.bf16.gmra.mrb[0].mxu0 %v522
        %v628 = vpop.f32.mrb[0].mxu0
        %v629 = vadd.f32 %v411, %v628
        %v630 = vpop.f32.mrb[0].mxu0
        %v631 = vpop.f32.mrb[0].mxu0
        %v632 = vadd.f32 %v411, %v631
        %v633 = vpop.f32.mrb[0].mxu0
        %634 = vmatprep.mubr.bf16.mxu0 0
        %635 = vmatmul.mubr.bf16.gmra.mrb[0].mxu0 %v525
        %v636 = vpop.f32.mrb[0].mxu0
        %v637 = vadd.f32 %v411, %v636
        %v638 = vpop.f32.mrb[0].mxu0
        %v639 = vpop.f32.mrb[0].mxu0
        %v640 = vadd.f32 %v411, %v639
        %v641 = vpop.f32.mrb[0].mxu0
        %642 = vmatprep.mubr.bf16.mxu0 0
        %643 = vmatmul.mubr.bf16.gmra.mrb[0].mxu0 %v528
        %v644 = vpop.f32.mrb[0].mxu0
        %v645 = vadd.f32 %v411, %v644
        %v646 = vpop.f32.mrb[0].mxu0
        %v647 = vpop.f32.mrb[0].mxu0
        %v648 = vadd.f32 %v411, %v647
        %v649 = vpop.f32.mrb[0].mxu0
        %650 = vmatprep.mubr.bf16.mxu0 0
        %651 = vmatmul.mubr.bf16.gmra.mrb[0].mxu0 %v531
        %v652 = vpop.f32.mrb[0].mxu0
        %v653 = vadd.f32 %v411, %v652
        %v654 = vpop.f32.mrb[0].mxu0
        %v655 = vpop.f32.mrb[0].mxu0
        %v656 = vadd.f32 %v411, %v655
        %v657 = vpop.f32.mrb[0].mxu0
        %658 = vmatprep.mubr.bf16.mxu0 0
        %659 = vmatmul.mubr.bf16.gmra.mrb[0].mxu0 %v534
        %v660 = vpop.f32.mrb[0].mxu0
        %v661 = vadd.f32 %v411, %v660
        %v662 = vpop.f32.mrb[0].mxu0
        %v663 = vpop.f32.mrb[0].mxu0
        %v664 = vadd.f32 %v411, %v663
        %v665 = vpop.f32.mrb[0].mxu0
        %666 = vmatprep.mubr.bf16.mxu0 0
        %667 = vmatmul.mubr.bf16.gmra.mrb[0].mxu0 %v537
        %v668 = vpop.f32.mrb[0].mxu0
        %v669 = vadd.f32 %v411, %v668
        %v670 = vpop.f32.mrb[0].mxu0
        %v671 = vpop.f32.mrb[0].mxu0
        %v672 = vadd.f32 %v411, %v671
        %v673 = vpop.f32.mrb[0].mxu0
        %674 = vmatprep.mubr.bf16.mxu0 0
        %675 = vmatmul.mubr.bf16.gmra.mrb[0].mxu0 %v540
        %v676 = vpop.f32.mrb[0].mxu0
        %v677 = vadd.f32 %v411, %v676
        %v678 = vpop.f32.mrb[0].mxu0
        %v679 = vpop.f32.mrb[0].mxu0
        %v680 = vadd.f32 %v411, %v679
        %v681 = vpop.f32.mrb[0].mxu0
        %682 = vmatprep.mubr.bf16.mxu0 0
        %683 = vmatmul.mubr.bf16.gmra.mrb[0].mxu0 %v543
        %v684 = vpop.f32.mrb[0].mxu0
        %v685 = vadd.f32 %v411, %v684
        %v686 = vpop.f32.mrb[0].mxu0
        %v687 = vpop.f32.mrb[0].mxu0
        %v688 = vadd.f32 %v411, %v687
        %v689 = vpop.f32.mrb[0].mxu0
        %690 = vmatprep.mubr.bf16.mxu0 0
        %691 = vmatmul.mubr.bf16.gmra.mrb[0].mxu0 %v546
        %v692 = vpop.f32.mrb[0].mxu0
        %v693 = vadd.f32 %v411, %v692
        %v694 = vpop.f32.mrb[0].mxu0
        %v695 = vpop.f32.mrb[0].mxu0
        %v696 = vadd.f32 %v411, %v695
        %v697 = vpop.f32.mrb[0].mxu0
        %698 = vmatprep.mubr.bf16.mxu0 0
        %699 = vmatmul.mubr.bf16.gmra.mrb[0].mxu0 %v549
        %v700 = vpop.f32.mrb[0].mxu0
        %v701 = vadd.f32 %v411, %v700
        %v702 = vpop.f32.mrb[0].mxu0
        %v703 = vpop.f32.mrb[0].mxu0
        %v704 = vadd.f32 %v411, %v703
        %v705 = vpop.f32.mrb[0].mxu0
        %706 = vmatprep.mubr.bf16.mxu0 0
        %707 = vmatmul.mubr.bf16.gmra.mrb[0].mxu0 %v552
        %v708 = vpop.f32.mrb[0].mxu0
        %v709 = vadd.f32 %v411, %v708
        %v710 = vpop.f32.mrb[0].mxu0
        %v711 = vpop.f32.mrb[0].mxu0
        %v712 = vadd.f32 %v411, %v711
        %v713 = vpop.f32.mrb[0].mxu0
        %714 = vdwg.mxu0
        %vm715 = vcmp.ge.f32.partialorder %v589, 0.0
        %vm716 = vcmp.ge.f32.partialorder %v592, 0.0
        %vm717 = vcmp.ge.f32.partialorder %v597, 0.0
        %vm718 = vcmp.ge.f32.partialorder %v600, 0.0
        %vm719 = vcmp.ge.f32.partialorder %v605, 0.0
        %vm720 = vcmp.ge.f32.partialorder %v608, 0.0
        %vm721 = vcmp.ge.f32.partialorder %v613, 0.0
        %vm722 = vcmp.ge.f32.partialorder %v616, 0.0
        %vm723 = vcmp.ge.f32.partialorder %v621, 0.0
        %vm724 = vcmp.ge.f32.partialorder %v624, 0.0
        %vm725 = vcmp.ge.f32.partialorder %v629, 0.0
        %vm726 = vcmp.ge.f32.partialorder %v632, 0.0
        %vm727 = vcmp.ge.f32.partialorder %v637, 0.0
        %vm728 = vcmp.ge.f32.partialorder %v640, 0.0
        %vm729 = vcmp.ge.f32.partialorder %v645, 0.0
        %vm730 = vcmp.ge.f32.partialorder %v648, 0.0
        %vm731 = vcmp.ge.f32.partialorder %v653, 0.0
        %vm732 = vcmp.ge.f32.partialorder %v656, 0.0
        %vm733 = vcmp.ge.f32.partialorder %v661, 0.0
        %vm734 = vcmp.ge.f32.partialorder %v664, 0.0
        %vm735 = vcmp.ge.f32.partialorder %v669, 0.0
        %vm736 = vcmp.ge.f32.partialorder %v672, 0.0
        %vm737 = vcmp.ge.f32.partialorder %v677, 0.0
        %vm738 = vcmp.ge.f32.partialorder %v680, 0.0
        %vm739 = vcmp.ge.f32.partialorder %v685, 0.0
        %vm740 = vcmp.ge.f32.partialorder %v688, 0.0
        %vm741 = vcmp.ge.f32.partialorder %v693, 0.0
        %vm742 = vcmp.ge.f32.partialorder %v696, 0.0
        %vm743 = vcmp.ge.f32.partialorder %v701, 0.0
        %vm744 = vcmp.ge.f32.partialorder %v704, 0.0
        %vm745 = vcmp.ge.f32.partialorder %v709, 0.0
        %vm746 = vcmp.ge.f32.partialorder %v712, 0.0
        %v747 = vmul.f32 %v589, 0.1
        %v748 = vmul.f32 %v592, 0.1
        %v749 = vmul.f32 %v597, 0.1
        %v750 = vmul.f32 %v600, 0.1
        %v751 = vmul.f32 %v605, 0.1
        %v752 = vmul.f32 %v608, 0.1
        %v753 = vmul.f32 %v613, 0.1
        %v754 = vmul.f32 %v616, 0.1
        %v755 = vmul.f32 %v621, 0.1
        %v756 = vmul.f32 %v624, 0.1
        %v757 = vmul.f32 %v629, 0.1
        %v758 = vmul.f32 %v632, 0.1
        %v759 = vmul.f32 %v637, 0.1
        %v760 = vmul.f32 %v640, 0.1
        %v761 = vmul.f32 %v645, 0.1
        %v762 = vmul.f32 %v648, 0.1
        %v763 = vmul.f32 %v653, 0.1
        %v764 = vmul.f32 %v656, 0.1
        %v765 = vmul.f32 %v661, 0.1
        %v766 = vmul.f32 %v664, 0.1
        %v767 = vmul.f32 %v669, 0.1
        %v768 = vmul.f32 %v672, 0.1
        %v769 = vmul.f32 %v677, 0.1
        %v770 = vmul.f32 %v680, 0.1
        %v771 = vmul.f32 %v685, 0.1
        %v772 = vmul.f32 %v688, 0.1
        %v773 = vmul.f32 %v693, 0.1
        %v774 = vmul.f32 %v696, 0.1
        %v775 = vmul.f32 %v701, 0.1
        %v776 = vmul.f32 %v704, 0.1
        %v777 = vmul.f32 %v709, 0.1
        %v778 = vmul.f32 %v712, 0.1
        %v779 = vsel %vm715, %v589, %v747
        %v780 = vsel %vm716, %v592, %v748
        %v781 = vsel %vm717, %v597, %v749
        %v782 = vsel %vm718, %v600, %v750
        %v783 = vsel %vm719, %v605, %v751
        %v784 = vsel %vm720, %v608, %v752
        %v785 = vsel %vm721, %v613, %v753
        %v786 = vsel %vm722, %v616, %v754
        %v787 = vsel %vm723, %v621, %v755
        %v788 = vsel %vm724, %v624, %v756
        %v789 = vsel %vm725, %v629, %v757
        %v790 = vsel %vm726, %v632, %v758
        %v791 = vsel %vm727, %v637, %v759
        %v792 = vsel %vm728, %v640, %v760
        %v793 = vsel %vm729, %v645, %v761
        %v794 = vsel %vm730, %v648, %v762
        %v795 = vsel %vm731, %v653, %v763
        %v796 = vsel %vm732, %v656, %v764
        %v797 = vsel %vm733, %v661, %v765
        %v798 = vsel %vm734, %v664, %v766
        %v799 = vsel %vm735, %v669, %v767
        %v800 = vsel %vm736, %v672, %v768
        %v801 = vsel %vm737, %v677, %v769
        %v802 = vsel %vm738, %v680, %v770
        %v803 = vsel %vm739, %v685, %v771
        %v804 = vsel %vm740, %v688, %v772
        %v805 = vsel %vm741, %v693, %v773
        %v806 = vsel %vm742, %v696, %v774
        %v807 = vsel %vm743, %v701, %v775
        %v808 = vsel %vm744, %v704, %v776
        %v809 = vsel %vm745, %v709, %v777
        %v810 = vsel %vm746, %v712, %v778
        %vm811 = vcmask 523264
        %812 = vst.msk [vmem:[#allocation2] sm:$0xff] %vm811, 0.0
        %813 = vst.msk [vmem:[#allocation2 + $0x8] sm:$0xff] %vm811, 0.0
        %814 = vst.msk [vmem:[#allocation2 + $0x10] sm:$0xff] %vm811, 0.0
        %815 = vst.msk [vmem:[#allocation2 + $0x18] sm:$0xff] %vm811, 0.0
        %816 = vst.msk [vmem:[#allocation2 + $0x120] sm:$0xff] %vm811, 0.0
        %817 = vst.msk [vmem:[#allocation2 + $0x128] sm:$0xff] %vm811, 0.0
        %818 = vst.msk [vmem:[#allocation2 + $0x130] sm:$0xff] %vm811, 0.0
        %819 = vst.msk [vmem:[#allocation2 + $0x138] sm:$0xff] %vm811, 0.0
        %820 = vst.msk [vmem:[#allocation2 + $0x20] sm:$0xff] %vm811, %v779
        %821 = vst.msk [vmem:[#allocation2 + $0x28] sm:$0xff] %vm811, %v780
        %822 = vst.msk [vmem:[#allocation2 + $0x30] sm:$0xff] %vm811, %v781
        %823 = vst.msk [vmem:[#allocation2 + $0x38] sm:$0xff] %vm811, %v782
        %824 = vst.msk [vmem:[#allocation2 + $0x40] sm:$0xff] %vm811, %v783
        %825 = vst.msk [vmem:[#allocation2 + $0x48] sm:$0xff] %vm811, %v784
        %826 = vst.msk [vmem:[#allocation2 + $0x50] sm:$0xff] %vm811, %v785
        %827 = vst.msk [vmem:[#allocation2 + $0x58] sm:$0xff] %vm811, %v786
        %828 = vst.msk [vmem:[#allocation2 + $0x60] sm:$0xff] %vm811, %v787
        %829 = vst.msk [vmem:[#allocation2 + $0x68] sm:$0xff] %vm811, %v788
        %830 = vst.msk [vmem:[#allocation2 + $0x70] sm:$0xff] %vm811, %v789
        %831 = vst.msk [vmem:[#allocation2 + $0x78] sm:$0xff] %vm811, %v790
        %832 = vst.msk [vmem:[#allocation2 + $0x80] sm:$0xff] %vm811, %v791
        %833 = vst.msk [vmem:[#allocation2 + $0x88] sm:$0xff] %vm811, %v792
        %834 = vst.msk [vmem:[#allocation2 + $0x90] sm:$0xff] %vm811, %v793
        %835 = vst.msk [vmem:[#allocation2 + $0x98] sm:$0xff] %vm811, %v794
        %836 = vst.msk [vmem:[#allocation2 + $0xa0] sm:$0xff] %vm811, %v795
        %837 = vst.msk [vmem:[#allocation2 + $0xa8] sm:$0xff] %vm811, %v796
        %838 = vst.msk [vmem:[#allocation2 + $0xb0] sm:$0xff] %vm811, %v797
        %839 = vst.msk [vmem:[#allocation2 + $0xb8] sm:$0xff] %vm811, %v798
        %840 = vst.msk [vmem:[#allocation2 + $0xc0] sm:$0xff] %vm811, %v799
        %841 = vst.msk [vmem:[#allocation2 + $0xc8] sm:$0xff] %vm811, %v800
        %842 = vst.msk [vmem:[#allocation2 + $0xd0] sm:$0xff] %vm811, %v801
        %843 = vst.msk [vmem:[#allocation2 + $0xd8] sm:$0xff] %vm811, %v802
        %844 = vst.msk [vmem:[#allocation2 + $0xe0] sm:$0xff] %vm811, %v803
        %845 = vst.msk [vmem:[#allocation2 + $0xe8] sm:$0xff] %vm811, %v804
        %846 = vst.msk [vmem:[#allocation2 + $0xf0] sm:$0xff] %vm811, %v805
        %847 = vst.msk [vmem:[#allocation2 + $0xf8] sm:$0xff] %vm811, %v806
        %848 = vst.msk [vmem:[#allocation2 + $0x100] sm:$0xff] %vm811, %v807
        %849 = vst.msk [vmem:[#allocation2 + $0x108] sm:$0xff] %vm811, %v808
        %850 = vst.msk [vmem:[#allocation2 + $0x110] sm:$0xff] %vm811, %v809
        %851 = vst.msk [vmem:[#allocation2 + $0x118] sm:$0xff] %vm811, %v810
        %v852 = vld [vmem:[%s6] sm:$0xff]
        %v853 = vld [vmem:[%s6 + $0x8] sm:$0xff]
        %v854 = vld [vmem:[%s6 + $0x10] sm:$0xff]
        %v855 = vld [vmem:[%s6 + $0x18] sm:$0xff]
        %v856 = vld [vmem:[%s6 + $0x20] sm:$0xff]
        %v857 = vld [vmem:[%s6 + $0x28] sm:$0xff]
        %v858 = vld [vmem:[%s6 + $0x30] sm:$0xff]
        %v859 = vld [vmem:[%s6 + $0x38] sm:$0xff]
        %v860 = vld [vmem:[%s6 + $0x40] sm:$0xff]
        %v861 = vld [vmem:[%s6 + $0x48] sm:$0xff]
        %v862 = vld [vmem:[%s6 + $0x50] sm:$0xff]
        %v863 = vld [vmem:[%s6 + $0x58] sm:$0xff]
        %v864 = vld [vmem:[%s6 + $0x60] sm:$0xff]
        %v865 = vld [vmem:[%s6 + $0x68] sm:$0xff]
        %v866 = vld [vmem:[%s6 + $0x70] sm:$0xff]
        %v867 = vld [vmem:[%s6 + $0x78] sm:$0xff]
        %v868 = vld [vmem:[%s6 + $0x80] sm:$0xff]
        %v869 = vld [vmem:[%s6 + $0x88] sm:$0xff]
        %v870 = vld [vmem:[%s6 + $0x90] sm:$0xff]
        %v871 = vld [vmem:[%s6 + $0x98] sm:$0xff]
        %v872 = vld [vmem:[%s6 + $0xa0] sm:$0xff]
        %v873 = vld [vmem:[%s6 + $0xa8] sm:$0xff]
        %v874 = vld [vmem:[%s6 + $0xb0] sm:$0xff]
        %v875 = vld [vmem:[%s6 + $0xb8] sm:$0xff]
        %v876 = vld [vmem:[%s6 + $0xc0] sm:$0xff]
        %v877 = vld [vmem:[%s6 + $0xc8] sm:$0xff]
        %v878 = vld [vmem:[%s6 + $0xd0] sm:$0xff]
        %v879 = vld [vmem:[%s6 + $0xd8] sm:$0xff]
        %v880 = vld [vmem:[%s6 + $0xe0] sm:$0xff]
        %v881 = vld [vmem:[%s6 + $0xe8] sm:$0xff]
        %v882 = vld [vmem:[%s6 + $0xf0] sm:$0xff]
        %v883 = vld [vmem:[%s6 + $0xf8] sm:$0xff]
        %v884 = vpack.c.bf16 %v780, %v779
        %v885 = vpack.c.bf16 %v782, %v781
        %v886 = vpack.c.bf16 %v784, %v783
        %v887 = vpack.c.bf16 %v786, %v785
        %v888 = vpack.c.bf16 %v788, %v787
        %v889 = vpack.c.bf16 %v790, %v789
        %v890 = vpack.c.bf16 %v792, %v791
        %v891 = vpack.c.bf16 %v794, %v793
        %v892 = vpack.c.bf16 %v796, %v795
        %v893 = vpack.c.bf16 %v798, %v797
        %v894 = vpack.c.bf16 %v800, %v799
        %v895 = vpack.c.bf16 %v802, %v801
        %v896 = vpack.c.bf16 %v804, %v803
        %v897 = vpack.c.bf16 %v806, %v805
        %v898 = vpack.c.bf16 %v808, %v807
        %v899 = vpack.c.bf16 %v810, %v809
        %v900 = vld [vmem:[#allocation2 + $0xf] sm:$0xff]
        %v901 = vld [vmem:[#allocation2 + $0x17] sm:$0xff]
        %v902 = vld [vmem:[#allocation2 + $0x1f] sm:$0xff]
        %v903 = vld [vmem:[#allocation2 + $0x27] sm:$0xff]
        %v904 = vld [vmem:[#allocation2 + $0x2f] sm:$0xff]
        %v905 = vld [vmem:[#allocation2 + $0x37] sm:$0xff]
        %v906 = vld [vmem:[#allocation2 + $0x3f] sm:$0xff]
        %v907 = vld [vmem:[#allocation2 + $0x47] sm:$0xff]
        %v908 = vld [vmem:[#allocation2 + $0x4f] sm:$0xff]
        %v909 = vld [vmem:[#allocation2 + $0x57] sm:$0xff]
        %v910 = vld [vmem:[#allocation2 + $0x5f] sm:$0xff]
        %v911 = vld [vmem:[#allocation2 + $0x67] sm:$0xff]
        %v912 = vld [vmem:[#allocation2 + $0x6f] sm:$0xff]
        %v913 = vld [vmem:[#allocation2 + $0x77] sm:$0xff]
        %v914 = vld [vmem:[#allocation2 + $0x7f] sm:$0xff]
        %v915 = vld [vmem:[#allocation2 + $0x87] sm:$0xff]
        %v916 = vld [vmem:[#allocation2 + $0x8f] sm:$0xff]
        %v917 = vld [vmem:[#allocation2 + $0x97] sm:$0xff]
        %v918 = vld [vmem:[#allocation2 + $0x9f] sm:$0xff]
        %v919 = vld [vmem:[#allocation2 + $0xa7] sm:$0xff]
        %v920 = vld [vmem:[#allocation2 + $0xaf] sm:$0xff]
        %v921 = vld [vmem:[#allocation2 + $0xb7] sm:$0xff]
        %v922 = vld [vmem:[#allocation2 + $0xbf] sm:$0xff]
        %v923 = vld [vmem:[#allocation2 + $0xc7] sm:$0xff]
        %v924 = vld [vmem:[#allocation2 + $0xcf] sm:$0xff]
        %v925 = vld [vmem:[#allocation2 + $0xd7] sm:$0xff]
        %v926 = vld [vmem:[#allocation2 + $0xdf] sm:$0xff]
        %v927 = vld [vmem:[#allocation2 + $0xe7] sm:$0xff]
        %v928 = vld [vmem:[#allocation2 + $0xef] sm:$0xff]
        %v929 = vld [vmem:[#allocation2 + $0xf7] sm:$0xff]
        %v930 = vld [vmem:[#allocation2 + $0xff] sm:$0xff]
        %v931 = vld [vmem:[#allocation2 + $0x107] sm:$0xff]
        %933 = vset.pattern.permute.xlu0 0
        %934 = vperm.xlu0 %933, %v852
        %v935 = vpop.permute.xlu0 %934
        %938 = vset.pattern.permute.xlu0 0
        %939 = vperm.xlu0 %938, %v853
        %v940 = vpop.permute.xlu0 %939
        %943 = vset.pattern.permute.xlu0 0
        %944 = vperm.xlu0 %943, %v854
        %v945 = vpop.permute.xlu0 %944
        %948 = vset.pattern.permute.xlu0 0
        %949 = vperm.xlu0 %948, %v855
        %v950 = vpop.permute.xlu0 %949
        %953 = vset.pattern.permute.xlu0 0
        %954 = vperm.xlu0 %953, %v856
        %v955 = vpop.permute.xlu0 %954
        %958 = vset.pattern.permute.xlu0 0
        %959 = vperm.xlu0 %958, %v857
        %v960 = vpop.permute.xlu0 %959
        %963 = vset.pattern.permute.xlu0 0
        %964 = vperm.xlu0 %963, %v858
        %v965 = vpop.permute.xlu0 %964
        %968 = vset.pattern.permute.xlu0 0
        %969 = vperm.xlu0 %968, %v859
        %v970 = vpop.permute.xlu0 %969
        %973 = vset.pattern.permute.xlu0 0
        %974 = vperm.xlu0 %973, %v860
        %v975 = vpop.permute.xlu0 %974
        %978 = vset.pattern.permute.xlu0 0
        %979 = vperm.xlu0 %978, %v861
        %v980 = vpop.permute.xlu0 %979
        %983 = vset.pattern.permute.xlu0 0
        %984 = vperm.xlu0 %983, %v862
        %v985 = vpop.permute.xlu0 %984
        %988 = vset.pattern.permute.xlu0 0
        %989 = vperm.xlu0 %988, %v863
        %v990 = vpop.permute.xlu0 %989
        %993 = vset.pattern.permute.xlu0 0
        %994 = vperm.xlu0 %993, %v864
        %v995 = vpop.permute.xlu0 %994
        %998 = vset.pattern.permute.xlu0 0
        %999 = vperm.xlu0 %998, %v865
        %v1000 = vpop.permute.xlu0 %999
        %1003 = vset.pattern.permute.xlu0 0
        %1004 = vperm.xlu0 %1003, %v866
        %v1005 = vpop.permute.xlu0 %1004
        %1008 = vset.pattern.permute.xlu0 0
        %1009 = vperm.xlu0 %1008, %v867
        %v1010 = vpop.permute.xlu0 %1009
        %1013 = vset.pattern.permute.xlu0 0
        %1014 = vperm.xlu0 %1013, %v868
        %v1015 = vpop.permute.xlu0 %1014
        %1018 = vset.pattern.permute.xlu0 0
        %1019 = vperm.xlu0 %1018, %v869
        %v1020 = vpop.permute.xlu0 %1019
        %1023 = vset.pattern.permute.xlu0 0
        %1024 = vperm.xlu0 %1023, %v870
        %v1025 = vpop.permute.xlu0 %1024
        %1028 = vset.pattern.permute.xlu0 0
        %1029 = vperm.xlu0 %1028, %v871
        %v1030 = vpop.permute.xlu0 %1029
        %1033 = vset.pattern.permute.xlu0 0
        %1034 = vperm.xlu0 %1033, %v872
        %v1035 = vpop.permute.xlu0 %1034
        %1038 = vset.pattern.permute.xlu0 0
        %1039 = vperm.xlu0 %1038, %v873
        %v1040 = vpop.permute.xlu0 %1039
        %1043 = vset.pattern.permute.xlu0 0
        %1044 = vperm.xlu0 %1043, %v874
        %v1045 = vpop.permute.xlu0 %1044
        %1048 = vset.pattern.permute.xlu0 0
        %1049 = vperm.xlu0 %1048, %v875
        %v1050 = vpop.permute.xlu0 %1049
        %1053 = vset.pattern.permute.xlu0 0
        %1054 = vperm.xlu0 %1053, %v876
        %v1055 = vpop.permute.xlu0 %1054
        %1058 = vset.pattern.permute.xlu0 0
        %1059 = vperm.xlu0 %1058, %v877
        %v1060 = vpop.permute.xlu0 %1059
        %1063 = vset.pattern.permute.xlu0 0
        %1064 = vperm.xlu0 %1063, %v878
        %v1065 = vpop.permute.xlu0 %1064
        %1068 = vset.pattern.permute.xlu0 0
        %1069 = vperm.xlu0 %1068, %v879
        %v1070 = vpop.permute.xlu0 %1069
        %1073 = vset.pattern.permute.xlu0 0
        %1074 = vperm.xlu0 %1073, %v880
        %v1075 = vpop.permute.xlu0 %1074
        %1078 = vset.pattern.permute.xlu0 0
        %1079 = vperm.xlu0 %1078, %v881
        %v1080 = vpop.permute.xlu0 %1079
        %1083 = vset.pattern.permute.xlu0 0
        %1084 = vperm.xlu0 %1083, %v882
        %v1085 = vpop.permute.xlu0 %1084
        %1088 = vset.pattern.permute.xlu0 0
        %1089 = vperm.xlu0 %1088, %v883
        %v1090 = vpop.permute.xlu0 %1089
        %v1092 = vmul.f32 %v900, %v935
        %v1093 = vmul.f32 %v901, %v940
        %v1094 = vmul.f32 %v902, %v945
        %v1095 = vmul.f32 %v903, %v950
        %v1096 = vmul.f32 %v904, %v955
        %v1097 = vmul.f32 %v905, %v960
        %v1098 = vmul.f32 %v906, %v965
        %v1099 = vmul.f32 %v907, %v970
        %v1100 = vmul.f32 %v908, %v975
        %v1101 = vmul.f32 %v909, %v980
        %v1102 = vmul.f32 %v910, %v985
        %v1103 = vmul.f32 %v911, %v990
        %v1104 = vmul.f32 %v912, %v995
        %v1105 = vmul.f32 %v913, %v1000
        %v1106 = vmul.f32 %v914, %v1005
        %v1107 = vmul.f32 %v915, %v1010
        %v1108 = vmul.f32 %v916, %v1015
        %v1109 = vmul.f32 %v917, %v1020
        %v1110 = vmul.f32 %v918, %v1025
        %v1111 = vmul.f32 %v919, %v1030
        %v1112 = vmul.f32 %v920, %v1035
        %v1113 = vmul.f32 %v921, %v1040
        %v1114 = vmul.f32 %v922, %v1045
        %v1115 = vmul.f32 %v923, %v1050
        %v1116 = vmul.f32 %v924, %v1055
        %v1117 = vmul.f32 %v925, %v1060
        %v1118 = vmul.f32 %v926, %v1065
        %v1119 = vmul.f32 %v927, %v1070
        %v1120 = vmul.f32 %v928, %v1075
        %v1121 = vmul.f32 %v929, %v1080
        %v1122 = vmul.f32 %v930, %v1085
        %v1123 = vmul.f32 %v931, %v1090
        %v1124 = vpack.c.bf16 %v1093, %v1092
        %v1125 = vpack.c.bf16 %v1095, %v1094
        %v1126 = vpack.c.bf16 %v1097, %v1096
        %v1127 = vpack.c.bf16 %v1099, %v1098
        %v1128 = vpack.c.bf16 %v1101, %v1100
        %v1129 = vpack.c.bf16 %v1103, %v1102
        %v1130 = vpack.c.bf16 %v1105, %v1104
        %v1131 = vpack.c.bf16 %v1107, %v1106
        %v1132 = vpack.c.bf16 %v1109, %v1108
        %v1133 = vpack.c.bf16 %v1111, %v1110
        %v1134 = vpack.c.bf16 %v1113, %v1112
        %v1135 = vpack.c.bf16 %v1115, %v1114
        %v1136 = vpack.c.bf16 %v1117, %v1116
        %v1137 = vpack.c.bf16 %v1119, %v1118
        %v1138 = vpack.c.bf16 %v1121, %v1120
        %v1139 = vpack.c.bf16 %v1123, %v1122
        %v1140 = vld [vmem:[%s4] sm:$0xf]
        %v1141 = vld [vmem:[%s4 + $0x4] sm:$0xf]
        %v1142 = vld [vmem:[%s4 + $0x8] sm:$0xf]
        %v1143 = vld [vmem:[%s4 + $0xc] sm:$0xf]
        %v1144 = vld [vmem:[%s4 + $0x10] sm:$0xf]
        %v1145 = vld [vmem:[%s4 + $0x14] sm:$0xf]
        %v1146 = vld [vmem:[%s4 + $0x18] sm:$0xf]
        %v1147 = vld [vmem:[%s4 + $0x1c] sm:$0xf]
        %v1148 = vld [vmem:[#allocation2 + $0x10] sm:$0xff]
        %v1149 = vld [vmem:[#allocation2 + $0x18] sm:$0xff]
        %v1150 = vld [vmem:[#allocation2 + $0x20] sm:$0xff]
        %v1151 = vld [vmem:[#allocation2 + $0x28] sm:$0xff]
        %v1152 = vld [vmem:[#allocation2 + $0x30] sm:$0xff]
        %v1153 = vld [vmem:[#allocation2 + $0x38] sm:$0xff]
        %v1154 = vld [vmem:[#allocation2 + $0x40] sm:$0xff]
        %v1155 = vld [vmem:[#allocation2 + $0x48] sm:$0xff]
        %v1156 = vld [vmem:[#allocation2 + $0x50] sm:$0xff]
        %v1157 = vld [vmem:[#allocation2 + $0x58] sm:$0xff]
        %v1158 = vld [vmem:[#allocation2 + $0x60] sm:$0xff]
        %v1159 = vld [vmem:[#allocation2 + $0x68] sm:$0xff]
        %v1160 = vld [vmem:[#allocation2 + $0x70] sm:$0xff]
        %v1161 = vld [vmem:[#allocation2 + $0x78] sm:$0xff]
        %v1162 = vld [vmem:[#allocation2 + $0x80] sm:$0xff]
        %v1163 = vld [vmem:[#allocation2 + $0x88] sm:$0xff]
        %v1164 = vld [vmem:[#allocation2 + $0x90] sm:$0xff]
        %v1165 = vld [vmem:[#allocation2 + $0x98] sm:$0xff]
        %v1166 = vld [vmem:[#allocation2 + $0xa0] sm:$0xff]
        %v1167 = vld [vmem:[#allocation2 + $0xa8] sm:$0xff]
        %v1168 = vld [vmem:[#allocation2 + $0xb0] sm:$0xff]
        %v1169 = vld [vmem:[#allocation2 + $0xb8] sm:$0xff]
        %v1170 = vld [vmem:[#allocation2 + $0xc0] sm:$0xff]
        %v1171 = vld [vmem:[#allocation2 + $0xc8] sm:$0xff]
        %v1172 = vld [vmem:[#allocation2 + $0xd0] sm:$0xff]
        %v1173 = vld [vmem:[#allocation2 + $0xd8] sm:$0xff]
        %v1174 = vld [vmem:[#allocation2 + $0xe0] sm:$0xff]
        %v1175 = vld [vmem:[#allocation2 + $0xe8] sm:$0xff]
        %v1176 = vld [vmem:[#allocation2 + $0xf0] sm:$0xff]
        %v1177 = vld [vmem:[#allocation2 + $0xf8] sm:$0xff]
        %v1178 = vld [vmem:[#allocation2 + $0x100] sm:$0xff]
        %v1179 = vld [vmem:[#allocation2 + $0x108] sm:$0xff]
        %1180 = vset.pattern.permute.xlu0 1
        %1181 = vperm.xlu0 %1180, %v852
        %v1182 = vpop.permute.xlu0 %1181
        %1184 = vset.pattern.permute.xlu0 1
        %1185 = vperm.xlu0 %1184, %v853
        %v1186 = vpop.permute.xlu0 %1185
        %1188 = vset.pattern.permute.xlu0 1
        %1189 = vperm.xlu0 %1188, %v854
        %v1190 = vpop.permute.xlu0 %1189
        %1192 = vset.pattern.permute.xlu0 1
        %1193 = vperm.xlu0 %1192, %v855
        %v1194 = vpop.permute.xlu0 %1193
        %1196 = vset.pattern.permute.xlu0 1
        %1197 = vperm.xlu0 %1196, %v856
        %v1198 = vpop.permute.xlu0 %1197
        %1200 = vset.pattern.permute.xlu0 1
        %1201 = vperm.xlu0 %1200, %v857
        %v1202 = vpop.permute.xlu0 %1201
        %1204 = vset.pattern.permute.xlu0 1
        %1205 = vperm.xlu0 %1204, %v858
        %v1206 = vpop.permute.xlu0 %1205
        %1208 = vset.pattern.permute.xlu0 1
        %1209 = vperm.xlu0 %1208, %v859
        %v1210 = vpop.permute.xlu0 %1209
        %1212 = vset.pattern.permute.xlu0 1
        %1213 = vperm.xlu0 %1212, %v860
        %v1214 = vpop.permute.xlu0 %1213
        %1216 = vset.pattern.permute.xlu0 1
        %1217 = vperm.xlu0 %1216, %v861
        %v1218 = vpop.permute.xlu0 %1217
        %1220 = vset.pattern.permute.xlu0 1
        %1221 = vperm.xlu0 %1220, %v862
        %v1222 = vpop.permute.xlu0 %1221
        %1224 = vset.pattern.permute.xlu0 1
        %1225 = vperm.xlu0 %1224, %v863
        %v1226 = vpop.permute.xlu0 %1225
        %1228 = vset.pattern.permute.xlu0 1
        %1229 = vperm.xlu0 %1228, %v864
        %v1230 = vpop.permute.xlu0 %1229
        %1232 = vset.pattern.permute.xlu0 1
        %1233 = vperm.xlu0 %1232, %v865
        %v1234 = vpop.permute.xlu0 %1233
        %1236 = vset.pattern.permute.xlu0 1
        %1237 = vperm.xlu0 %1236, %v866
        %v1238 = vpop.permute.xlu0 %1237
        %1240 = vset.pattern.permute.xlu0 1
        %1241 = vperm.xlu0 %1240, %v867
        %v1242 = vpop.permute.xlu0 %1241
        %1244 = vset.pattern.permute.xlu0 1
        %1245 = vperm.xlu0 %1244, %v868
        %v1246 = vpop.permute.xlu0 %1245
        %1248 = vset.pattern.permute.xlu0 1
        %1249 = vperm.xlu0 %1248, %v869
        %v1250 = vpop.permute.xlu0 %1249
        %1252 = vset.pattern.permute.xlu0 1
        %1253 = vperm.xlu0 %1252, %v870
        %v1254 = vpop.permute.xlu0 %1253
        %1256 = vset.pattern.permute.xlu0 1
        %1257 = vperm.xlu0 %1256, %v871
        %v1258 = vpop.permute.xlu0 %1257
        %1260 = vset.pattern.permute.xlu0 1
        %1261 = vperm.xlu0 %1260, %v872
        %v1262 = vpop.permute.xlu0 %1261
        %1264 = vset.pattern.permute.xlu0 1
        %1265 = vperm.xlu0 %1264, %v873
        %v1266 = vpop.permute.xlu0 %1265
        %1268 = vset.pattern.permute.xlu0 1
        %1269 = vperm.xlu0 %1268, %v874
        %v1270 = vpop.permute.xlu0 %1269
        %1272 = vset.pattern.permute.xlu0 1
        %1273 = vperm.xlu0 %1272, %v875
        %v1274 = vpop.permute.xlu0 %1273
        %1276 = vset.pattern.permute.xlu0 1
        %1277 = vperm.xlu0 %1276, %v876
        %v1278 = vpop.permute.xlu0 %1277
        %1280 = vset.pattern.permute.xlu0 1
        %1281 = vperm.xlu0 %1280, %v877
        %v1282 = vpop.permute.xlu0 %1281
        %1284 = vset.pattern.permute.xlu0 1
        %1285 = vperm.xlu0 %1284, %v878
        %v1286 = vpop.permute.xlu0 %1285
        %1288 = vset.pattern.permute.xlu0 1
        %1289 = vperm.xlu0 %1288, %v879
        %v1290 = vpop.permute.xlu0 %1289
        %1292 = vset.pattern.permute.xlu0 1
        %1293 = vperm.xlu0 %1292, %v880
        %v1294 = vpop.permute.xlu0 %1293
        %1296 = vset.pattern.permute.xlu0 1
        %1297 = vperm.xlu0 %1296, %v881
        %v1298 = vpop.permute.xlu0 %1297
        %1300 = vset.pattern.permute.xlu0 1
        %1301 = vperm.xlu0 %1300, %v882
        %v1302 = vpop.permute.xlu0 %1301
        %1304 = vset.pattern.permute.xlu0 1
        %1305 = vperm.xlu0 %1304, %v883
        %v1306 = vpop.permute.xlu0 %1305
        %v1308 = vmul.f32 %v1148, %v1182
        %v1309 = vmul.f32 %v1149, %v1186
        %v1310 = vmul.f32 %v1150, %v1190
        %v1311 = vmul.f32 %v1151, %v1194
        %v1312 = vmul.f32 %v1152, %v1198
        %v1313 = vmul.f32 %v1153, %v1202
        %v1314 = vmul.f32 %v1154, %v1206
        %v1315 = vmul.f32 %v1155, %v1210
        %v1316 = vmul.f32 %v1156, %v1214
        %v1317 = vmul.f32 %v1157, %v1218
        %v1318 = vmul.f32 %v1158, %v1222
        %v1319 = vmul.f32 %v1159, %v1226
        %v1320 = vmul.f32 %v1160, %v1230
        %v1321 = vmul.f32 %v1161, %v1234
        %v1322 = vmul.f32 %v1162, %v1238
        %v1323 = vmul.f32 %v1163, %v1242
        %v1324 = vmul.f32 %v1164, %v1246
        %v1325 = vmul.f32 %v1165, %v1250
        %v1326 = vmul.f32 %v1166, %v1254
        %v1327 = vmul.f32 %v1167, %v1258
        %v1328 = vmul.f32 %v1168, %v1262
        %v1329 = vmul.f32 %v1169, %v1266
        %v1330 = vmul.f32 %v1170, %v1270
        %v1331 = vmul.f32 %v1171, %v1274
        %v1332 = vmul.f32 %v1172, %v1278
        %v1333 = vmul.f32 %v1173, %v1282
        %v1334 = vmul.f32 %v1174, %v1286
        %v1335 = vmul.f32 %v1175, %v1290
        %v1336 = vmul.f32 %v1176, %v1294
        %v1337 = vmul.f32 %v1177, %v1298
        %v1338 = vmul.f32 %v1178, %v1302
        %v1339 = vmul.f32 %v1179, %v1306
        %v1340 = vpack.c.bf16 %v1309, %v1308
        %v1341 = vpack.c.bf16 %v1311, %v1310
        %v1342 = vpack.c.bf16 %v1313, %v1312
        %v1343 = vpack.c.bf16 %v1315, %v1314
        %v1344 = vpack.c.bf16 %v1317, %v1316
        %v1345 = vpack.c.bf16 %v1319, %v1318
        %v1346 = vpack.c.bf16 %v1321, %v1320
        %v1347 = vpack.c.bf16 %v1323, %v1322
        %v1348 = vpack.c.bf16 %v1325, %v1324
        %v1349 = vpack.c.bf16 %v1327, %v1326
        %v1350 = vpack.c.bf16 %v1329, %v1328
        %v1351 = vpack.c.bf16 %v1331, %v1330
        %v1352 = vpack.c.bf16 %v1333, %v1332
        %v1353 = vpack.c.bf16 %v1335, %v1334
        %v1354 = vpack.c.bf16 %v1337, %v1336
        %v1355 = vpack.c.bf16 %v1339, %v1338
        %s1356 = scalar_lea.vmem %s4, 32
        %v1357 = vld [vmem:[%s1356] sm:$0xf]
        %v1358 = vld [vmem:[%s1356 + $0x4] sm:$0xf]
        %v1359 = vld [vmem:[%s1356 + $0x8] sm:$0xf]
        %v1360 = vld [vmem:[%s1356 + $0xc] sm:$0xf]
        %v1361 = vld [vmem:[%s1356 + $0x10] sm:$0xf]
        %v1362 = vld [vmem:[%s1356 + $0x14] sm:$0xf]
        %v1363 = vld [vmem:[%s1356 + $0x18] sm:$0xf]
        %v1364 = vld [vmem:[%s1356 + $0x1c] sm:$0xf]
        %v1373 = vunpack.c.l.b16 %v1357
        %v1374 = vunpack.c.l.b16 %v1358
        %v1375 = vunpack.c.l.b16 %v1359
        %v1376 = vunpack.c.l.b16 %v1360
        %v1377 = vunpack.c.l.b16 %v1361
        %v1378 = vunpack.c.l.b16 %v1362
        %v1379 = vunpack.c.l.b16 %v1363
        %v1380 = vunpack.c.l.b16 %v1364
        %v1381 = vpack.c.b16 %v1374, %v1373
        %v1382 = vpack.c.b16 %v1376, %v1375
        %v1383 = vpack.c.b16 %v1378, %v1377
        %v1384 = vpack.c.b16 %v1380, %v1379
        %v1390 = vsel %vm811, %v1340, 0
        %v1393 = vsel %vm811, %v1341, 0
        %v1396 = vsel %vm811, %v1342, 0
        %v1399 = vsel %vm811, %v1343, 0
        %v1402 = vsel %vm811, %v1344, 0
        %v1405 = vsel %vm811, %v1345, 0
        %v1408 = vsel %vm811, %v1346, 0
        %v1411 = vsel %vm811, %v1347, 0
        %v1414 = vsel %vm811, %v1348, 0
        %v1417 = vsel %vm811, %v1349, 0
        %v1420 = vsel %vm811, %v1350, 0
        %v1423 = vsel %vm811, %v1351, 0
        %v1426 = vsel %vm811, %v1352, 0
        %v1429 = vsel %vm811, %v1353, 0
        %v1432 = vsel %vm811, %v1354, 0
        %v1435 = vsel %vm811, %v1355, 0
        %1437 = vmatprep.subr.bf16.mxu0 0
        %1438 = vmatpush1.bf16.msra.mxu0 %v1381
        %1439 = vmatprep.subr.bf16.mxu0 0
        %1440 = vmatpush1.bf16.msra.mxu0 %v1382
        %1441 = vmatprep.subr.bf16.mxu0 0
        %1442 = vmatpush1.bf16.msra.mxu0 %v1383
        %1443 = vmatprep.subr.bf16.mxu0 0
        %1444 = vmatpush1.bf16.msra.mxu0 %v1384
        %1445 = vmatprep.subr.bf16.mxu0 0
        %1446 = vmatpush1.bf16.msra.mxu0 0
        %1447 = vmatprep.subr.bf16.mxu0 0
        %1448 = vmatpush1.bf16.msra.mxu0 0
        %1449 = vmatprep.subr.bf16.mxu0 0
        %1450 = vmatpush1.bf16.msra.mxu0 0
        %1451 = vmatprep.subr.bf16.mxu0 0
        %1452 = vmatpush1.bf16.msra.mxu0 0
        %1453 = vmatprep.subr.bf16.mxu0 0
        %1454 = vmatpush1.bf16.msra.mxu0 0
        %1455 = vmatprep.subr.bf16.mxu0 0
        %1456 = vmatpush1.bf16.msra.mxu0 0
        %1457 = vmatprep.subr.bf16.mxu0 0
        %1458 = vmatpush1.bf16.msra.mxu0 0
        %1459 = vmatprep.subr.bf16.mxu0 0
        %1460 = vmatpush1.bf16.msra.mxu0 0
        %1461 = vmatprep.subr.bf16.mxu0 0
        %1462 = vmatpush1.bf16.msra.mxu0 0
        %1463 = vmatprep.subr.bf16.mxu0 0
        %1464 = vmatpush1.bf16.msra.mxu0 0
        %1465 = vmatprep.subr.bf16.mxu0 0
        %1466 = vmatpush1.bf16.msra.mxu0 0
        %1467 = vmatprep.subr.bf16.mxu0 0
        %1468 = vmatpush1.bf16.msra.mxu0 0
        %1469 = vmatprep.mubr.bf16.mxu0 0
        %1470 = vmatmul.mubr.bf16.gmra.mrb[0].mxu0 %v1390
        %v1471 = vpop.f32.mrb[0].mxu0
        %v1472 = vadd.f32 0.0, %v1471
        %v1473 = vpop.f32.mrb[0].mxu0
        %v1474 = vpop.f32.mrb[0].mxu0
        %v1475 = vadd.f32 0.0, %v1474
        %v1476 = vpop.f32.mrb[0].mxu0
        %1477 = vmatprep.mubr.bf16.mxu0 0
        %1478 = vmatmul.mubr.bf16.gmra.mrb[0].mxu0 %v1393
        %v1479 = vpop.f32.mrb[0].mxu0
        %v1480 = vadd.f32 0.0, %v1479
        %v1481 = vpop.f32.mrb[0].mxu0
        %v1482 = vpop.f32.mrb[0].mxu0
        %v1483 = vadd.f32 0.0, %v1482
        %v1484 = vpop.f32.mrb[0].mxu0
        %1485 = vmatprep.mubr.bf16.mxu0 0
        %1486 = vmatmul.mubr.bf16.gmra.mrb[0].mxu0 %v1396
        %v1487 = vpop.f32.mrb[0].mxu0
        %v1488 = vadd.f32 0.0, %v1487
        %v1489 = vpop.f32.mrb[0].mxu0
        %v1490 = vpop.f32.mrb[0].mxu0
        %v1491 = vadd.f32 0.0, %v1490
        %v1492 = vpop.f32.mrb[0].mxu0
        %1493 = vmatprep.mubr.bf16.mxu0 0
        %1494 = vmatmul.mubr.bf16.gmra.mrb[0].mxu0 %v1399
        %v1495 = vpop.f32.mrb[0].mxu0
        %v1496 = vadd.f32 0.0, %v1495
        %v1497 = vpop.f32.mrb[0].mxu0
        %v1498 = vpop.f32.mrb[0].mxu0
        %v1499 = vadd.f32 0.0, %v1498
        %v1500 = vpop.f32.mrb[0].mxu0
        %1501 = vmatprep.mubr.bf16.mxu0 0
        %1502 = vmatmul.mubr.bf16.gmra.mrb[0].mxu0 %v1402
        %v1503 = vpop.f32.mrb[0].mxu0
        %v1504 = vadd.f32 0.0, %v1503
        %v1505 = vpop.f32.mrb[0].mxu0
        %v1506 = vpop.f32.mrb[0].mxu0
        %v1507 = vadd.f32 0.0, %v1506
        %v1508 = vpop.f32.mrb[0].mxu0
        %1509 = vmatprep.mubr.bf16.mxu0 0
        %1510 = vmatmul.mubr.bf16.gmra.mrb[0].mxu0 %v1405
        %v1511 = vpop.f32.mrb[0].mxu0
        %v1512 = vadd.f32 0.0, %v1511
        %v1513 = vpop.f32.mrb[0].mxu0
        %v1514 = vpop.f32.mrb[0].mxu0
        %v1515 = vadd.f32 0.0, %v1514
        %v1516 = vpop.f32.mrb[0].mxu0
        %1517 = vmatprep.mubr.bf16.mxu0 0
        %1518 = vmatmul.mubr.bf16.gmra.mrb[0].mxu0 %v1408
        %v1519 = vpop.f32.mrb[0].mxu0
        %v1520 = vadd.f32 0.0, %v1519
        %v1521 = vpop.f32.mrb[0].mxu0
        %v1522 = vpop.f32.mrb[0].mxu0
        %v1523 = vadd.f32 0.0, %v1522
        %v1524 = vpop.f32.mrb[0].mxu0
        %1525 = vmatprep.mubr.bf16.mxu0 0
        %1526 = vmatmul.mubr.bf16.gmra.mrb[0].mxu0 %v1411
        %v1527 = vpop.f32.mrb[0].mxu0
        %v1528 = vadd.f32 0.0, %v1527
        %v1529 = vpop.f32.mrb[0].mxu0
        %v1530 = vpop.f32.mrb[0].mxu0
        %v1531 = vadd.f32 0.0, %v1530
        %v1532 = vpop.f32.mrb[0].mxu0
        %1533 = vmatprep.mubr.bf16.mxu0 0
        %1534 = vmatmul.mubr.bf16.gmra.mrb[0].mxu0 %v1414
        %v1535 = vpop.f32.mrb[0].mxu0
        %v1536 = vadd.f32 0.0, %v1535
        %v1537 = vpop.f32.mrb[0].mxu0
        %v1538 = vpop.f32.mrb[0].mxu0
        %v1539 = vadd.f32 0.0, %v1538
        %v1540 = vpop.f32.mrb[0].mxu0
        %1541 = vmatprep.mubr.bf16.mxu0 0
        %1542 = vmatmul.mubr.bf16.gmra.mrb[0].mxu0 %v1417
        %v1543 = vpop.f32.mrb[0].mxu0
        %v1544 = vadd.f32 0.0, %v1543
        %v1545 = vpop.f32.mrb[0].mxu0
        %v1546 = vpop.f32.mrb[0].mxu0
        %v1547 = vadd.f32 0.0, %v1546
        %v1548 = vpop.f32.mrb[0].mxu0
        %1549 = vmatprep.mubr.bf16.mxu0 0
        %1550 = vmatmul.mubr.bf16.gmra.mrb[0].mxu0 %v1420
        %v1551 = vpop.f32.mrb[0].mxu0
        %v1552 = vadd.f32 0.0, %v1551
        %v1553 = vpop.f32.mrb[0].mxu0
        %v1554 = vpop.f32.mrb[0].mxu0
        %v1555 = vadd.f32 0.0, %v1554
        %v1556 = vpop.f32.mrb[0].mxu0
        %1557 = vmatprep.mubr.bf16.mxu0 0
        %1558 = vmatmul.mubr.bf16.gmra.mrb[0].mxu0 %v1423
        %v1559 = vpop.f32.mrb[0].mxu0
        %v1560 = vadd.f32 0.0, %v1559
        %v1561 = vpop.f32.mrb[0].mxu0
        %v1562 = vpop.f32.mrb[0].mxu0
        %v1563 = vadd.f32 0.0, %v1562
        %v1564 = vpop.f32.mrb[0].mxu0
        %1565 = vmatprep.mubr.bf16.mxu0 0
        %1566 = vmatmul.mubr.bf16.gmra.mrb[0].mxu0 %v1426
        %v1567 = vpop.f32.mrb[0].mxu0
        %v1568 = vadd.f32 0.0, %v1567
        %v1569 = vpop.f32.mrb[0].mxu0
        %v1570 = vpop.f32.mrb[0].mxu0
        %v1571 = vadd.f32 0.0, %v1570
        %v1572 = vpop.f32.mrb[0].mxu0
        %1573 = vmatprep.mubr.bf16.mxu0 0
        %1574 = vmatmul.mubr.bf16.gmra.mrb[0].mxu0 %v1429
        %v1575 = vpop.f32.mrb[0].mxu0
        %v1576 = vadd.f32 0.0, %v1575
        %v1577 = vpop.f32.mrb[0].mxu0
        %v1578 = vpop.f32.mrb[0].mxu0
        %v1579 = vadd.f32 0.0, %v1578
        %v1580 = vpop.f32.mrb[0].mxu0
        %1581 = vmatprep.mubr.bf16.mxu0 0
        %1582 = vmatmul.mubr.bf16.gmra.mrb[0].mxu0 %v1432
        %v1583 = vpop.f32.mrb[0].mxu0
        %v1584 = vadd.f32 0.0, %v1583
        %v1585 = vpop.f32.mrb[0].mxu0
        %v1586 = vpop.f32.mrb[0].mxu0
        %v1587 = vadd.f32 0.0, %v1586
        %v1588 = vpop.f32.mrb[0].mxu0
        %1589 = vmatprep.mubr.bf16.mxu0 0
        %1590 = vmatmul.mubr.bf16.gmra.mrb[0].mxu0 %v1435
        %v1591 = vpop.f32.mrb[0].mxu0
        %v1592 = vadd.f32 0.0, %v1591
        %v1593 = vpop.f32.mrb[0].mxu0
        %v1594 = vpop.f32.mrb[0].mxu0
        %v1595 = vadd.f32 0.0, %v1594
        %v1596 = vpop.f32.mrb[0].mxu0
        %1597 = vdwg.mxu0
        %v1606 = vunpack.c.l.b16 %v1140
        %v1607 = vunpack.c.l.b16 %v1141
        %v1608 = vunpack.c.l.b16 %v1142
        %v1609 = vunpack.c.l.b16 %v1143
        %v1610 = vunpack.c.l.b16 %v1144
        %v1611 = vunpack.c.l.b16 %v1145
        %v1612 = vunpack.c.l.b16 %v1146
        %v1613 = vunpack.c.l.b16 %v1147
        %v1614 = vpack.c.b16 %v1607, %v1606
        %v1615 = vpack.c.b16 %v1609, %v1608
        %v1616 = vpack.c.b16 %v1611, %v1610
        %v1617 = vpack.c.b16 %v1613, %v1612
        %v1623 = vsel %vm811, %v1124, 0
        %v1626 = vsel %vm811, %v1125, 0
        %v1629 = vsel %vm811, %v1126, 0
        %v1632 = vsel %vm811, %v1127, 0
        %v1635 = vsel %vm811, %v1128, 0
        %v1638 = vsel %vm811, %v1129, 0
        %v1641 = vsel %vm811, %v1130, 0
        %v1644 = vsel %vm811, %v1131, 0
        %v1647 = vsel %vm811, %v1132, 0
        %v1650 = vsel %vm811, %v1133, 0
        %v1653 = vsel %vm811, %v1134, 0
        %v1656 = vsel %vm811, %v1135, 0
        %v1659 = vsel %vm811, %v1136, 0
        %v1662 = vsel %vm811, %v1137, 0
        %v1665 = vsel %vm811, %v1138, 0
        %v1668 = vsel %vm811, %v1139, 0
        %1670 = vmatprep.subr.bf16.mxu0 0
        %1671 = vmatpush1.bf16.msra.mxu0 %v1614
        %1672 = vmatprep.subr.bf16.mxu0 0
        %1673 = vmatpush1.bf16.msra.mxu0 %v1615
        %1674 = vmatprep.subr.bf16.mxu0 0
        %1675 = vmatpush1.bf16.msra.mxu0 %v1616
        %1676 = vmatprep.subr.bf16.mxu0 0
        %1677 = vmatpush1.bf16.msra.mxu0 %v1617
        %1678 = vmatprep.subr.bf16.mxu0 0
        %1679 = vmatpush1.bf16.msra.mxu0 0
        %1680 = vmatprep.subr.bf16.mxu0 0
        %1681 = vmatpush1.bf16.msra.mxu0 0
        %1682 = vmatprep.subr.bf16.mxu0 0
        %1683 = vmatpush1.bf16.msra.mxu0 0
        %1684 = vmatprep.subr.bf16.mxu0 0
        %1685 = vmatpush1.bf16.msra.mxu0 0
        %1686 = vmatprep.subr.bf16.mxu0 0
        %1687 = vmatpush1.bf16.msra.mxu0 0
        %1688 = vmatprep.subr.bf16.mxu0 0
        %1689 = vmatpush1.bf16.msra.mxu0 0
        %1690 = vmatprep.subr.bf16.mxu0 0
        %1691 = vmatpush1.bf16.msra.mxu0 0
        %1692 = vmatprep.subr.bf16.mxu0 0
        %1693 = vmatpush1.bf16.msra.mxu0 0
        %1694 = vmatprep.subr.bf16.mxu0 0
        %1695 = vmatpush1.bf16.msra.mxu0 0
        %1696 = vmatprep.subr.bf16.mxu0 0
        %1697 = vmatpush1.bf16.msra.mxu0 0
        %1698 = vmatprep.subr.bf16.mxu0 0
        %1699 = vmatpush1.bf16.msra.mxu0 0
        %1700 = vmatprep.subr.bf16.mxu0 0
        %1701 = vmatpush1.bf16.msra.mxu0 0
        %1702 = vmatprep.mubr.bf16.mxu0 0
        %1703 = vmatmul.mubr.bf16.gmra.mrb[0].mxu0 %v1623
        %v1704 = vpop.f32.mrb[0].mxu0
        %v1705 = vadd.f32 %v1472, %v1704
        %v1706 = vpop.f32.mrb[0].mxu0
        %v1707 = vpop.f32.mrb[0].mxu0
        %v1708 = vadd.f32 %v1475, %v1707
        %v1709 = vpop.f32.mrb[0].mxu0
        %1710 = vmatprep.mubr.bf16.mxu0 0
        %1711 = vmatmul.mubr.bf16.gmra.mrb[0].mxu0 %v1626
        %v1712 = vpop.f32.mrb[0].mxu0
        %v1713 = vadd.f32 %v1480, %v1712
        %v1714 = vpop.f32.mrb[0].mxu0
        %v1715 = vpop.f32.mrb[0].mxu0
        %v1716 = vadd.f32 %v1483, %v1715
        %v1717 = vpop.f32.mrb[0].mxu0
        %1718 = vmatprep.mubr.bf16.mxu0 0
        %1719 = vmatmul.mubr.bf16.gmra.mrb[0].mxu0 %v1629
        %v1720 = vpop.f32.mrb[0].mxu0
        %v1721 = vadd.f32 %v1488, %v1720
        %v1722 = vpop.f32.mrb[0].mxu0
        %v1723 = vpop.f32.mrb[0].mxu0
        %v1724 = vadd.f32 %v1491, %v1723
        %v1725 = vpop.f32.mrb[0].mxu0
        %1726 = vmatprep.mubr.bf16.mxu0 0
        %1727 = vmatmul.mubr.bf16.gmra.mrb[0].mxu0 %v1632
        %v1728 = vpop.f32.mrb[0].mxu0
        %v1729 = vadd.f32 %v1496, %v1728
        %v1730 = vpop.f32.mrb[0].mxu0
        %v1731 = vpop.f32.mrb[0].mxu0
        %v1732 = vadd.f32 %v1499, %v1731
        %v1733 = vpop.f32.mrb[0].mxu0
        %1734 = vmatprep.mubr.bf16.mxu0 0
        %1735 = vmatmul.mubr.bf16.gmra.mrb[0].mxu0 %v1635
        %v1736 = vpop.f32.mrb[0].mxu0
        %v1737 = vadd.f32 %v1504, %v1736
        %v1738 = vpop.f32.mrb[0].mxu0
        %v1739 = vpop.f32.mrb[0].mxu0
        %v1740 = vadd.f32 %v1507, %v1739
        %v1741 = vpop.f32.mrb[0].mxu0
        %1742 = vmatprep.mubr.bf16.mxu0 0
        %1743 = vmatmul.mubr.bf16.gmra.mrb[0].mxu0 %v1638
        %v1744 = vpop.f32.mrb[0].mxu0
        %v1745 = vadd.f32 %v1512, %v1744
        %v1746 = vpop.f32.mrb[0].mxu0
        %v1747 = vpop.f32.mrb[0].mxu0
        %v1748 = vadd.f32 %v1515, %v1747
        %v1749 = vpop.f32.mrb[0].mxu0
        %1750 = vmatprep.mubr.bf16.mxu0 0
        %1751 = vmatmul.mubr.bf16.gmra.mrb[0].mxu0 %v1641
        %v1752 = vpop.f32.mrb[0].mxu0
        %v1753 = vadd.f32 %v1520, %v1752
        %v1754 = vpop.f32.mrb[0].mxu0
        %v1755 = vpop.f32.mrb[0].mxu0
        %v1756 = vadd.f32 %v1523, %v1755
        %v1757 = vpop.f32.mrb[0].mxu0
        %1758 = vmatprep.mubr.bf16.mxu0 0
        %1759 = vmatmul.mubr.bf16.gmra.mrb[0].mxu0 %v1644
        %v1760 = vpop.f32.mrb[0].mxu0
        %v1761 = vadd.f32 %v1528, %v1760
        %v1762 = vpop.f32.mrb[0].mxu0
        %v1763 = vpop.f32.mrb[0].mxu0
        %v1764 = vadd.f32 %v1531, %v1763
        %v1765 = vpop.f32.mrb[0].mxu0
        %1766 = vmatprep.mubr.bf16.mxu0 0
        %1767 = vmatmul.mubr.bf16.gmra.mrb[0].mxu0 %v1647
        %v1768 = vpop.f32.mrb[0].mxu0
        %v1769 = vadd.f32 %v1536, %v1768
        %v1770 = vpop.f32.mrb[0].mxu0
        %v1771 = vpop.f32.mrb[0].mxu0
        %v1772 = vadd.f32 %v1539, %v1771
        %v1773 = vpop.f32.mrb[0].mxu0
        %1774 = vmatprep.mubr.bf16.mxu0 0
        %1775 = vmatmul.mubr.bf16.gmra.mrb[0].mxu0 %v1650
        %v1776 = vpop.f32.mrb[0].mxu0
        %v1777 = vadd.f32 %v1544, %v1776
        %v1778 = vpop.f32.mrb[0].mxu0
        %v1779 = vpop.f32.mrb[0].mxu0
        %v1780 = vadd.f32 %v1547, %v1779
        %v1781 = vpop.f32.mrb[0].mxu0
        %1782 = vmatprep.mubr.bf16.mxu0 0
        %1783 = vmatmul.mubr.bf16.gmra.mrb[0].mxu0 %v1653
        %v1784 = vpop.f32.mrb[0].mxu0
        %v1785 = vadd.f32 %v1552, %v1784
        %v1786 = vpop.f32.mrb[0].mxu0
        %v1787 = vpop.f32.mrb[0].mxu0
        %v1788 = vadd.f32 %v1555, %v1787
        %v1789 = vpop.f32.mrb[0].mxu0
        %1790 = vmatprep.mubr.bf16.mxu0 0
        %1791 = vmatmul.mubr.bf16.gmra.mrb[0].mxu0 %v1656
        %v1792 = vpop.f32.mrb[0].mxu0
        %v1793 = vadd.f32 %v1560, %v1792
        %v1794 = vpop.f32.mrb[0].mxu0
        %v1795 = vpop.f32.mrb[0].mxu0
        %v1796 = vadd.f32 %v1563, %v1795
        %v1797 = vpop.f32.mrb[0].mxu0
        %1798 = vmatprep.mubr.bf16.mxu0 0
        %1799 = vmatmul.mubr.bf16.gmra.mrb[0].mxu0 %v1659
        %v1800 = vpop.f32.mrb[0].mxu0
        %v1801 = vadd.f32 %v1568, %v1800
        %v1802 = vpop.f32.mrb[0].mxu0
        %v1803 = vpop.f32.mrb[0].mxu0
        %v1804 = vadd.f32 %v1571, %v1803
        %v1805 = vpop.f32.mrb[0].mxu0
        %1806 = vmatprep.mubr.bf16.mxu0 0
        %1807 = vmatmul.mubr.bf16.gmra.mrb[0].mxu0 %v1662
        %v1808 = vpop.f32.mrb[0].mxu0
        %v1809 = vadd.f32 %v1576, %v1808
        %v1810 = vpop.f32.mrb[0].mxu0
        %v1811 = vpop.f32.mrb[0].mxu0
        %v1812 = vadd.f32 %v1579, %v1811
        %v1813 = vpop.f32.mrb[0].mxu0
        %1814 = vmatprep.mubr.bf16.mxu0 0
        %1815 = vmatmul.mubr.bf16.gmra.mrb[0].mxu0 %v1665
        %v1816 = vpop.f32.mrb[0].mxu0
        %v1817 = vadd.f32 %v1584, %v1816
        %v1818 = vpop.f32.mrb[0].mxu0
        %v1819 = vpop.f32.mrb[0].mxu0
        %v1820 = vadd.f32 %v1587, %v1819
        %v1821 = vpop.f32.mrb[0].mxu0
        %1822 = vmatprep.mubr.bf16.mxu0 0
        %1823 = vmatmul.mubr.bf16.gmra.mrb[0].mxu0 %v1668
        %v1824 = vpop.f32.mrb[0].mxu0
        %v1825 = vadd.f32 %v1592, %v1824
        %v1826 = vpop.f32.mrb[0].mxu0
        %v1827 = vpop.f32.mrb[0].mxu0
        %v1828 = vadd.f32 %v1595, %v1827
        %v1829 = vpop.f32.mrb[0].mxu0
        %1830 = vdwg.mxu0
        %v1831 = vld [vmem:[#allocation2 + $0x11] sm:$0xff]
        %v1832 = vld [vmem:[#allocation2 + $0x19] sm:$0xff]
        %v1833 = vld [vmem:[#allocation2 + $0x21] sm:$0xff]
        %v1834 = vld [vmem:[#allocation2 + $0x29] sm:$0xff]
        %v1835 = vld [vmem:[#allocation2 + $0x31] sm:$0xff]
        %v1836 = vld [vmem:[#allocation2 + $0x39] sm:$0xff]
        %v1837 = vld [vmem:[#allocation2 + $0x41] sm:$0xff]
        %v1838 = vld [vmem:[#allocation2 + $0x49] sm:$0xff]
        %v1839 = vld [vmem:[#allocation2 + $0x51] sm:$0xff]
        %v1840 = vld [vmem:[#allocation2 + $0x59] sm:$0xff]
        %v1841 = vld [vmem:[#allocation2 + $0x61] sm:$0xff]
        %v1842 = vld [vmem:[#allocation2 + $0x69] sm:$0xff]
        %v1843 = vld [vmem:[#allocation2 + $0x71] sm:$0xff]
        %v1844 = vld [vmem:[#allocation2 + $0x79] sm:$0xff]
        %v1845 = vld [vmem:[#allocation2 + $0x81] sm:$0xff]
        %v1846 = vld [vmem:[#allocation2 + $0x89] sm:$0xff]
        %v1847 = vld [vmem:[#allocation2 + $0x91] sm:$0xff]
        %v1848 = vld [vmem:[#allocation2 + $0x99] sm:$0xff]
        %v1849 = vld [vmem:[#allocation2 + $0xa1] sm:$0xff]
        %v1850 = vld [vmem:[#allocation2 + $0xa9] sm:$0xff]
        %v1851 = vld [vmem:[#allocation2 + $0xb1] sm:$0xff]
        %v1852 = vld [vmem:[#allocation2 + $0xb9] sm:$0xff]
        %v1853 = vld [vmem:[#allocation2 + $0xc1] sm:$0xff]
        %v1854 = vld [vmem:[#allocation2 + $0xc9] sm:$0xff]
        %v1855 = vld [vmem:[#allocation2 + $0xd1] sm:$0xff]
        %v1856 = vld [vmem:[#allocation2 + $0xd9] sm:$0xff]
        %v1857 = vld [vmem:[#allocation2 + $0xe1] sm:$0xff]
        %v1858 = vld [vmem:[#allocation2 + $0xe9] sm:$0xff]
        %v1859 = vld [vmem:[#allocation2 + $0xf1] sm:$0xff]
        %v1860 = vld [vmem:[#allocation2 + $0xf9] sm:$0xff]
        %v1861 = vld [vmem:[#allocation2 + $0x101] sm:$0xff]
        %v1862 = vld [vmem:[#allocation2 + $0x109] sm:$0xff]
        %1863 = vset.pattern.permute.xlu0 2
        %1864 = vperm.xlu0 %1863, %v852
        %v1865 = vpop.permute.xlu0 %1864
        %1867 = vset.pattern.permute.xlu0 2
        %1868 = vperm.xlu0 %1867, %v853
        %v1869 = vpop.permute.xlu0 %1868
        %1871 = vset.pattern.permute.xlu0 2
        %1872 = vperm.xlu0 %1871, %v854
        %v1873 = vpop.permute.xlu0 %1872
        %1875 = vset.pattern.permute.xlu0 2
        %1876 = vperm.xlu0 %1875, %v855
        %v1877 = vpop.permute.xlu0 %1876
        %1879 = vset.pattern.permute.xlu0 2
        %1880 = vperm.xlu0 %1879, %v856
        %v1881 = vpop.permute.xlu0 %1880
        %1883 = vset.pattern.permute.xlu0 2
        %1884 = vperm.xlu0 %1883, %v857
        %v1885 = vpop.permute.xlu0 %1884
        %1887 = vset.pattern.permute.xlu0 2
        %1888 = vperm.xlu0 %1887, %v858
        %v1889 = vpop.permute.xlu0 %1888
        %1891 = vset.pattern.permute.xlu0 2
        %1892 = vperm.xlu0 %1891, %v859
        %v1893 = vpop.permute.xlu0 %1892
        %1895 = vset.pattern.permute.xlu0 2
        %1896 = vperm.xlu0 %1895, %v860
        %v1897 = vpop.permute.xlu0 %1896
        %1899 = vset.pattern.permute.xlu0 2
        %1900 = vperm.xlu0 %1899, %v861
        %v1901 = vpop.permute.xlu0 %1900
        %1903 = vset.pattern.permute.xlu0 2
        %1904 = vperm.xlu0 %1903, %v862
        %v1905 = vpop.permute.xlu0 %1904
        %1907 = vset.pattern.permute.xlu0 2
        %1908 = vperm.xlu0 %1907, %v863
        %v1909 = vpop.permute.xlu0 %1908
        %1911 = vset.pattern.permute.xlu0 2
        %1912 = vperm.xlu0 %1911, %v864
        %v1913 = vpop.permute.xlu0 %1912
        %1915 = vset.pattern.permute.xlu0 2
        %1916 = vperm.xlu0 %1915, %v865
        %v1917 = vpop.permute.xlu0 %1916
        %1919 = vset.pattern.permute.xlu0 2
        %1920 = vperm.xlu0 %1919, %v866
        %v1921 = vpop.permute.xlu0 %1920
        %1923 = vset.pattern.permute.xlu0 2
        %1924 = vperm.xlu0 %1923, %v867
        %v1925 = vpop.permute.xlu0 %1924
        %1927 = vset.pattern.permute.xlu0 2
        %1928 = vperm.xlu0 %1927, %v868
        %v1929 = vpop.permute.xlu0 %1928
        %1931 = vset.pattern.permute.xlu0 2
        %1932 = vperm.xlu0 %1931, %v869
        %v1933 = vpop.permute.xlu0 %1932
        %1935 = vset.pattern.permute.xlu0 2
        %1936 = vperm.xlu0 %1935, %v870
        %v1937 = vpop.permute.xlu0 %1936
        %1939 = vset.pattern.permute.xlu0 2
        %1940 = vperm.xlu0 %1939, %v871
        %v1941 = vpop.permute.xlu0 %1940
        %1943 = vset.pattern.permute.xlu0 2
        %1944 = vperm.xlu0 %1943, %v872
        %v1945 = vpop.permute.xlu0 %1944
        %1947 = vset.pattern.permute.xlu0 2
        %1948 = vperm.xlu0 %1947, %v873
        %v1949 = vpop.permute.xlu0 %1948
        %1951 = vset.pattern.permute.xlu0 2
        %1952 = vperm.xlu0 %1951, %v874
        %v1953 = vpop.permute.xlu0 %1952
        %1955 = vset.pattern.permute.xlu0 2
        %1956 = vperm.xlu0 %1955, %v875
        %v1957 = vpop.permute.xlu0 %1956
        %1959 = vset.pattern.permute.xlu0 2
        %1960 = vperm.xlu0 %1959, %v876
        %v1961 = vpop.permute.xlu0 %1960
        %1963 = vset.pattern.permute.xlu0 2
        %1964 = vperm.xlu0 %1963, %v877
        %v1965 = vpop.permute.xlu0 %1964
        %1967 = vset.pattern.permute.xlu0 2
        %1968 = vperm.xlu0 %1967, %v878
        %v1969 = vpop.permute.xlu0 %1968
        %1971 = vset.pattern.permute.xlu0 2
        %1972 = vperm.xlu0 %1971, %v879
        %v1973 = vpop.permute.xlu0 %1972
        %1975 = vset.pattern.permute.xlu0 2
        %1976 = vperm.xlu0 %1975, %v880
        %v1977 = vpop.permute.xlu0 %1976
        %1979 = vset.pattern.permute.xlu0 2
        %1980 = vperm.xlu0 %1979, %v881
        %v1981 = vpop.permute.xlu0 %1980
        %1983 = vset.pattern.permute.xlu0 2
        %1984 = vperm.xlu0 %1983, %v882
        %v1985 = vpop.permute.xlu0 %1984
        %1987 = vset.pattern.permute.xlu0 2
        %1988 = vperm.xlu0 %1987, %v883
        %v1989 = vpop.permute.xlu0 %1988
        %v1991 = vmul.f32 %v1831, %v1865
        %v1992 = vmul.f32 %v1832, %v1869
        %v1993 = vmul.f32 %v1833, %v1873
        %v1994 = vmul.f32 %v1834, %v1877
        %v1995 = vmul.f32 %v1835, %v1881
        %v1996 = vmul.f32 %v1836, %v1885
        %v1997 = vmul.f32 %v1837, %v1889
        %v1998 = vmul.f32 %v1838, %v1893
        %v1999 = vmul.f32 %v1839, %v1897
        %v2000 = vmul.f32 %v1840, %v1901
        %v2001 = vmul.f32 %v1841, %v1905
        %v2002 = vmul.f32 %v1842, %v1909
        %v2003 = vmul.f32 %v1843, %v1913
        %v2004 = vmul.f32 %v1844, %v1917
        %v2005 = vmul.f32 %v1845, %v1921
        %v2006 = vmul.f32 %v1846, %v1925
        %v2007 = vmul.f32 %v1847, %v1929
        %v2008 = vmul.f32 %v1848, %v1933
        %v2009 = vmul.f32 %v1849, %v1937
        %v2010 = vmul.f32 %v1850, %v1941
        %v2011 = vmul.f32 %v1851, %v1945
        %v2012 = vmul.f32 %v1852, %v1949
        %v2013 = vmul.f32 %v1853, %v1953
        %v2014 = vmul.f32 %v1854, %v1957
        %v2015 = vmul.f32 %v1855, %v1961
        %v2016 = vmul.f32 %v1856, %v1965
        %v2017 = vmul.f32 %v1857, %v1969
        %v2018 = vmul.f32 %v1858, %v1973
        %v2019 = vmul.f32 %v1859, %v1977
        %v2020 = vmul.f32 %v1860, %v1981
        %v2021 = vmul.f32 %v1861, %v1985
        %v2022 = vmul.f32 %v1862, %v1989
        %v2023 = vpack.c.bf16 %v1992, %v1991
        %v2024 = vpack.c.bf16 %v1994, %v1993
        %v2025 = vpack.c.bf16 %v1996, %v1995
        %v2026 = vpack.c.bf16 %v1998, %v1997
        %v2027 = vpack.c.bf16 %v2000, %v1999
        %v2028 = vpack.c.bf16 %v2002, %v2001
        %v2029 = vpack.c.bf16 %v2004, %v2003
        %v2030 = vpack.c.bf16 %v2006, %v2005
        %v2031 = vpack.c.bf16 %v2008, %v2007
        %v2032 = vpack.c.bf16 %v2010, %v2009
        %v2033 = vpack.c.bf16 %v2012, %v2011
        %v2034 = vpack.c.bf16 %v2014, %v2013
        %v2035 = vpack.c.bf16 %v2016, %v2015
        %v2036 = vpack.c.bf16 %v2018, %v2017
        %v2037 = vpack.c.bf16 %v2020, %v2019
        %v2038 = vpack.c.bf16 %v2022, %v2021
        %s2039 = scalar_lea.vmem %s4, 64
        %v2040 = vld [vmem:[%s2039] sm:$0xf]
        %v2041 = vld [vmem:[%s2039 + $0x4] sm:$0xf]
        %v2042 = vld [vmem:[%s2039 + $0x8] sm:$0xf]
        %v2043 = vld [vmem:[%s2039 + $0xc] sm:$0xf]
        %v2044 = vld [vmem:[%s2039 + $0x10] sm:$0xf]
        %v2045 = vld [vmem:[%s2039 + $0x14] sm:$0xf]
        %v2046 = vld [vmem:[%s2039 + $0x18] sm:$0xf]
        %v2047 = vld [vmem:[%s2039 + $0x1c] sm:$0xf]
        %v2056 = vunpack.c.l.b16 %v2040
        %v2057 = vunpack.c.l.b16 %v2041
        %v2058 = vunpack.c.l.b16 %v2042
        %v2059 = vunpack.c.l.b16 %v2043
        %v2060 = vunpack.c.l.b16 %v2044
        %v2061 = vunpack.c.l.b16 %v2045
        %v2062 = vunpack.c.l.b16 %v2046
        %v2063 = vunpack.c.l.b16 %v2047
        %v2064 = vpack.c.b16 %v2057, %v2056
        %v2065 = vpack.c.b16 %v2059, %v2058
        %v2066 = vpack.c.b16 %v2061, %v2060
        %v2067 = vpack.c.b16 %v2063, %v2062
        %v2073 = vsel %vm811, %v2023, 0
        %v2076 = vsel %vm811, %v2024, 0
        %v2079 = vsel %vm811, %v2025, 0
        %v2082 = vsel %vm811, %v2026, 0
        %v2085 = vsel %vm811, %v2027, 0
        %v2088 = vsel %vm811, %v2028, 0
        %v2091 = vsel %vm811, %v2029, 0
        %v2094 = vsel %vm811, %v2030, 0
        %v2097 = vsel %vm811, %v2031, 0
        %v2100 = vsel %vm811, %v2032, 0
        %v2103 = vsel %vm811, %v2033, 0
        %v2106 = vsel %vm811, %v2034, 0
        %v2109 = vsel %vm811, %v2035, 0
        %v2112 = vsel %vm811, %v2036, 0
        %v2115 = vsel %vm811, %v2037, 0
        %v2118 = vsel %vm811, %v2038, 0
        %2120 = vmatprep.subr.bf16.mxu0 0
        %2121 = vmatpush1.bf16.msra.mxu0 %v2064
        %2122 = vmatprep.subr.bf16.mxu0 0
        %2123 = vmatpush1.bf16.msra.mxu0 %v2065
        %2124 = vmatprep.subr.bf16.mxu0 0
        %2125 = vmatpush1.bf16.msra.mxu0 %v2066
        %2126 = vmatprep.subr.bf16.mxu0 0
        %2127 = vmatpush1.bf16.msra.mxu0 %v2067
        %2128 = vmatprep.subr.bf16.mxu0 0
        %2129 = vmatpush1.bf16.msra.mxu0 0
        %2130 = vmatprep.subr.bf16.mxu0 0
        %2131 = vmatpush1.bf16.msra.mxu0 0
        %2132 = vmatprep.subr.bf16.mxu0 0
        %2133 = vmatpush1.bf16.msra.mxu0 0
        %2134 = vmatprep.subr.bf16.mxu0 0
        %2135 = vmatpush1.bf16.msra.mxu0 0
        %2136 = vmatprep.subr.bf16.mxu0 0
        %2137 = vmatpush1.bf16.msra.mxu0 0
        %2138 = vmatprep.subr.bf16.mxu0 0
        %2139 = vmatpush1.bf16.msra.mxu0 0
        %2140 = vmatprep.subr.bf16.mxu0 0
        %2141 = vmatpush1.bf16.msra.mxu0 0
        %2142 = vmatprep.subr.bf16.mxu0 0
        %2143 = vmatpush1.bf16.msra.mxu0 0
        %2144 = vmatprep.subr.bf16.mxu0 0
        %2145 = vmatpush1.bf16.msra.mxu0 0
        %2146 = vmatprep.subr.bf16.mxu0 0
        %2147 = vmatpush1.bf16.msra.mxu0 0
        %2148 = vmatprep.subr.bf16.mxu0 0
        %2149 = vmatpush1.bf16.msra.mxu0 0
        %2150 = vmatprep.subr.bf16.mxu0 0
        %2151 = vmatpush1.bf16.msra.mxu0 0
        %2152 = vmatprep.mubr.bf16.mxu0 0
        %2153 = vmatmul.mubr.bf16.gmra.mrb[0].mxu0 %v2073
        %v2154 = vpop.f32.mrb[0].mxu0
        %v2155 = vadd.f32 0.0, %v2154
        %v2156 = vpop.f32.mrb[0].mxu0
        %v2157 = vpop.f32.mrb[0].mxu0
        %v2158 = vadd.f32 0.0, %v2157
        %v2159 = vpop.f32.mrb[0].mxu0
        %2160 = vmatprep.mubr.bf16.mxu0 0
        %2161 = vmatmul.mubr.bf16.gmra.mrb[0].mxu0 %v2076
        %v2162 = vpop.f32.mrb[0].mxu0
        %v2163 = vadd.f32 0.0, %v2162
        %v2164 = vpop.f32.mrb[0].mxu0
        %v2165 = vpop.f32.mrb[0].mxu0
        %v2166 = vadd.f32 0.0, %v2165
        %v2167 = vpop.f32.mrb[0].mxu0
        %2168 = vmatprep.mubr.bf16.mxu0 0
        %2169 = vmatmul.mubr.bf16.gmra.mrb[0].mxu0 %v2079
        %v2170 = vpop.f32.mrb[0].mxu0
        %v2171 = vadd.f32 0.0, %v2170
        %v2172 = vpop.f32.mrb[0].mxu0
        %v2173 = vpop.f32.mrb[0].mxu0
        %v2174 = vadd.f32 0.0, %v2173
        %v2175 = vpop.f32.mrb[0].mxu0
        %2176 = vmatprep.mubr.bf16.mxu0 0
        %2177 = vmatmul.mubr.bf16.gmra.mrb[0].mxu0 %v2082
        %v2178 = vpop.f32.mrb[0].mxu0
        %v2179 = vadd.f32 0.0, %v2178
        %v2180 = vpop.f32.mrb[0].mxu0
        %v2181 = vpop.f32.mrb[0].mxu0
        %v2182 = vadd.f32 0.0, %v2181
        %v2183 = vpop.f32.mrb[0].mxu0
        %2184 = vmatprep.mubr.bf16.mxu0 0
        %2185 = vmatmul.mubr.bf16.gmra.mrb[0].mxu0 %v2085
        %v2186 = vpop.f32.mrb[0].mxu0
        %v2187 = vadd.f32 0.0, %v2186
        %v2188 = vpop.f32.mrb[0].mxu0
        %v2189 = vpop.f32.mrb[0].mxu0
        %v2190 = vadd.f32 0.0, %v2189
        %v2191 = vpop.f32.mrb[0].mxu0
        %2192 = vmatprep.mubr.bf16.mxu0 0
        %2193 = vmatmul.mubr.bf16.gmra.mrb[0].mxu0 %v2088
        %v2194 = vpop.f32.mrb[0].mxu0
        %v2195 = vadd.f32 0.0, %v2194
        %v2196 = vpop.f32.mrb[0].mxu0
        %v2197 = vpop.f32.mrb[0].mxu0
        %v2198 = vadd.f32 0.0, %v2197
        %v2199 = vpop.f32.mrb[0].mxu0
        %2200 = vmatprep.mubr.bf16.mxu0 0
        %2201 = vmatmul.mubr.bf16.gmra.mrb[0].mxu0 %v2091
        %v2202 = vpop.f32.mrb[0].mxu0
        %v2203 = vadd.f32 0.0, %v2202
        %v2204 = vpop.f32.mrb[0].mxu0
        %v2205 = vpop.f32.mrb[0].mxu0
        %v2206 = vadd.f32 0.0, %v2205
        %v2207 = vpop.f32.mrb[0].mxu0
        %2208 = vmatprep.mubr.bf16.mxu0 0
        %2209 = vmatmul.mubr.bf16.gmra.mrb[0].mxu0 %v2094
        %v2210 = vpop.f32.mrb[0].mxu0
        %v2211 = vadd.f32 0.0, %v2210
        %v2212 = vpop.f32.mrb[0].mxu0
        %v2213 = vpop.f32.mrb[0].mxu0
        %v2214 = vadd.f32 0.0, %v2213
        %v2215 = vpop.f32.mrb[0].mxu0
        %2216 = vmatprep.mubr.bf16.mxu0 0
        %2217 = vmatmul.mubr.bf16.gmra.mrb[0].mxu0 %v2097
        %v2218 = vpop.f32.mrb[0].mxu0
        %v2219 = vadd.f32 0.0, %v2218
        %v2220 = vpop.f32.mrb[0].mxu0
        %v2221 = vpop.f32.mrb[0].mxu0
        %v2222 = vadd.f32 0.0, %v2221
        %v2223 = vpop.f32.mrb[0].mxu0
        %2224 = vmatprep.mubr.bf16.mxu0 0
        %2225 = vmatmul.mubr.bf16.gmra.mrb[0].mxu0 %v2100
        %v2226 = vpop.f32.mrb[0].mxu0
        %v2227 = vadd.f32 0.0, %v2226
        %v2228 = vpop.f32.mrb[0].mxu0
        %v2229 = vpop.f32.mrb[0].mxu0
        %v2230 = vadd.f32 0.0, %v2229
        %v2231 = vpop.f32.mrb[0].mxu0
        %2232 = vmatprep.mubr.bf16.mxu0 0
        %2233 = vmatmul.mubr.bf16.gmra.mrb[0].mxu0 %v2103
        %v2234 = vpop.f32.mrb[0].mxu0
        %v2235 = vadd.f32 0.0, %v2234
        %v2236 = vpop.f32.mrb[0].mxu0
        %v2237 = vpop.f32.mrb[0].mxu0
        %v2238 = vadd.f32 0.0, %v2237
        %v2239 = vpop.f32.mrb[0].mxu0
        %2240 = vmatprep.mubr.bf16.mxu0 0
        %2241 = vmatmul.mubr.bf16.gmra.mrb[0].mxu0 %v2106
        %v2242 = vpop.f32.mrb[0].mxu0
        %v2243 = vadd.f32 0.0, %v2242
        %v2244 = vpop.f32.mrb[0].mxu0
        %v2245 = vpop.f32.mrb[0].mxu0
        %v2246 = vadd.f32 0.0, %v2245
        %v2247 = vpop.f32.mrb[0].mxu0
        %2248 = vmatprep.mubr.bf16.mxu0 0
        %2249 = vmatmul.mubr.bf16.gmra.mrb[0].mxu0 %v2109
        %v2250 = vpop.f32.mrb[0].mxu0
        %v2251 = vadd.f32 0.0, %v2250
        %v2252 = vpop.f32.mrb[0].mxu0
        %v2253 = vpop.f32.mrb[0].mxu0
        %v2254 = vadd.f32 0.0, %v2253
        %v2255 = vpop.f32.mrb[0].mxu0
        %2256 = vmatprep.mubr.bf16.mxu0 0
        %2257 = vmatmul.mubr.bf16.gmra.mrb[0].mxu0 %v2112
        %v2258 = vpop.f32.mrb[0].mxu0
        %v2259 = vadd.f32 0.0, %v2258
        %v2260 = vpop.f32.mrb[0].mxu0
        %v2261 = vpop.f32.mrb[0].mxu0
        %v2262 = vadd.f32 0.0, %v2261
        %v2263 = vpop.f32.mrb[0].mxu0
        %2264 = vmatprep.mubr.bf16.mxu0 0
        %2265 = vmatmul.mubr.bf16.gmra.mrb[0].mxu0 %v2115
        %v2266 = vpop.f32.mrb[0].mxu0
        %v2267 = vadd.f32 0.0, %v2266
        %v2268 = vpop.f32.mrb[0].mxu0
        %v2269 = vpop.f32.mrb[0].mxu0
        %v2270 = vadd.f32 0.0, %v2269
        %v2271 = vpop.f32.mrb[0].mxu0
        %2272 = vmatprep.mubr.bf16.mxu0 0
        %2273 = vmatmul.mubr.bf16.gmra.mrb[0].mxu0 %v2118
        %v2274 = vpop.f32.mrb[0].mxu0
        %v2275 = vadd.f32 0.0, %v2274
        %v2276 = vpop.f32.mrb[0].mxu0
        %v2277 = vpop.f32.mrb[0].mxu0
        %v2278 = vadd.f32 0.0, %v2277
        %v2279 = vpop.f32.mrb[0].mxu0
        %2280 = vdwg.mxu0
        %v2281 = vadd.f32 %v1705, %v2155
        %v2282 = vadd.f32 %v1708, %v2158
        %v2283 = vadd.f32 %v1713, %v2163
        %v2284 = vadd.f32 %v1716, %v2166
        %v2285 = vadd.f32 %v1721, %v2171
        %v2286 = vadd.f32 %v1724, %v2174
        %v2287 = vadd.f32 %v1729, %v2179
        %v2288 = vadd.f32 %v1732, %v2182
        %v2289 = vadd.f32 %v1737, %v2187
        %v2290 = vadd.f32 %v1740, %v2190
        %v2291 = vadd.f32 %v1745, %v2195
        %v2292 = vadd.f32 %v1748, %v2198
        %v2293 = vadd.f32 %v1753, %v2203
        %v2294 = vadd.f32 %v1756, %v2206
        %v2295 = vadd.f32 %v1761, %v2211
        %v2296 = vadd.f32 %v1764, %v2214
        %v2297 = vadd.f32 %v1769, %v2219
        %v2298 = vadd.f32 %v1772, %v2222
        %v2299 = vadd.f32 %v1777, %v2227
        %v2300 = vadd.f32 %v1780, %v2230
        %v2301 = vadd.f32 %v1785, %v2235
        %v2302 = vadd.f32 %v1788, %v2238
        %v2303 = vadd.f32 %v1793, %v2243
        %v2304 = vadd.f32 %v1796, %v2246
        %v2305 = vadd.f32 %v1801, %v2251
        %v2306 = vadd.f32 %v1804, %v2254
        %v2307 = vadd.f32 %v1809, %v2259
        %v2308 = vadd.f32 %v1812, %v2262
        %v2309 = vadd.f32 %v1817, %v2267
        %v2310 = vadd.f32 %v1820, %v2270
        %v2311 = vadd.f32 %v1825, %v2275
        %v2312 = vadd.f32 %v1828, %v2278
        %v2313 = vld [vmem:[#allocation2 + $0x1f] sm:$0xff]
        %v2314 = vld [vmem:[#allocation2 + $0x27] sm:$0xff]
        %v2315 = vld [vmem:[#allocation2 + $0x2f] sm:$0xff]
        %v2316 = vld [vmem:[#allocation2 + $0x37] sm:$0xff]
        %v2317 = vld [vmem:[#allocation2 + $0x3f] sm:$0xff]
        %v2318 = vld [vmem:[#allocation2 + $0x47] sm:$0xff]
        %v2319 = vld [vmem:[#allocation2 + $0x4f] sm:$0xff]
        %v2320 = vld [vmem:[#allocation2 + $0x57] sm:$0xff]
        %v2321 = vld [vmem:[#allocation2 + $0x5f] sm:$0xff]
        %v2322 = vld [vmem:[#allocation2 + $0x67] sm:$0xff]
        %v2323 = vld [vmem:[#allocation2 + $0x6f] sm:$0xff]
        %v2324 = vld [vmem:[#allocation2 + $0x77] sm:$0xff]
        %v2325 = vld [vmem:[#allocation2 + $0x7f] sm:$0xff]
        %v2326 = vld [vmem:[#allocation2 + $0x87] sm:$0xff]
        %v2327 = vld [vmem:[#allocation2 + $0x8f] sm:$0xff]
        %v2328 = vld [vmem:[#allocation2 + $0x97] sm:$0xff]
        %v2329 = vld [vmem:[#allocation2 + $0x9f] sm:$0xff]
        %v2330 = vld [vmem:[#allocation2 + $0xa7] sm:$0xff]
        %v2331 = vld [vmem:[#allocation2 + $0xaf] sm:$0xff]
        %v2332 = vld [vmem:[#allocation2 + $0xb7] sm:$0xff]
        %v2333 = vld [vmem:[#allocation2 + $0xbf] sm:$0xff]
        %v2334 = vld [vmem:[#allocation2 + $0xc7] sm:$0xff]
        %v2335 = vld [vmem:[#allocation2 + $0xcf] sm:$0xff]
        %v2336 = vld [vmem:[#allocation2 + $0xd7] sm:$0xff]
        %v2337 = vld [vmem:[#allocation2 + $0xdf] sm:$0xff]
        %v2338 = vld [vmem:[#allocation2 + $0xe7] sm:$0xff]
        %v2339 = vld [vmem:[#allocation2 + $0xef] sm:$0xff]
        %v2340 = vld [vmem:[#allocation2 + $0xf7] sm:$0xff]
        %v2341 = vld [vmem:[#allocation2 + $0xff] sm:$0xff]
        %v2342 = vld [vmem:[#allocation2 + $0x107] sm:$0xff]
        %v2343 = vld [vmem:[#allocation2 + $0x10f] sm:$0xff]
        %v2344 = vld [vmem:[#allocation2 + $0x117] sm:$0xff]
        %2345 = vset.pattern.permute.xlu0 3
        %2346 = vperm.xlu0 %2345, %v852
        %v2347 = vpop.permute.xlu0 %2346
        %2349 = vset.pattern.permute.xlu0 3
        %2350 = vperm.xlu0 %2349, %v853
        %v2351 = vpop.permute.xlu0 %2350
        %2353 = vset.pattern.permute.xlu0 3
        %2354 = vperm.xlu0 %2353, %v854
        %v2355 = vpop.permute.xlu0 %2354
        %2357 = vset.pattern.permute.xlu0 3
        %2358 = vperm.xlu0 %2357, %v855
        %v2359 = vpop.permute.xlu0 %2358
        %2361 = vset.pattern.permute.xlu0 3
        %2362 = vperm.xlu0 %2361, %v856
        %v2363 = vpop.permute.xlu0 %2362
        %2365 = vset.pattern.permute.xlu0 3
        %2366 = vperm.xlu0 %2365, %v857
        %v2367 = vpop.permute.xlu0 %2366
        %2369 = vset.pattern.permute.xlu0 3
        %2370 = vperm.xlu0 %2369, %v858
        %v2371 = vpop.permute.xlu0 %2370
        %2373 = vset.pattern.permute.xlu0 3
        %2374 = vperm.xlu0 %2373, %v859
        %v2375 = vpop.permute.xlu0 %2374
        %2377 = vset.pattern.permute.xlu0 3
        %2378 = vperm.xlu0 %2377, %v860
        %v2379 = vpop.permute.xlu0 %2378
        %2381 = vset.pattern.permute.xlu0 3
        %2382 = vperm.xlu0 %2381, %v861
        %v2383 = vpop.permute.xlu0 %2382
        %2385 = vset.pattern.permute.xlu0 3
        %2386 = vperm.xlu0 %2385, %v862
        %v2387 = vpop.permute.xlu0 %2386
        %2389 = vset.pattern.permute.xlu0 3
        %2390 = vperm.xlu0 %2389, %v863
        %v2391 = vpop.permute.xlu0 %2390
        %2393 = vset.pattern.permute.xlu0 3
        %2394 = vperm.xlu0 %2393, %v864
        %v2395 = vpop.permute.xlu0 %2394
        %2397 = vset.pattern.permute.xlu0 3
        %2398 = vperm.xlu0 %2397, %v865
        %v2399 = vpop.permute.xlu0 %2398
        %2401 = vset.pattern.permute.xlu0 3
        %2402 = vperm.xlu0 %2401, %v866
        %v2403 = vpop.permute.xlu0 %2402
        %2405 = vset.pattern.permute.xlu0 3
        %2406 = vperm.xlu0 %2405, %v867
        %v2407 = vpop.permute.xlu0 %2406
        %2409 = vset.pattern.permute.xlu0 3
        %2410 = vperm.xlu0 %2409, %v868
        %v2411 = vpop.permute.xlu0 %2410
        %2413 = vset.pattern.permute.xlu0 3
        %2414 = vperm.xlu0 %2413, %v869
        %v2415 = vpop.permute.xlu0 %2414
        %2417 = vset.pattern.permute.xlu0 3
        %2418 = vperm.xlu0 %2417, %v870
        %v2419 = vpop.permute.xlu0 %2418
        %2421 = vset.pattern.permute.xlu0 3
        %2422 = vperm.xlu0 %2421, %v871
        %v2423 = vpop.permute.xlu0 %2422
        %2425 = vset.pattern.permute.xlu0 3
        %2426 = vperm.xlu0 %2425, %v872
        %v2427 = vpop.permute.xlu0 %2426
        %2429 = vset.pattern.permute.xlu0 3
        %2430 = vperm.xlu0 %2429, %v873
        %v2431 = vpop.permute.xlu0 %2430
        %2433 = vset.pattern.permute.xlu0 3
        %2434 = vperm.xlu0 %2433, %v874
        %v2435 = vpop.permute.xlu0 %2434
        %2437 = vset.pattern.permute.xlu0 3
        %2438 = vperm.xlu0 %2437, %v875
        %v2439 = vpop.permute.xlu0 %2438
        %2441 = vset.pattern.permute.xlu0 3
        %2442 = vperm.xlu0 %2441, %v876
        %v2443 = vpop.permute.xlu0 %2442
        %2445 = vset.pattern.permute.xlu0 3
        %2446 = vperm.xlu0 %2445, %v877
        %v2447 = vpop.permute.xlu0 %2446
        %2449 = vset.pattern.permute.xlu0 3
        %2450 = vperm.xlu0 %2449, %v878
        %v2451 = vpop.permute.xlu0 %2450
        %2453 = vset.pattern.permute.xlu0 3
        %2454 = vperm.xlu0 %2453, %v879
        %v2455 = vpop.permute.xlu0 %2454
        %2457 = vset.pattern.permute.xlu0 3
        %2458 = vperm.xlu0 %2457, %v880
        %v2459 = vpop.permute.xlu0 %2458
        %2461 = vset.pattern.permute.xlu0 3
        %2462 = vperm.xlu0 %2461, %v881
        %v2463 = vpop.permute.xlu0 %2462
        %2465 = vset.pattern.permute.xlu0 3
        %2466 = vperm.xlu0 %2465, %v882
        %v2467 = vpop.permute.xlu0 %2466
        %2469 = vset.pattern.permute.xlu0 3
        %2470 = vperm.xlu0 %2469, %v883
        %v2471 = vpop.permute.xlu0 %2470
        %v2473 = vmul.f32 %v2313, %v2347
        %v2474 = vmul.f32 %v2314, %v2351
        %v2475 = vmul.f32 %v2315, %v2355
        %v2476 = vmul.f32 %v2316, %v2359
        %v2477 = vmul.f32 %v2317, %v2363
        %v2478 = vmul.f32 %v2318, %v2367
        %v2479 = vmul.f32 %v2319, %v2371
        %v2480 = vmul.f32 %v2320, %v2375
        %v2481 = vmul.f32 %v2321, %v2379
        %v2482 = vmul.f32 %v2322, %v2383
        %v2483 = vmul.f32 %v2323, %v2387
        %v2484 = vmul.f32 %v2324, %v2391
        %v2485 = vmul.f32 %v2325, %v2395
        %v2486 = vmul.f32 %v2326, %v2399
        %v2487 = vmul.f32 %v2327, %v2403
        %v2488 = vmul.f32 %v2328, %v2407
        %v2489 = vmul.f32 %v2329, %v2411
        %v2490 = vmul.f32 %v2330, %v2415
        %v2491 = vmul.f32 %v2331, %v2419
        %v2492 = vmul.f32 %v2332, %v2423
        %v2493 = vmul.f32 %v2333, %v2427
        %v2494 = vmul.f32 %v2334, %v2431
        %v2495 = vmul.f32 %v2335, %v2435
        %v2496 = vmul.f32 %v2336, %v2439
        %v2497 = vmul.f32 %v2337, %v2443
        %v2498 = vmul.f32 %v2338, %v2447
        %v2499 = vmul.f32 %v2339, %v2451
        %v2500 = vmul.f32 %v2340, %v2455
        %v2501 = vmul.f32 %v2341, %v2459
        %v2502 = vmul.f32 %v2342, %v2463
        %v2503 = vmul.f32 %v2343, %v2467
        %v2504 = vmul.f32 %v2344, %v2471
        %v2505 = vpack.c.bf16 %v2474, %v2473
        %v2506 = vpack.c.bf16 %v2476, %v2475
        %v2507 = vpack.c.bf16 %v2478, %v2477
        %v2508 = vpack.c.bf16 %v2480, %v2479
        %v2509 = vpack.c.bf16 %v2482, %v2481
        %v2510 = vpack.c.bf16 %v2484, %v2483
        %v2511 = vpack.c.bf16 %v2486, %v2485
        %v2512 = vpack.c.bf16 %v2488, %v2487
        %v2513 = vpack.c.bf16 %v2490, %v2489
        %v2514 = vpack.c.bf16 %v2492, %v2491
        %v2515 = vpack.c.bf16 %v2494, %v2493
        %v2516 = vpack.c.bf16 %v2496, %v2495
        %v2517 = vpack.c.bf16 %v2498, %v2497
        %v2518 = vpack.c.bf16 %v2500, %v2499
        %v2519 = vpack.c.bf16 %v2502, %v2501
        %v2520 = vpack.c.bf16 %v2504, %v2503
        %s2521 = scalar_lea.vmem %s4, 96
        %v2522 = vld [vmem:[%s2521] sm:$0xf]
        %v2523 = vld [vmem:[%s2521 + $0x4] sm:$0xf]
        %v2524 = vld [vmem:[%s2521 + $0x8] sm:$0xf]
        %v2525 = vld [vmem:[%s2521 + $0xc] sm:$0xf]
        %v2526 = vld [vmem:[%s2521 + $0x10] sm:$0xf]
        %v2527 = vld [vmem:[%s2521 + $0x14] sm:$0xf]
        %v2528 = vld [vmem:[%s2521 + $0x18] sm:$0xf]
        %v2529 = vld [vmem:[%s2521 + $0x1c] sm:$0xf]
        %v2538 = vunpack.c.l.b16 %v2522
        %v2539 = vunpack.c.l.b16 %v2523
        %v2540 = vunpack.c.l.b16 %v2524
        %v2541 = vunpack.c.l.b16 %v2525
        %v2542 = vunpack.c.l.b16 %v2526
        %v2543 = vunpack.c.l.b16 %v2527
        %v2544 = vunpack.c.l.b16 %v2528
        %v2545 = vunpack.c.l.b16 %v2529
        %v2546 = vpack.c.b16 %v2539, %v2538
        %v2547 = vpack.c.b16 %v2541, %v2540
        %v2548 = vpack.c.b16 %v2543, %v2542
        %v2549 = vpack.c.b16 %v2545, %v2544
        %v2555 = vsel %vm811, %v2505, 0
        %v2558 = vsel %vm811, %v2506, 0
        %v2561 = vsel %vm811, %v2507, 0
        %v2564 = vsel %vm811, %v2508, 0
        %v2567 = vsel %vm811, %v2509, 0
        %v2570 = vsel %vm811, %v2510, 0
        %v2573 = vsel %vm811, %v2511, 0
        %v2576 = vsel %vm811, %v2512, 0
        %v2579 = vsel %vm811, %v2513, 0
        %v2582 = vsel %vm811, %v2514, 0
        %v2585 = vsel %vm811, %v2515, 0
        %v2588 = vsel %vm811, %v2516, 0
        %v2591 = vsel %vm811, %v2517, 0
        %v2594 = vsel %vm811, %v2518, 0
        %v2597 = vsel %vm811, %v2519, 0
        %v2600 = vsel %vm811, %v2520, 0
        %2602 = vmatprep.subr.bf16.mxu0 0
        %2603 = vmatpush1.bf16.msra.mxu0 %v2546
        %2604 = vmatprep.subr.bf16.mxu0 0
        %2605 = vmatpush1.bf16.msra.mxu0 %v2547
        %2606 = vmatprep.subr.bf16.mxu0 0
        %2607 = vmatpush1.bf16.msra.mxu0 %v2548
        %2608 = vmatprep.subr.bf16.mxu0 0
        %2609 = vmatpush1.bf16.msra.mxu0 %v2549
        %2610 = vmatprep.subr.bf16.mxu0 0
        %2611 = vmatpush1.bf16.msra.mxu0 0
        %2612 = vmatprep.subr.bf16.mxu0 0
        %2613 = vmatpush1.bf16.msra.mxu0 0
        %2614 = vmatprep.subr.bf16.mxu0 0
        %2615 = vmatpush1.bf16.msra.mxu0 0
        %2616 = vmatprep.subr.bf16.mxu0 0
        %2617 = vmatpush1.bf16.msra.mxu0 0
        %2618 = vmatprep.subr.bf16.mxu0 0
        %2619 = vmatpush1.bf16.msra.mxu0 0
        %2620 = vmatprep.subr.bf16.mxu0 0
        %2621 = vmatpush1.bf16.msra.mxu0 0
        %2622 = vmatprep.subr.bf16.mxu0 0
        %2623 = vmatpush1.bf16.msra.mxu0 0
        %2624 = vmatprep.subr.bf16.mxu0 0
        %2625 = vmatpush1.bf16.msra.mxu0 0
        %2626 = vmatprep.subr.bf16.mxu0 0
        %2627 = vmatpush1.bf16.msra.mxu0 0
        %2628 = vmatprep.subr.bf16.mxu0 0
        %2629 = vmatpush1.bf16.msra.mxu0 0
        %2630 = vmatprep.subr.bf16.mxu0 0
        %2631 = vmatpush1.bf16.msra.mxu0 0
        %2632 = vmatprep.subr.bf16.mxu0 0
        %2633 = vmatpush1.bf16.msra.mxu0 0
        %2634 = vmatprep.mubr.bf16.mxu0 0
        %2635 = vmatmul.mubr.bf16.gmra.mrb[0].mxu0 %v2555
        %v2636 = vpop.f32.mrb[0].mxu0
        %v2637 = vadd.f32 0.0, %v2636
        %v2638 = vpop.f32.mrb[0].mxu0
        %v2639 = vpop.f32.mrb[0].mxu0
        %v2640 = vadd.f32 0.0, %v2639
        %v2641 = vpop.f32.mrb[0].mxu0
        %2642 = vmatprep.mubr.bf16.mxu0 0
        %2643 = vmatmul.mubr.bf16.gmra.mrb[0].mxu0 %v2558
        %v2644 = vpop.f32.mrb[0].mxu0
        %v2645 = vadd.f32 0.0, %v2644
        %v2646 = vpop.f32.mrb[0].mxu0
        %v2647 = vpop.f32.mrb[0].mxu0
        %v2648 = vadd.f32 0.0, %v2647
        %v2649 = vpop.f32.mrb[0].mxu0
        %2650 = vmatprep.mubr.bf16.mxu0 0
        %2651 = vmatmul.mubr.bf16.gmra.mrb[0].mxu0 %v2561
        %v2652 = vpop.f32.mrb[0].mxu0
        %v2653 = vadd.f32 0.0, %v2652
        %v2654 = vpop.f32.mrb[0].mxu0
        %v2655 = vpop.f32.mrb[0].mxu0
        %v2656 = vadd.f32 0.0, %v2655
        %v2657 = vpop.f32.mrb[0].mxu0
        %2658 = vmatprep.mubr.bf16.mxu0 0
        %2659 = vmatmul.mubr.bf16.gmra.mrb[0].mxu0 %v2564
        %v2660 = vpop.f32.mrb[0].mxu0
        %v2661 = vadd.f32 0.0, %v2660
        %v2662 = vpop.f32.mrb[0].mxu0
        %v2663 = vpop.f32.mrb[0].mxu0
        %v2664 = vadd.f32 0.0, %v2663
        %v2665 = vpop.f32.mrb[0].mxu0
        %2666 = vmatprep.mubr.bf16.mxu0 0
        %2667 = vmatmul.mubr.bf16.gmra.mrb[0].mxu0 %v2567
        %v2668 = vpop.f32.mrb[0].mxu0
        %v2669 = vadd.f32 0.0, %v2668
        %v2670 = vpop.f32.mrb[0].mxu0
        %v2671 = vpop.f32.mrb[0].mxu0
        %v2672 = vadd.f32 0.0, %v2671
        %v2673 = vpop.f32.mrb[0].mxu0
        %2674 = vmatprep.mubr.bf16.mxu0 0
        %2675 = vmatmul.mubr.bf16.gmra.mrb[0].mxu0 %v2570
        %v2676 = vpop.f32.mrb[0].mxu0
        %v2677 = vadd.f32 0.0, %v2676
        %v2678 = vpop.f32.mrb[0].mxu0
        %v2679 = vpop.f32.mrb[0].mxu0
        %v2680 = vadd.f32 0.0, %v2679
        %v2681 = vpop.f32.mrb[0].mxu0
        %2682 = vmatprep.mubr.bf16.mxu0 0
        %2683 = vmatmul.mubr.bf16.gmra.mrb[0].mxu0 %v2573
        %v2684 = vpop.f32.mrb[0].mxu0
        %v2685 = vadd.f32 0.0, %v2684
        %v2686 = vpop.f32.mrb[0].mxu0
        %v2687 = vpop.f32.mrb[0].mxu0
        %v2688 = vadd.f32 0.0, %v2687
        %v2689 = vpop.f32.mrb[0].mxu0
        %2690 = vmatprep.mubr.bf16.mxu0 0
        %2691 = vmatmul.mubr.bf16.gmra.mrb[0].mxu0 %v2576
        %v2692 = vpop.f32.mrb[0].mxu0
        %v2693 = vadd.f32 0.0, %v2692
        %v2694 = vpop.f32.mrb[0].mxu0
        %v2695 = vpop.f32.mrb[0].mxu0
        %v2696 = vadd.f32 0.0, %v2695
        %v2697 = vpop.f32.mrb[0].mxu0
        %2698 = vmatprep.mubr.bf16.mxu0 0
        %2699 = vmatmul.mubr.bf16.gmra.mrb[0].mxu0 %v2579
        %v2700 = vpop.f32.mrb[0].mxu0
        %v2701 = vadd.f32 0.0, %v2700
        %v2702 = vpop.f32.mrb[0].mxu0
        %v2703 = vpop.f32.mrb[0].mxu0
        %v2704 = vadd.f32 0.0, %v2703
        %v2705 = vpop.f32.mrb[0].mxu0
        %2706 = vmatprep.mubr.bf16.mxu0 0
        %2707 = vmatmul.mubr.bf16.gmra.mrb[0].mxu0 %v2582
        %v2708 = vpop.f32.mrb[0].mxu0
        %v2709 = vadd.f32 0.0, %v2708
        %v2710 = vpop.f32.mrb[0].mxu0
        %v2711 = vpop.f32.mrb[0].mxu0
        %v2712 = vadd.f32 0.0, %v2711
        %v2713 = vpop.f32.mrb[0].mxu0
        %2714 = vmatprep.mubr.bf16.mxu0 0
        %2715 = vmatmul.mubr.bf16.gmra.mrb[0].mxu0 %v2585
        %v2716 = vpop.f32.mrb[0].mxu0
        %v2717 = vadd.f32 0.0, %v2716
        %v2718 = vpop.f32.mrb[0].mxu0
        %v2719 = vpop.f32.mrb[0].mxu0
        %v2720 = vadd.f32 0.0, %v2719
        %v2721 = vpop.f32.mrb[0].mxu0
        %2722 = vmatprep.mubr.bf16.mxu0 0
        %2723 = vmatmul.mubr.bf16.gmra.mrb[0].mxu0 %v2588
        %v2724 = vpop.f32.mrb[0].mxu0
        %v2725 = vadd.f32 0.0, %v2724
        %v2726 = vpop.f32.mrb[0].mxu0
        %v2727 = vpop.f32.mrb[0].mxu0
        %v2728 = vadd.f32 0.0, %v2727
        %v2729 = vpop.f32.mrb[0].mxu0
        %2730 = vmatprep.mubr.bf16.mxu0 0
        %2731 = vmatmul.mubr.bf16.gmra.mrb[0].mxu0 %v2591
        %v2732 = vpop.f32.mrb[0].mxu0
        %v2733 = vadd.f32 0.0, %v2732
        %v2734 = vpop.f32.mrb[0].mxu0
        %v2735 = vpop.f32.mrb[0].mxu0
        %v2736 = vadd.f32 0.0, %v2735
        %v2737 = vpop.f32.mrb[0].mxu0
        %2738 = vmatprep.mubr.bf16.mxu0 0
        %2739 = vmatmul.mubr.bf16.gmra.mrb[0].mxu0 %v2594
        %v2740 = vpop.f32.mrb[0].mxu0
        %v2741 = vadd.f32 0.0, %v2740
        %v2742 = vpop.f32.mrb[0].mxu0
        %v2743 = vpop.f32.mrb[0].mxu0
        %v2744 = vadd.f32 0.0, %v2743
        %v2745 = vpop.f32.mrb[0].mxu0
        %2746 = vmatprep.mubr.bf16.mxu0 0
        %2747 = vmatmul.mubr.bf16.gmra.mrb[0].mxu0 %v2597
        %v2748 = vpop.f32.mrb[0].mxu0
        %v2749 = vadd.f32 0.0, %v2748
        %v2750 = vpop.f32.mrb[0].mxu0
        %v2751 = vpop.f32.mrb[0].mxu0
        %v2752 = vadd.f32 0.0, %v2751
        %v2753 = vpop.f32.mrb[0].mxu0
        %2754 = vmatprep.mubr.bf16.mxu0 0
        %2755 = vmatmul.mubr.bf16.gmra.mrb[0].mxu0 %v2600
        %v2756 = vpop.f32.mrb[0].mxu0
        %v2757 = vadd.f32 0.0, %v2756
        %v2758 = vpop.f32.mrb[0].mxu0
        %v2759 = vpop.f32.mrb[0].mxu0
        %v2760 = vadd.f32 0.0, %v2759
        %v2761 = vpop.f32.mrb[0].mxu0
        %2762 = vdwg.mxu0
        %v2763 = vadd.f32 %v2281, %v2637
        %v2764 = vadd.f32 %v2282, %v2640
        %v2765 = vadd.f32 %v2283, %v2645
        %v2766 = vadd.f32 %v2284, %v2648
        %v2767 = vadd.f32 %v2285, %v2653
        %v2768 = vadd.f32 %v2286, %v2656
        %v2769 = vadd.f32 %v2287, %v2661
        %v2770 = vadd.f32 %v2288, %v2664
        %v2771 = vadd.f32 %v2289, %v2669
        %v2772 = vadd.f32 %v2290, %v2672
        %v2773 = vadd.f32 %v2291, %v2677
        %v2774 = vadd.f32 %v2292, %v2680
        %v2775 = vadd.f32 %v2293, %v2685
        %v2776 = vadd.f32 %v2294, %v2688
        %v2777 = vadd.f32 %v2295, %v2693
        %v2778 = vadd.f32 %v2296, %v2696
        %v2779 = vadd.f32 %v2297, %v2701
        %v2780 = vadd.f32 %v2298, %v2704
        %v2781 = vadd.f32 %v2299, %v2709
        %v2782 = vadd.f32 %v2300, %v2712
        %v2783 = vadd.f32 %v2301, %v2717
        %v2784 = vadd.f32 %v2302, %v2720
        %v2785 = vadd.f32 %v2303, %v2725
        %v2786 = vadd.f32 %v2304, %v2728
        %v2787 = vadd.f32 %v2305, %v2733
        %v2788 = vadd.f32 %v2306, %v2736
        %v2789 = vadd.f32 %v2307, %v2741
        %v2790 = vadd.f32 %v2308, %v2744
        %v2791 = vadd.f32 %v2309, %v2749
        %v2792 = vadd.f32 %v2310, %v2752
        %v2793 = vadd.f32 %v2311, %v2757
        %v2794 = vadd.f32 %v2312, %v2760
        %s2795 = scalar_lea.vmem %s4, 128
        %v2796 = vld [vmem:[%s2795] sm:$0xf]
        %v2797 = vld [vmem:[%s2795 + $0x4] sm:$0xf]
        %v2798 = vld [vmem:[%s2795 + $0x8] sm:$0xf]
        %v2799 = vld [vmem:[%s2795 + $0xc] sm:$0xf]
        %v2800 = vld [vmem:[%s2795 + $0x10] sm:$0xf]
        %v2801 = vld [vmem:[%s2795 + $0x14] sm:$0xf]
        %v2802 = vld [vmem:[%s2795 + $0x18] sm:$0xf]
        %v2803 = vld [vmem:[%s2795 + $0x1c] sm:$0xf]
        %v2812 = vunpack.c.l.b16 %v2796
        %v2813 = vunpack.c.l.b16 %v2797
        %v2814 = vunpack.c.l.b16 %v2798
        %v2815 = vunpack.c.l.b16 %v2799
        %v2816 = vunpack.c.l.b16 %v2800
        %v2817 = vunpack.c.l.b16 %v2801
        %v2818 = vunpack.c.l.b16 %v2802
        %v2819 = vunpack.c.l.b16 %v2803
        %v2820 = vpack.c.b16 %v2813, %v2812
        %v2821 = vpack.c.b16 %v2815, %v2814
        %v2822 = vpack.c.b16 %v2817, %v2816
        %v2823 = vpack.c.b16 %v2819, %v2818
        %v2829 = vsel %vm811, %v884, 0
        %v2832 = vsel %vm811, %v885, 0
        %v2835 = vsel %vm811, %v886, 0
        %v2838 = vsel %vm811, %v887, 0
        %v2841 = vsel %vm811, %v888, 0
        %v2844 = vsel %vm811, %v889, 0
        %v2847 = vsel %vm811, %v890, 0
        %v2850 = vsel %vm811, %v891, 0
        %v2853 = vsel %vm811, %v892, 0
        %v2856 = vsel %vm811, %v893, 0
        %v2859 = vsel %vm811, %v894, 0
        %v2862 = vsel %vm811, %v895, 0
        %v2865 = vsel %vm811, %v896, 0
        %v2868 = vsel %vm811, %v897, 0
        %v2871 = vsel %vm811, %v898, 0
        %v2874 = vsel %vm811, %v899, 0
        %2876 = vmatprep.subr.bf16.mxu0 0
        %2877 = vmatpush1.bf16.msra.mxu0 %v2820
        %2878 = vmatprep.subr.bf16.mxu0 0
        %2879 = vmatpush1.bf16.msra.mxu0 %v2821
        %2880 = vmatprep.subr.bf16.mxu0 0
        %2881 = vmatpush1.bf16.msra.mxu0 %v2822
        %2882 = vmatprep.subr.bf16.mxu0 0
        %2883 = vmatpush1.bf16.msra.mxu0 %v2823
        %2884 = vmatprep.subr.bf16.mxu0 0
        %2885 = vmatpush1.bf16.msra.mxu0 0
        %2886 = vmatprep.subr.bf16.mxu0 0
        %2887 = vmatpush1.bf16.msra.mxu0 0
        %2888 = vmatprep.subr.bf16.mxu0 0
        %2889 = vmatpush1.bf16.msra.mxu0 0
        %2890 = vmatprep.subr.bf16.mxu0 0
        %2891 = vmatpush1.bf16.msra.mxu0 0
        %2892 = vmatprep.subr.bf16.mxu0 0
        %2893 = vmatpush1.bf16.msra.mxu0 0
        %2894 = vmatprep.subr.bf16.mxu0 0
        %2895 = vmatpush1.bf16.msra.mxu0 0
        %2896 = vmatprep.subr.bf16.mxu0 0
        %2897 = vmatpush1.bf16.msra.mxu0 0
        %2898 = vmatprep.subr.bf16.mxu0 0
        %2899 = vmatpush1.bf16.msra.mxu0 0
        %2900 = vmatprep.subr.bf16.mxu0 0
        %2901 = vmatpush1.bf16.msra.mxu0 0
        %2902 = vmatprep.subr.bf16.mxu0 0
        %2903 = vmatpush1.bf16.msra.mxu0 0
        %2904 = vmatprep.subr.bf16.mxu0 0
        %2905 = vmatpush1.bf16.msra.mxu0 0
        %2906 = vmatprep.subr.bf16.mxu0 0
        %2907 = vmatpush1.bf16.msra.mxu0 0
        %2908 = vmatprep.mubr.bf16.mxu0 0
        %2909 = vmatmul.mubr.bf16.gmra.mrb[0].mxu0 %v2829
        %v2910 = vpop.f32.mrb[0].mxu0
        %v2911 = vadd.f32 0.0, %v2910
        %v2912 = vpop.f32.mrb[0].mxu0
        %v2913 = vpop.f32.mrb[0].mxu0
        %v2914 = vadd.f32 0.0, %v2913
        %v2915 = vpop.f32.mrb[0].mxu0
        %2916 = vmatprep.mubr.bf16.mxu0 0
        %2917 = vmatmul.mubr.bf16.gmra.mrb[0].mxu0 %v2832
        %v2918 = vpop.f32.mrb[0].mxu0
        %v2919 = vadd.f32 0.0, %v2918
        %v2920 = vpop.f32.mrb[0].mxu0
        %v2921 = vpop.f32.mrb[0].mxu0
        %v2922 = vadd.f32 0.0, %v2921
        %v2923 = vpop.f32.mrb[0].mxu0
        %2924 = vmatprep.mubr.bf16.mxu0 0
        %2925 = vmatmul.mubr.bf16.gmra.mrb[0].mxu0 %v2835
        %v2926 = vpop.f32.mrb[0].mxu0
        %v2927 = vadd.f32 0.0, %v2926
        %v2928 = vpop.f32.mrb[0].mxu0
        %v2929 = vpop.f32.mrb[0].mxu0
        %v2930 = vadd.f32 0.0, %v2929
        %v2931 = vpop.f32.mrb[0].mxu0
        %2932 = vmatprep.mubr.bf16.mxu0 0
        %2933 = vmatmul.mubr.bf16.gmra.mrb[0].mxu0 %v2838
        %v2934 = vpop.f32.mrb[0].mxu0
        %v2935 = vadd.f32 0.0, %v2934
        %v2936 = vpop.f32.mrb[0].mxu0
        %v2937 = vpop.f32.mrb[0].mxu0
        %v2938 = vadd.f32 0.0, %v2937
        %v2939 = vpop.f32.mrb[0].mxu0
        %2940 = vmatprep.mubr.bf16.mxu0 0
        %2941 = vmatmul.mubr.bf16.gmra.mrb[0].mxu0 %v2841
        %v2942 = vpop.f32.mrb[0].mxu0
        %v2943 = vadd.f32 0.0, %v2942
        %v2944 = vpop.f32.mrb[0].mxu0
        %v2945 = vpop.f32.mrb[0].mxu0
        %v2946 = vadd.f32 0.0, %v2945
        %v2947 = vpop.f32.mrb[0].mxu0
        %2948 = vmatprep.mubr.bf16.mxu0 0
        %2949 = vmatmul.mubr.bf16.gmra.mrb[0].mxu0 %v2844
        %v2950 = vpop.f32.mrb[0].mxu0
        %v2951 = vadd.f32 0.0, %v2950
        %v2952 = vpop.f32.mrb[0].mxu0
        %v2953 = vpop.f32.mrb[0].mxu0
        %v2954 = vadd.f32 0.0, %v2953
        %v2955 = vpop.f32.mrb[0].mxu0
        %2956 = vmatprep.mubr.bf16.mxu0 0
        %2957 = vmatmul.mubr.bf16.gmra.mrb[0].mxu0 %v2847
        %v2958 = vpop.f32.mrb[0].mxu0
        %v2959 = vadd.f32 0.0, %v2958
        %v2960 = vpop.f32.mrb[0].mxu0
        %v2961 = vpop.f32.mrb[0].mxu0
        %v2962 = vadd.f32 0.0, %v2961
        %v2963 = vpop.f32.mrb[0].mxu0
        %2964 = vmatprep.mubr.bf16.mxu0 0
        %2965 = vmatmul.mubr.bf16.gmra.mrb[0].mxu0 %v2850
        %v2966 = vpop.f32.mrb[0].mxu0
        %v2967 = vadd.f32 0.0, %v2966
        %v2968 = vpop.f32.mrb[0].mxu0
        %v2969 = vpop.f32.mrb[0].mxu0
        %v2970 = vadd.f32 0.0, %v2969
        %v2971 = vpop.f32.mrb[0].mxu0
        %2972 = vmatprep.mubr.bf16.mxu0 0
        %2973 = vmatmul.mubr.bf16.gmra.mrb[0].mxu0 %v2853
        %v2974 = vpop.f32.mrb[0].mxu0
        %v2975 = vadd.f32 0.0, %v2974
        %v2976 = vpop.f32.mrb[0].mxu0
        %v2977 = vpop.f32.mrb[0].mxu0
        %v2978 = vadd.f32 0.0, %v2977
        %v2979 = vpop.f32.mrb[0].mxu0
        %2980 = vmatprep.mubr.bf16.mxu0 0
        %2981 = vmatmul.mubr.bf16.gmra.mrb[0].mxu0 %v2856
        %v2982 = vpop.f32.mrb[0].mxu0
        %v2983 = vadd.f32 0.0, %v2982
        %v2984 = vpop.f32.mrb[0].mxu0
        %v2985 = vpop.f32.mrb[0].mxu0
        %v2986 = vadd.f32 0.0, %v2985
        %v2987 = vpop.f32.mrb[0].mxu0
        %2988 = vmatprep.mubr.bf16.mxu0 0
        %2989 = vmatmul.mubr.bf16.gmra.mrb[0].mxu0 %v2859
        %v2990 = vpop.f32.mrb[0].mxu0
        %v2991 = vadd.f32 0.0, %v2990
        %v2992 = vpop.f32.mrb[0].mxu0
        %v2993 = vpop.f32.mrb[0].mxu0
        %v2994 = vadd.f32 0.0, %v2993
        %v2995 = vpop.f32.mrb[0].mxu0
        %2996 = vmatprep.mubr.bf16.mxu0 0
        %2997 = vmatmul.mubr.bf16.gmra.mrb[0].mxu0 %v2862
        %v2998 = vpop.f32.mrb[0].mxu0
        %v2999 = vadd.f32 0.0, %v2998
        %v3000 = vpop.f32.mrb[0].mxu0
        %v3001 = vpop.f32.mrb[0].mxu0
        %v3002 = vadd.f32 0.0, %v3001
        %v3003 = vpop.f32.mrb[0].mxu0
        %3004 = vmatprep.mubr.bf16.mxu0 0
        %3005 = vmatmul.mubr.bf16.gmra.mrb[0].mxu0 %v2865
        %v3006 = vpop.f32.mrb[0].mxu0
        %v3007 = vadd.f32 0.0, %v3006
        %v3008 = vpop.f32.mrb[0].mxu0
        %v3009 = vpop.f32.mrb[0].mxu0
        %v3010 = vadd.f32 0.0, %v3009
        %v3011 = vpop.f32.mrb[0].mxu0
        %3012 = vmatprep.mubr.bf16.mxu0 0
        %3013 = vmatmul.mubr.bf16.gmra.mrb[0].mxu0 %v2868
        %v3014 = vpop.f32.mrb[0].mxu0
        %v3015 = vadd.f32 0.0, %v3014
        %v3016 = vpop.f32.mrb[0].mxu0
        %v3017 = vpop.f32.mrb[0].mxu0
        %v3018 = vadd.f32 0.0, %v3017
        %v3019 = vpop.f32.mrb[0].mxu0
        %3020 = vmatprep.mubr.bf16.mxu0 0
        %3021 = vmatmul.mubr.bf16.gmra.mrb[0].mxu0 %v2871
        %v3022 = vpop.f32.mrb[0].mxu0
        %v3023 = vadd.f32 0.0, %v3022
        %v3024 = vpop.f32.mrb[0].mxu0
        %v3025 = vpop.f32.mrb[0].mxu0
        %v3026 = vadd.f32 0.0, %v3025
        %v3027 = vpop.f32.mrb[0].mxu0
        %3028 = vmatprep.mubr.bf16.mxu0 0
        %3029 = vmatmul.mubr.bf16.gmra.mrb[0].mxu0 %v2874
        %v3030 = vpop.f32.mrb[0].mxu0
        %v3031 = vadd.f32 0.0, %v3030
        %v3032 = vpop.f32.mrb[0].mxu0
        %v3033 = vpop.f32.mrb[0].mxu0
        %v3034 = vadd.f32 0.0, %v3033
        %v3035 = vpop.f32.mrb[0].mxu0
        %3036 = vdwg.mxu0
        %v3037 = vadd.f32 %v2763, %v2911
        %v3038 = vadd.f32 %v2764, %v2914
        %v3039 = vadd.f32 %v2765, %v2919
        %v3040 = vadd.f32 %v2766, %v2922
        %v3041 = vadd.f32 %v2767, %v2927
        %v3042 = vadd.f32 %v2768, %v2930
        %v3043 = vadd.f32 %v2769, %v2935
        %v3044 = vadd.f32 %v2770, %v2938
        %v3045 = vadd.f32 %v2771, %v2943
        %v3046 = vadd.f32 %v2772, %v2946
        %v3047 = vadd.f32 %v2773, %v2951
        %v3048 = vadd.f32 %v2774, %v2954
        %v3049 = vadd.f32 %v2775, %v2959
        %v3050 = vadd.f32 %v2776, %v2962
        %v3051 = vadd.f32 %v2777, %v2967
        %v3052 = vadd.f32 %v2778, %v2970
        %v3053 = vadd.f32 %v2779, %v2975
        %v3054 = vadd.f32 %v2780, %v2978
        %v3055 = vadd.f32 %v2781, %v2983
        %v3056 = vadd.f32 %v2782, %v2986
        %v3057 = vadd.f32 %v2783, %v2991
        %v3058 = vadd.f32 %v2784, %v2994
        %v3059 = vadd.f32 %v2785, %v2999
        %v3060 = vadd.f32 %v2786, %v3002
        %v3061 = vadd.f32 %v2787, %v3007
        %v3062 = vadd.f32 %v2788, %v3010
        %v3063 = vadd.f32 %v2789, %v3015
        %v3064 = vadd.f32 %v2790, %v3018
        %v3065 = vadd.f32 %v2791, %v3023
        %v3066 = vadd.f32 %v2792, %v3026
        %v3067 = vadd.f32 %v2793, %v3031
        %v3068 = vadd.f32 %v2794, %v3034
        %v3069 = vld [vmem:[#allocation2 + $0x21] sm:$0xff]
        %v3070 = vld [vmem:[#allocation2 + $0x29] sm:$0xff]
        %v3071 = vld [vmem:[#allocation2 + $0x31] sm:$0xff]
        %v3072 = vld [vmem:[#allocation2 + $0x39] sm:$0xff]
        %v3073 = vld [vmem:[#allocation2 + $0x41] sm:$0xff]
        %v3074 = vld [vmem:[#allocation2 + $0x49] sm:$0xff]
        %v3075 = vld [vmem:[#allocation2 + $0x51] sm:$0xff]
        %v3076 = vld [vmem:[#allocation2 + $0x59] sm:$0xff]
        %v3077 = vld [vmem:[#allocation2 + $0x61] sm:$0xff]
        %v3078 = vld [vmem:[#allocation2 + $0x69] sm:$0xff]
        %v3079 = vld [vmem:[#allocation2 + $0x71] sm:$0xff]
        %v3080 = vld [vmem:[#allocation2 + $0x79] sm:$0xff]
        %v3081 = vld [vmem:[#allocation2 + $0x81] sm:$0xff]
        %v3082 = vld [vmem:[#allocation2 + $0x89] sm:$0xff]
        %v3083 = vld [vmem:[#allocation2 + $0x91] sm:$0xff]
        %v3084 = vld [vmem:[#allocation2 + $0x99] sm:$0xff]
        %v3085 = vld [vmem:[#allocation2 + $0xa1] sm:$0xff]
        %v3086 = vld [vmem:[#allocation2 + $0xa9] sm:$0xff]
        %v3087 = vld [vmem:[#allocation2 + $0xb1] sm:$0xff]
        %v3088 = vld [vmem:[#allocation2 + $0xb9] sm:$0xff]
        %v3089 = vld [vmem:[#allocation2 + $0xc1] sm:$0xff]
        %v3090 = vld [vmem:[#allocation2 + $0xc9] sm:$0xff]
        %v3091 = vld [vmem:[#allocation2 + $0xd1] sm:$0xff]
        %v3092 = vld [vmem:[#allocation2 + $0xd9] sm:$0xff]
        %v3093 = vld [vmem:[#allocation2 + $0xe1] sm:$0xff]
        %v3094 = vld [vmem:[#allocation2 + $0xe9] sm:$0xff]
        %v3095 = vld [vmem:[#allocation2 + $0xf1] sm:$0xff]
        %v3096 = vld [vmem:[#allocation2 + $0xf9] sm:$0xff]
        %v3097 = vld [vmem:[#allocation2 + $0x101] sm:$0xff]
        %v3098 = vld [vmem:[#allocation2 + $0x109] sm:$0xff]
        %v3099 = vld [vmem:[#allocation2 + $0x111] sm:$0xff]
        %v3100 = vld [vmem:[#allocation2 + $0x119] sm:$0xff]
        %3101 = vset.pattern.permute.xlu0 5
        %3102 = vperm.xlu0 %3101, %v852
        %v3103 = vpop.permute.xlu0 %3102
        %3105 = vset.pattern.permute.xlu0 5
        %3106 = vperm.xlu0 %3105, %v853
        %v3107 = vpop.permute.xlu0 %3106
        %3109 = vset.pattern.permute.xlu0 5
        %3110 = vperm.xlu0 %3109, %v854
        %v3111 = vpop.permute.xlu0 %3110
        %3113 = vset.pattern.permute.xlu0 5
        %3114 = vperm.xlu0 %3113, %v855
        %v3115 = vpop.permute.xlu0 %3114
        %3117 = vset.pattern.permute.xlu0 5
        %3118 = vperm.xlu0 %3117, %v856
        %v3119 = vpop.permute.xlu0 %3118
        %3121 = vset.pattern.permute.xlu0 5
        %3122 = vperm.xlu0 %3121, %v857
        %v3123 = vpop.permute.xlu0 %3122
        %3125 = vset.pattern.permute.xlu0 5
        %3126 = vperm.xlu0 %3125, %v858
        %v3127 = vpop.permute.xlu0 %3126
        %3129 = vset.pattern.permute.xlu0 5
        %3130 = vperm.xlu0 %3129, %v859
        %v3131 = vpop.permute.xlu0 %3130
        %3133 = vset.pattern.permute.xlu0 5
        %3134 = vperm.xlu0 %3133, %v860
        %v3135 = vpop.permute.xlu0 %3134
        %3137 = vset.pattern.permute.xlu0 5
        %3138 = vperm.xlu0 %3137, %v861
        %v3139 = vpop.permute.xlu0 %3138
        %3141 = vset.pattern.permute.xlu0 5
        %3142 = vperm.xlu0 %3141, %v862
        %v3143 = vpop.permute.xlu0 %3142
        %3145 = vset.pattern.permute.xlu0 5
        %3146 = vperm.xlu0 %3145, %v863
        %v3147 = vpop.permute.xlu0 %3146
        %3149 = vset.pattern.permute.xlu0 5
        %3150 = vperm.xlu0 %3149, %v864
        %v3151 = vpop.permute.xlu0 %3150
        %3153 = vset.pattern.permute.xlu0 5
        %3154 = vperm.xlu0 %3153, %v865
        %v3155 = vpop.permute.xlu0 %3154
        %3157 = vset.pattern.permute.xlu0 5
        %3158 = vperm.xlu0 %3157, %v866
        %v3159 = vpop.permute.xlu0 %3158
        %3161 = vset.pattern.permute.xlu0 5
        %3162 = vperm.xlu0 %3161, %v867
        %v3163 = vpop.permute.xlu0 %3162
        %3165 = vset.pattern.permute.xlu0 5
        %3166 = vperm.xlu0 %3165, %v868
        %v3167 = vpop.permute.xlu0 %3166
        %3169 = vset.pattern.permute.xlu0 5
        %3170 = vperm.xlu0 %3169, %v869
        %v3171 = vpop.permute.xlu0 %3170
        %3173 = vset.pattern.permute.xlu0 5
        %3174 = vperm.xlu0 %3173, %v870
        %v3175 = vpop.permute.xlu0 %3174
        %3177 = vset.pattern.permute.xlu0 5
        %3178 = vperm.xlu0 %3177, %v871
        %v3179 = vpop.permute.xlu0 %3178
        %3181 = vset.pattern.permute.xlu0 5
        %3182 = vperm.xlu0 %3181, %v872
        %v3183 = vpop.permute.xlu0 %3182
        %3185 = vset.pattern.permute.xlu0 5
        %3186 = vperm.xlu0 %3185, %v873
        %v3187 = vpop.permute.xlu0 %3186
        %3189 = vset.pattern.permute.xlu0 5
        %3190 = vperm.xlu0 %3189, %v874
        %v3191 = vpop.permute.xlu0 %3190
        %3193 = vset.pattern.permute.xlu0 5
        %3194 = vperm.xlu0 %3193, %v875
        %v3195 = vpop.permute.xlu0 %3194
        %3197 = vset.pattern.permute.xlu0 5
        %3198 = vperm.xlu0 %3197, %v876
        %v3199 = vpop.permute.xlu0 %3198
        %3201 = vset.pattern.permute.xlu0 5
        %3202 = vperm.xlu0 %3201, %v877
        %v3203 = vpop.permute.xlu0 %3202
        %3205 = vset.pattern.permute.xlu0 5
        %3206 = vperm.xlu0 %3205, %v878
        %v3207 = vpop.permute.xlu0 %3206
        %3209 = vset.pattern.permute.xlu0 5
        %3210 = vperm.xlu0 %3209, %v879
        %v3211 = vpop.permute.xlu0 %3210
        %3213 = vset.pattern.permute.xlu0 5
        %3214 = vperm.xlu0 %3213, %v880
        %v3215 = vpop.permute.xlu0 %3214
        %3217 = vset.pattern.permute.xlu0 5
        %3218 = vperm.xlu0 %3217, %v881
        %v3219 = vpop.permute.xlu0 %3218
        %3221 = vset.pattern.permute.xlu0 5
        %3222 = vperm.xlu0 %3221, %v882
        %v3223 = vpop.permute.xlu0 %3222
        %3225 = vset.pattern.permute.xlu0 5
        %3226 = vperm.xlu0 %3225, %v883
        %v3227 = vpop.permute.xlu0 %3226
        %v3229 = vmul.f32 %v3069, %v3103
        %v3230 = vmul.f32 %v3070, %v3107
        %v3231 = vmul.f32 %v3071, %v3111
        %v3232 = vmul.f32 %v3072, %v3115
        %v3233 = vmul.f32 %v3073, %v3119
        %v3234 = vmul.f32 %v3074, %v3123
        %v3235 = vmul.f32 %v3075, %v3127
        %v3236 = vmul.f32 %v3076, %v3131
        %v3237 = vmul.f32 %v3077, %v3135
        %v3238 = vmul.f32 %v3078, %v3139
        %v3239 = vmul.f32 %v3079, %v3143
        %v3240 = vmul.f32 %v3080, %v3147
        %v3241 = vmul.f32 %v3081, %v3151
        %v3242 = vmul.f32 %v3082, %v3155
        %v3243 = vmul.f32 %v3083, %v3159
        %v3244 = vmul.f32 %v3084, %v3163
        %v3245 = vmul.f32 %v3085, %v3167
        %v3246 = vmul.f32 %v3086, %v3171
        %v3247 = vmul.f32 %v3087, %v3175
        %v3248 = vmul.f32 %v3088, %v3179
        %v3249 = vmul.f32 %v3089, %v3183
        %v3250 = vmul.f32 %v3090, %v3187
        %v3251 = vmul.f32 %v3091, %v3191
        %v3252 = vmul.f32 %v3092, %v3195
        %v3253 = vmul.f32 %v3093, %v3199
        %v3254 = vmul.f32 %v3094, %v3203
        %v3255 = vmul.f32 %v3095, %v3207
        %v3256 = vmul.f32 %v3096, %v3211
        %v3257 = vmul.f32 %v3097, %v3215
        %v3258 = vmul.f32 %v3098, %v3219
        %v3259 = vmul.f32 %v3099, %v3223
        %v3260 = vmul.f32 %v3100, %v3227
        %v3261 = vpack.c.bf16 %v3230, %v3229
        %v3262 = vpack.c.bf16 %v3232, %v3231
        %v3263 = vpack.c.bf16 %v3234, %v3233
        %v3264 = vpack.c.bf16 %v3236, %v3235
        %v3265 = vpack.c.bf16 %v3238, %v3237
        %v3266 = vpack.c.bf16 %v3240, %v3239
        %v3267 = vpack.c.bf16 %v3242, %v3241
        %v3268 = vpack.c.bf16 %v3244, %v3243
        %v3269 = vpack.c.bf16 %v3246, %v3245
        %v3270 = vpack.c.bf16 %v3248, %v3247
        %v3271 = vpack.c.bf16 %v3250, %v3249
        %v3272 = vpack.c.bf16 %v3252, %v3251
        %v3273 = vpack.c.bf16 %v3254, %v3253
        %v3274 = vpack.c.bf16 %v3256, %v3255
        %v3275 = vpack.c.bf16 %v3258, %v3257
        %v3276 = vpack.c.bf16 %v3260, %v3259
        %s3277 = scalar_lea.vmem %s4, 160
        %v3278 = vld [vmem:[%s3277] sm:$0xf]
        %v3279 = vld [vmem:[%s3277 + $0x4] sm:$0xf]
        %v3280 = vld [vmem:[%s3277 + $0x8] sm:$0xf]
        %v3281 = vld [vmem:[%s3277 + $0xc] sm:$0xf]
        %v3282 = vld [vmem:[%s3277 + $0x10] sm:$0xf]
        %v3283 = vld [vmem:[%s3277 + $0x14] sm:$0xf]
        %v3284 = vld [vmem:[%s3277 + $0x18] sm:$0xf]
        %v3285 = vld [vmem:[%s3277 + $0x1c] sm:$0xf]
        %v3294 = vunpack.c.l.b16 %v3278
        %v3295 = vunpack.c.l.b16 %v3279
        %v3296 = vunpack.c.l.b16 %v3280
        %v3297 = vunpack.c.l.b16 %v3281
        %v3298 = vunpack.c.l.b16 %v3282
        %v3299 = vunpack.c.l.b16 %v3283
        %v3300 = vunpack.c.l.b16 %v3284
        %v3301 = vunpack.c.l.b16 %v3285
        %v3302 = vpack.c.b16 %v3295, %v3294
        %v3303 = vpack.c.b16 %v3297, %v3296
        %v3304 = vpack.c.b16 %v3299, %v3298
        %v3305 = vpack.c.b16 %v3301, %v3300
        %v3311 = vsel %vm811, %v3261, 0
        %v3314 = vsel %vm811, %v3262, 0
        %v3317 = vsel %vm811, %v3263, 0
        %v3320 = vsel %vm811, %v3264, 0
        %v3323 = vsel %vm811, %v3265, 0
        %v3326 = vsel %vm811, %v3266, 0
        %v3329 = vsel %vm811, %v3267, 0
        %v3332 = vsel %vm811, %v3268, 0
        %v3335 = vsel %vm811, %v3269, 0
        %v3338 = vsel %vm811, %v3270, 0
        %v3341 = vsel %vm811, %v3271, 0
        %v3344 = vsel %vm811, %v3272, 0
        %v3347 = vsel %vm811, %v3273, 0
        %v3350 = vsel %vm811, %v3274, 0
        %v3353 = vsel %vm811, %v3275, 0
        %v3356 = vsel %vm811, %v3276, 0
        %3358 = vmatprep.subr.bf16.mxu0 0
        %3359 = vmatpush1.bf16.msra.mxu0 %v3302
        %3360 = vmatprep.subr.bf16.mxu0 0
        %3361 = vmatpush1.bf16.msra.mxu0 %v3303
        %3362 = vmatprep.subr.bf16.mxu0 0
        %3363 = vmatpush1.bf16.msra.mxu0 %v3304
        %3364 = vmatprep.subr.bf16.mxu0 0
        %3365 = vmatpush1.bf16.msra.mxu0 %v3305
        %3366 = vmatprep.subr.bf16.mxu0 0
        %3367 = vmatpush1.bf16.msra.mxu0 0
        %3368 = vmatprep.subr.bf16.mxu0 0
        %3369 = vmatpush1.bf16.msra.mxu0 0
        %3370 = vmatprep.subr.bf16.mxu0 0
        %3371 = vmatpush1.bf16.msra.mxu0 0
        %3372 = vmatprep.subr.bf16.mxu0 0
        %3373 = vmatpush1.bf16.msra.mxu0 0
        %3374 = vmatprep.subr.bf16.mxu0 0
        %3375 = vmatpush1.bf16.msra.mxu0 0
        %3376 = vmatprep.subr.bf16.mxu0 0
        %3377 = vmatpush1.bf16.msra.mxu0 0
        %3378 = vmatprep.subr.bf16.mxu0 0
        %3379 = vmatpush1.bf16.msra.mxu0 0
        %3380 = vmatprep.subr.bf16.mxu0 0
        %3381 = vmatpush1.bf16.msra.mxu0 0
        %3382 = vmatprep.subr.bf16.mxu0 0
        %3383 = vmatpush1.bf16.msra.mxu0 0
        %3384 = vmatprep.subr.bf16.mxu0 0
        %3385 = vmatpush1.bf16.msra.mxu0 0
        %3386 = vmatprep.subr.bf16.mxu0 0
        %3387 = vmatpush1.bf16.msra.mxu0 0
        %3388 = vmatprep.subr.bf16.mxu0 0
        %3389 = vmatpush1.bf16.msra.mxu0 0
        %3390 = vmatprep.mubr.bf16.mxu0 0
        %3391 = vmatmul.mubr.bf16.gmra.mrb[0].mxu0 %v3311
        %v3392 = vpop.f32.mrb[0].mxu0
        %v3393 = vadd.f32 0.0, %v3392
        %v3394 = vpop.f32.mrb[0].mxu0
        %v3395 = vpop.f32.mrb[0].mxu0
        %v3396 = vadd.f32 0.0, %v3395
        %v3397 = vpop.f32.mrb[0].mxu0
        %3398 = vmatprep.mubr.bf16.mxu0 0
        %3399 = vmatmul.mubr.bf16.gmra.mrb[0].mxu0 %v3314
        %v3400 = vpop.f32.mrb[0].mxu0
        %v3401 = vadd.f32 0.0, %v3400
        %v3402 = vpop.f32.mrb[0].mxu0
        %v3403 = vpop.f32.mrb[0].mxu0
        %v3404 = vadd.f32 0.0, %v3403
        %v3405 = vpop.f32.mrb[0].mxu0
        %3406 = vmatprep.mubr.bf16.mxu0 0
        %3407 = vmatmul.mubr.bf16.gmra.mrb[0].mxu0 %v3317
        %v3408 = vpop.f32.mrb[0].mxu0
        %v3409 = vadd.f32 0.0, %v3408
        %v3410 = vpop.f32.mrb[0].mxu0
        %v3411 = vpop.f32.mrb[0].mxu0
        %v3412 = vadd.f32 0.0, %v3411
        %v3413 = vpop.f32.mrb[0].mxu0
        %3414 = vmatprep.mubr.bf16.mxu0 0
        %3415 = vmatmul.mubr.bf16.gmra.mrb[0].mxu0 %v3320
        %v3416 = vpop.f32.mrb[0].mxu0
        %v3417 = vadd.f32 0.0, %v3416
        %v3418 = vpop.f32.mrb[0].mxu0
        %v3419 = vpop.f32.mrb[0].mxu0
        %v3420 = vadd.f32 0.0, %v3419
        %v3421 = vpop.f32.mrb[0].mxu0
        %3422 = vmatprep.mubr.bf16.mxu0 0
        %3423 = vmatmul.mubr.bf16.gmra.mrb[0].mxu0 %v3323
        %v3424 = vpop.f32.mrb[0].mxu0
        %v3425 = vadd.f32 0.0, %v3424
        %v3426 = vpop.f32.mrb[0].mxu0
        %v3427 = vpop.f32.mrb[0].mxu0
        %v3428 = vadd.f32 0.0, %v3427
        %v3429 = vpop.f32.mrb[0].mxu0
        %3430 = vmatprep.mubr.bf16.mxu0 0
        %3431 = vmatmul.mubr.bf16.gmra.mrb[0].mxu0 %v3326
        %v3432 = vpop.f32.mrb[0].mxu0
        %v3433 = vadd.f32 0.0, %v3432
        %v3434 = vpop.f32.mrb[0].mxu0
        %v3435 = vpop.f32.mrb[0].mxu0
        %v3436 = vadd.f32 0.0, %v3435
        %v3437 = vpop.f32.mrb[0].mxu0
        %3438 = vmatprep.mubr.bf16.mxu0 0
        %3439 = vmatmul.mubr.bf16.gmra.mrb[0].mxu0 %v3329
        %v3440 = vpop.f32.mrb[0].mxu0
        %v3441 = vadd.f32 0.0, %v3440
        %v3442 = vpop.f32.mrb[0].mxu0
        %v3443 = vpop.f32.mrb[0].mxu0
        %v3444 = vadd.f32 0.0, %v3443
        %v3445 = vpop.f32.mrb[0].mxu0
        %3446 = vmatprep.mubr.bf16.mxu0 0
        %3447 = vmatmul.mubr.bf16.gmra.mrb[0].mxu0 %v3332
        %v3448 = vpop.f32.mrb[0].mxu0
        %v3449 = vadd.f32 0.0, %v3448
        %v3450 = vpop.f32.mrb[0].mxu0
        %v3451 = vpop.f32.mrb[0].mxu0
        %v3452 = vadd.f32 0.0, %v3451
        %v3453 = vpop.f32.mrb[0].mxu0
        %3454 = vmatprep.mubr.bf16.mxu0 0
        %3455 = vmatmul.mubr.bf16.gmra.mrb[0].mxu0 %v3335
        %v3456 = vpop.f32.mrb[0].mxu0
        %v3457 = vadd.f32 0.0, %v3456
        %v3458 = vpop.f32.mrb[0].mxu0
        %v3459 = vpop.f32.mrb[0].mxu0
        %v3460 = vadd.f32 0.0, %v3459
        %v3461 = vpop.f32.mrb[0].mxu0
        %3462 = vmatprep.mubr.bf16.mxu0 0
        %3463 = vmatmul.mubr.bf16.gmra.mrb[0].mxu0 %v3338
        %v3464 = vpop.f32.mrb[0].mxu0
        %v3465 = vadd.f32 0.0, %v3464
        %v3466 = vpop.f32.mrb[0].mxu0
        %v3467 = vpop.f32.mrb[0].mxu0
        %v3468 = vadd.f32 0.0, %v3467
        %v3469 = vpop.f32.mrb[0].mxu0
        %3470 = vmatprep.mubr.bf16.mxu0 0
        %3471 = vmatmul.mubr.bf16.gmra.mrb[0].mxu0 %v3341
        %v3472 = vpop.f32.mrb[0].mxu0
        %v3473 = vadd.f32 0.0, %v3472
        %v3474 = vpop.f32.mrb[0].mxu0
        %v3475 = vpop.f32.mrb[0].mxu0
        %v3476 = vadd.f32 0.0, %v3475
        %v3477 = vpop.f32.mrb[0].mxu0
        %3478 = vmatprep.mubr.bf16.mxu0 0
        %3479 = vmatmul.mubr.bf16.gmra.mrb[0].mxu0 %v3344
        %v3480 = vpop.f32.mrb[0].mxu0
        %v3481 = vadd.f32 0.0, %v3480
        %v3482 = vpop.f32.mrb[0].mxu0
        %v3483 = vpop.f32.mrb[0].mxu0
        %v3484 = vadd.f32 0.0, %v3483
        %v3485 = vpop.f32.mrb[0].mxu0
        %3486 = vmatprep.mubr.bf16.mxu0 0
        %3487 = vmatmul.mubr.bf16.gmra.mrb[0].mxu0 %v3347
        %v3488 = vpop.f32.mrb[0].mxu0
        %v3489 = vadd.f32 0.0, %v3488
        %v3490 = vpop.f32.mrb[0].mxu0
        %v3491 = vpop.f32.mrb[0].mxu0
        %v3492 = vadd.f32 0.0, %v3491
        %v3493 = vpop.f32.mrb[0].mxu0
        %3494 = vmatprep.mubr.bf16.mxu0 0
        %3495 = vmatmul.mubr.bf16.gmra.mrb[0].mxu0 %v3350
        %v3496 = vpop.f32.mrb[0].mxu0
        %v3497 = vadd.f32 0.0, %v3496
        %v3498 = vpop.f32.mrb[0].mxu0
        %v3499 = vpop.f32.mrb[0].mxu0
        %v3500 = vadd.f32 0.0, %v3499
        %v3501 = vpop.f32.mrb[0].mxu0
        %3502 = vmatprep.mubr.bf16.mxu0 0
        %3503 = vmatmul.mubr.bf16.gmra.mrb[0].mxu0 %v3353
        %v3504 = vpop.f32.mrb[0].mxu0
        %v3505 = vadd.f32 0.0, %v3504
        %v3506 = vpop.f32.mrb[0].mxu0
        %v3507 = vpop.f32.mrb[0].mxu0
        %v3508 = vadd.f32 0.0, %v3507
        %v3509 = vpop.f32.mrb[0].mxu0
        %3510 = vmatprep.mubr.bf16.mxu0 0
        %3511 = vmatmul.mubr.bf16.gmra.mrb[0].mxu0 %v3356
        %v3512 = vpop.f32.mrb[0].mxu0
        %v3513 = vadd.f32 0.0, %v3512
        %v3514 = vpop.f32.mrb[0].mxu0
        %v3515 = vpop.f32.mrb[0].mxu0
        %v3516 = vadd.f32 0.0, %v3515
        %v3517 = vpop.f32.mrb[0].mxu0
        %3518 = vdwg.mxu0
        %v3519 = vadd.f32 %v3037, %v3393
        %v3520 = vadd.f32 %v3038, %v3396
        %v3521 = vadd.f32 %v3039, %v3401
        %v3522 = vadd.f32 %v3040, %v3404
        %v3523 = vadd.f32 %v3041, %v3409
        %v3524 = vadd.f32 %v3042, %v3412
        %v3525 = vadd.f32 %v3043, %v3417
        %v3526 = vadd.f32 %v3044, %v3420
        %v3527 = vadd.f32 %v3045, %v3425
        %v3528 = vadd.f32 %v3046, %v3428
        %v3529 = vadd.f32 %v3047, %v3433
        %v3530 = vadd.f32 %v3048, %v3436
        %v3531 = vadd.f32 %v3049, %v3441
        %v3532 = vadd.f32 %v3050, %v3444
        %v3533 = vadd.f32 %v3051, %v3449
        %v3534 = vadd.f32 %v3052, %v3452
        %v3535 = vadd.f32 %v3053, %v3457
        %v3536 = vadd.f32 %v3054, %v3460
        %v3537 = vadd.f32 %v3055, %v3465
        %v3538 = vadd.f32 %v3056, %v3468
        %v3539 = vadd.f32 %v3057, %v3473
        %v3540 = vadd.f32 %v3058, %v3476
        %v3541 = vadd.f32 %v3059, %v3481
        %v3542 = vadd.f32 %v3060, %v3484
        %v3543 = vadd.f32 %v3061, %v3489
        %v3544 = vadd.f32 %v3062, %v3492
        %v3545 = vadd.f32 %v3063, %v3497
        %v3546 = vadd.f32 %v3064, %v3500
        %v3547 = vadd.f32 %v3065, %v3505
        %v3548 = vadd.f32 %v3066, %v3508
        %v3549 = vadd.f32 %v3067, %v3513
        %v3550 = vadd.f32 %v3068, %v3516
        %v3551 = vld [vmem:[#allocation2 + $0x2f] sm:$0xff]
        %v3552 = vld [vmem:[#allocation2 + $0x37] sm:$0xff]
        %v3553 = vld [vmem:[#allocation2 + $0x3f] sm:$0xff]
        %v3554 = vld [vmem:[#allocation2 + $0x47] sm:$0xff]
        %v3555 = vld [vmem:[#allocation2 + $0x4f] sm:$0xff]
        %v3556 = vld [vmem:[#allocation2 + $0x57] sm:$0xff]
        %v3557 = vld [vmem:[#allocation2 + $0x5f] sm:$0xff]
        %v3558 = vld [vmem:[#allocation2 + $0x67] sm:$0xff]
        %v3559 = vld [vmem:[#allocation2 + $0x6f] sm:$0xff]
        %v3560 = vld [vmem:[#allocation2 + $0x77] sm:$0xff]
        %v3561 = vld [vmem:[#allocation2 + $0x7f] sm:$0xff]
        %v3562 = vld [vmem:[#allocation2 + $0x87] sm:$0xff]
        %v3563 = vld [vmem:[#allocation2 + $0x8f] sm:$0xff]
        %v3564 = vld [vmem:[#allocation2 + $0x97] sm:$0xff]
        %v3565 = vld [vmem:[#allocation2 + $0x9f] sm:$0xff]
        %v3566 = vld [vmem:[#allocation2 + $0xa7] sm:$0xff]
        %v3567 = vld [vmem:[#allocation2 + $0xaf] sm:$0xff]
        %v3568 = vld [vmem:[#allocation2 + $0xb7] sm:$0xff]
        %v3569 = vld [vmem:[#allocation2 + $0xbf] sm:$0xff]
        %v3570 = vld [vmem:[#allocation2 + $0xc7] sm:$0xff]
        %v3571 = vld [vmem:[#allocation2 + $0xcf] sm:$0xff]
        %v3572 = vld [vmem:[#allocation2 + $0xd7] sm:$0xff]
        %v3573 = vld [vmem:[#allocation2 + $0xdf] sm:$0xff]
        %v3574 = vld [vmem:[#allocation2 + $0xe7] sm:$0xff]
        %v3575 = vld [vmem:[#allocation2 + $0xef] sm:$0xff]
        %v3576 = vld [vmem:[#allocation2 + $0xf7] sm:$0xff]
        %v3577 = vld [vmem:[#allocation2 + $0xff] sm:$0xff]
        %v3578 = vld [vmem:[#allocation2 + $0x107] sm:$0xff]
        %v3579 = vld [vmem:[#allocation2 + $0x10f] sm:$0xff]
        %v3580 = vld [vmem:[#allocation2 + $0x117] sm:$0xff]
        %v3581 = vld [vmem:[#allocation2 + $0x11f] sm:$0xff]
        %v3582 = vld [vmem:[#allocation2 + $0x127] sm:$0xff]
        %3583 = vset.pattern.permute.xlu0 6
        %3584 = vperm.xlu0 %3583, %v852
        %v3585 = vpop.permute.xlu0 %3584
        %3587 = vset.pattern.permute.xlu0 6
        %3588 = vperm.xlu0 %3587, %v853
        %v3589 = vpop.permute.xlu0 %3588
        %3591 = vset.pattern.permute.xlu0 6
        %3592 = vperm.xlu0 %3591, %v854
        %v3593 = vpop.permute.xlu0 %3592
        %3595 = vset.pattern.permute.xlu0 6
        %3596 = vperm.xlu0 %3595, %v855
        %v3597 = vpop.permute.xlu0 %3596
        %3599 = vset.pattern.permute.xlu0 6
        %3600 = vperm.xlu0 %3599, %v856
        %v3601 = vpop.permute.xlu0 %3600
        %3603 = vset.pattern.permute.xlu0 6
        %3604 = vperm.xlu0 %3603, %v857
        %v3605 = vpop.permute.xlu0 %3604
        %3607 = vset.pattern.permute.xlu0 6
        %3608 = vperm.xlu0 %3607, %v858
        %v3609 = vpop.permute.xlu0 %3608
        %3611 = vset.pattern.permute.xlu0 6
        %3612 = vperm.xlu0 %3611, %v859
        %v3613 = vpop.permute.xlu0 %3612
        %3615 = vset.pattern.permute.xlu0 6
        %3616 = vperm.xlu0 %3615, %v860
        %v3617 = vpop.permute.xlu0 %3616
        %3619 = vset.pattern.permute.xlu0 6
        %3620 = vperm.xlu0 %3619, %v861
        %v3621 = vpop.permute.xlu0 %3620
        %3623 = vset.pattern.permute.xlu0 6
        %3624 = vperm.xlu0 %3623, %v862
        %v3625 = vpop.permute.xlu0 %3624
        %3627 = vset.pattern.permute.xlu0 6
        %3628 = vperm.xlu0 %3627, %v863
        %v3629 = vpop.permute.xlu0 %3628
        %3631 = vset.pattern.permute.xlu0 6
        %3632 = vperm.xlu0 %3631, %v864
        %v3633 = vpop.permute.xlu0 %3632
        %3635 = vset.pattern.permute.xlu0 6
        %3636 = vperm.xlu0 %3635, %v865
        %v3637 = vpop.permute.xlu0 %3636
        %3639 = vset.pattern.permute.xlu0 6
        %3640 = vperm.xlu0 %3639, %v866
        %v3641 = vpop.permute.xlu0 %3640
        %3643 = vset.pattern.permute.xlu0 6
        %3644 = vperm.xlu0 %3643, %v867
        %v3645 = vpop.permute.xlu0 %3644
        %3647 = vset.pattern.permute.xlu0 6
        %3648 = vperm.xlu0 %3647, %v868
        %v3649 = vpop.permute.xlu0 %3648
        %3651 = vset.pattern.permute.xlu0 6
        %3652 = vperm.xlu0 %3651, %v869
        %v3653 = vpop.permute.xlu0 %3652
        %3655 = vset.pattern.permute.xlu0 6
        %3656 = vperm.xlu0 %3655, %v870
        %v3657 = vpop.permute.xlu0 %3656
        %3659 = vset.pattern.permute.xlu0 6
        %3660 = vperm.xlu0 %3659, %v871
        %v3661 = vpop.permute.xlu0 %3660
        %3663 = vset.pattern.permute.xlu0 6
        %3664 = vperm.xlu0 %3663, %v872
        %v3665 = vpop.permute.xlu0 %3664
        %3667 = vset.pattern.permute.xlu0 6
        %3668 = vperm.xlu0 %3667, %v873
        %v3669 = vpop.permute.xlu0 %3668
        %3671 = vset.pattern.permute.xlu0 6
        %3672 = vperm.xlu0 %3671, %v874
        %v3673 = vpop.permute.xlu0 %3672
        %3675 = vset.pattern.permute.xlu0 6
        %3676 = vperm.xlu0 %3675, %v875
        %v3677 = vpop.permute.xlu0 %3676
        %3679 = vset.pattern.permute.xlu0 6
        %3680 = vperm.xlu0 %3679, %v876
        %v3681 = vpop.permute.xlu0 %3680
        %3683 = vset.pattern.permute.xlu0 6
        %3684 = vperm.xlu0 %3683, %v877
        %v3685 = vpop.permute.xlu0 %3684
        %3687 = vset.pattern.permute.xlu0 6
        %3688 = vperm.xlu0 %3687, %v878
        %v3689 = vpop.permute.xlu0 %3688
        %3691 = vset.pattern.permute.xlu0 6
        %3692 = vperm.xlu0 %3691, %v879
        %v3693 = vpop.permute.xlu0 %3692
        %3695 = vset.pattern.permute.xlu0 6
        %3696 = vperm.xlu0 %3695, %v880
        %v3697 = vpop.permute.xlu0 %3696
        %3699 = vset.pattern.permute.xlu0 6
        %3700 = vperm.xlu0 %3699, %v881
        %v3701 = vpop.permute.xlu0 %3700
        %3703 = vset.pattern.permute.xlu0 6
        %3704 = vperm.xlu0 %3703, %v882
        %v3705 = vpop.permute.xlu0 %3704
        %3707 = vset.pattern.permute.xlu0 6
        %3708 = vperm.xlu0 %3707, %v883
        %v3709 = vpop.permute.xlu0 %3708
        %v3711 = vmul.f32 %v3551, %v3585
        %v3712 = vmul.f32 %v3552, %v3589
        %v3713 = vmul.f32 %v3553, %v3593
        %v3714 = vmul.f32 %v3554, %v3597
        %v3715 = vmul.f32 %v3555, %v3601
        %v3716 = vmul.f32 %v3556, %v3605
        %v3717 = vmul.f32 %v3557, %v3609
        %v3718 = vmul.f32 %v3558, %v3613
        %v3719 = vmul.f32 %v3559, %v3617
        %v3720 = vmul.f32 %v3560, %v3621
        %v3721 = vmul.f32 %v3561, %v3625
        %v3722 = vmul.f32 %v3562, %v3629
        %v3723 = vmul.f32 %v3563, %v3633
        %v3724 = vmul.f32 %v3564, %v3637
        %v3725 = vmul.f32 %v3565, %v3641
        %v3726 = vmul.f32 %v3566, %v3645
        %v3727 = vmul.f32 %v3567, %v3649
        %v3728 = vmul.f32 %v3568, %v3653
        %v3729 = vmul.f32 %v3569, %v3657
        %v3730 = vmul.f32 %v3570, %v3661
        %v3731 = vmul.f32 %v3571, %v3665
        %v3732 = vmul.f32 %v3572, %v3669
        %v3733 = vmul.f32 %v3573, %v3673
        %v3734 = vmul.f32 %v3574, %v3677
        %v3735 = vmul.f32 %v3575, %v3681
        %v3736 = vmul.f32 %v3576, %v3685
        %v3737 = vmul.f32 %v3577, %v3689
        %v3738 = vmul.f32 %v3578, %v3693
        %v3739 = vmul.f32 %v3579, %v3697
        %v3740 = vmul.f32 %v3580, %v3701
        %v3741 = vmul.f32 %v3581, %v3705
        %v3742 = vmul.f32 %v3582, %v3709
        %v3743 = vpack.c.bf16 %v3712, %v3711
        %v3744 = vpack.c.bf16 %v3714, %v3713
        %v3745 = vpack.c.bf16 %v3716, %v3715
        %v3746 = vpack.c.bf16 %v3718, %v3717
        %v3747 = vpack.c.bf16 %v3720, %v3719
        %v3748 = vpack.c.bf16 %v3722, %v3721
        %v3749 = vpack.c.bf16 %v3724, %v3723
        %v3750 = vpack.c.bf16 %v3726, %v3725
        %v3751 = vpack.c.bf16 %v3728, %v3727
        %v3752 = vpack.c.bf16 %v3730, %v3729
        %v3753 = vpack.c.bf16 %v3732, %v3731
        %v3754 = vpack.c.bf16 %v3734, %v3733
        %v3755 = vpack.c.bf16 %v3736, %v3735
        %v3756 = vpack.c.bf16 %v3738, %v3737
        %v3757 = vpack.c.bf16 %v3740, %v3739
        %v3758 = vpack.c.bf16 %v3742, %v3741
        %s3759 = scalar_lea.vmem %s4, 192
        %v3760 = vld [vmem:[%s3759] sm:$0xf]
        %v3761 = vld [vmem:[%s3759 + $0x4] sm:$0xf]
        %v3762 = vld [vmem:[%s3759 + $0x8] sm:$0xf]
        %v3763 = vld [vmem:[%s3759 + $0xc] sm:$0xf]
        %v3764 = vld [vmem:[%s3759 + $0x10] sm:$0xf]
        %v3765 = vld [vmem:[%s3759 + $0x14] sm:$0xf]
        %v3766 = vld [vmem:[%s3759 + $0x18] sm:$0xf]
        %v3767 = vld [vmem:[%s3759 + $0x1c] sm:$0xf]
        %v3776 = vunpack.c.l.b16 %v3760
        %v3777 = vunpack.c.l.b16 %v3761
        %v3778 = vunpack.c.l.b16 %v3762
        %v3779 = vunpack.c.l.b16 %v3763
        %v3780 = vunpack.c.l.b16 %v3764
        %v3781 = vunpack.c.l.b16 %v3765
        %v3782 = vunpack.c.l.b16 %v3766
        %v3783 = vunpack.c.l.b16 %v3767
        %v3784 = vpack.c.b16 %v3777, %v3776
        %v3785 = vpack.c.b16 %v3779, %v3778
        %v3786 = vpack.c.b16 %v3781, %v3780
        %v3787 = vpack.c.b16 %v3783, %v3782
        %v3793 = vsel %vm811, %v3743, 0
        %v3796 = vsel %vm811, %v3744, 0
        %v3799 = vsel %vm811, %v3745, 0
        %v3802 = vsel %vm811, %v3746, 0
        %v3805 = vsel %vm811, %v3747, 0
        %v3808 = vsel %vm811, %v3748, 0
        %v3811 = vsel %vm811, %v3749, 0
        %v3814 = vsel %vm811, %v3750, 0
        %v3817 = vsel %vm811, %v3751, 0
        %v3820 = vsel %vm811, %v3752, 0
        %v3823 = vsel %vm811, %v3753, 0
        %v3826 = vsel %vm811, %v3754, 0
        %v3829 = vsel %vm811, %v3755, 0
        %v3832 = vsel %vm811, %v3756, 0
        %v3835 = vsel %vm811, %v3757, 0
        %v3838 = vsel %vm811, %v3758, 0
        %3840 = vmatprep.subr.bf16.mxu0 0
        %3841 = vmatpush1.bf16.msra.mxu0 %v3784
        %3842 = vmatprep.subr.bf16.mxu0 0
        %3843 = vmatpush1.bf16.msra.mxu0 %v3785
        %3844 = vmatprep.subr.bf16.mxu0 0
        %3845 = vmatpush1.bf16.msra.mxu0 %v3786
        %3846 = vmatprep.subr.bf16.mxu0 0
        %3847 = vmatpush1.bf16.msra.mxu0 %v3787
        %3848 = vmatprep.subr.bf16.mxu0 0
        %3849 = vmatpush1.bf16.msra.mxu0 0
        %3850 = vmatprep.subr.bf16.mxu0 0
        %3851 = vmatpush1.bf16.msra.mxu0 0
        %3852 = vmatprep.subr.bf16.mxu0 0
        %3853 = vmatpush1.bf16.msra.mxu0 0
        %3854 = vmatprep.subr.bf16.mxu0 0
        %3855 = vmatpush1.bf16.msra.mxu0 0
        %3856 = vmatprep.subr.bf16.mxu0 0
        %3857 = vmatpush1.bf16.msra.mxu0 0
        %3858 = vmatprep.subr.bf16.mxu0 0
        %3859 = vmatpush1.bf16.msra.mxu0 0
        %3860 = vmatprep.subr.bf16.mxu0 0
        %3861 = vmatpush1.bf16.msra.mxu0 0
        %3862 = vmatprep.subr.bf16.mxu0 0
        %3863 = vmatpush1.bf16.msra.mxu0 0
        %3864 = vmatprep.subr.bf16.mxu0 0
        %3865 = vmatpush1.bf16.msra.mxu0 0
        %3866 = vmatprep.subr.bf16.mxu0 0
        %3867 = vmatpush1.bf16.msra.mxu0 0
        %3868 = vmatprep.subr.bf16.mxu0 0
        %3869 = vmatpush1.bf16.msra.mxu0 0
        %3870 = vmatprep.subr.bf16.mxu0 0
        %3871 = vmatpush1.bf16.msra.mxu0 0
        %3872 = vmatprep.mubr.bf16.mxu0 0
        %3873 = vmatmul.mubr.bf16.gmra.mrb[0].mxu0 %v3793
        %v3874 = vpop.f32.mrb[0].mxu0
        %v3875 = vadd.f32 0.0, %v3874
        %v3876 = vpop.f32.mrb[0].mxu0
        %v3877 = vpop.f32.mrb[0].mxu0
        %v3878 = vadd.f32 0.0, %v3877
        %v3879 = vpop.f32.mrb[0].mxu0
        %3880 = vmatprep.mubr.bf16.mxu0 0
        %3881 = vmatmul.mubr.bf16.gmra.mrb[0].mxu0 %v3796
        %v3882 = vpop.f32.mrb[0].mxu0
        %v3883 = vadd.f32 0.0, %v3882
        %v3884 = vpop.f32.mrb[0].mxu0
        %v3885 = vpop.f32.mrb[0].mxu0
        %v3886 = vadd.f32 0.0, %v3885
        %v3887 = vpop.f32.mrb[0].mxu0
        %3888 = vmatprep.mubr.bf16.mxu0 0
        %3889 = vmatmul.mubr.bf16.gmra.mrb[0].mxu0 %v3799
        %v3890 = vpop.f32.mrb[0].mxu0
        %v3891 = vadd.f32 0.0, %v3890
        %v3892 = vpop.f32.mrb[0].mxu0
        %v3893 = vpop.f32.mrb[0].mxu0
        %v3894 = vadd.f32 0.0, %v3893
        %v3895 = vpop.f32.mrb[0].mxu0
        %3896 = vmatprep.mubr.bf16.mxu0 0
        %3897 = vmatmul.mubr.bf16.gmra.mrb[0].mxu0 %v3802
        %v3898 = vpop.f32.mrb[0].mxu0
        %v3899 = vadd.f32 0.0, %v3898
        %v3900 = vpop.f32.mrb[0].mxu0
        %v3901 = vpop.f32.mrb[0].mxu0
        %v3902 = vadd.f32 0.0, %v3901
        %v3903 = vpop.f32.mrb[0].mxu0
        %3904 = vmatprep.mubr.bf16.mxu0 0
        %3905 = vmatmul.mubr.bf16.gmra.mrb[0].mxu0 %v3805
        %v3906 = vpop.f32.mrb[0].mxu0
        %v3907 = vadd.f32 0.0, %v3906
        %v3908 = vpop.f32.mrb[0].mxu0
        %v3909 = vpop.f32.mrb[0].mxu0
        %v3910 = vadd.f32 0.0, %v3909
        %v3911 = vpop.f32.mrb[0].mxu0
        %3912 = vmatprep.mubr.bf16.mxu0 0
        %3913 = vmatmul.mubr.bf16.gmra.mrb[0].mxu0 %v3808
        %v3914 = vpop.f32.mrb[0].mxu0
        %v3915 = vadd.f32 0.0, %v3914
        %v3916 = vpop.f32.mrb[0].mxu0
        %v3917 = vpop.f32.mrb[0].mxu0
        %v3918 = vadd.f32 0.0, %v3917
        %v3919 = vpop.f32.mrb[0].mxu0
        %3920 = vmatprep.mubr.bf16.mxu0 0
        %3921 = vmatmul.mubr.bf16.gmra.mrb[0].mxu0 %v3811
        %v3922 = vpop.f32.mrb[0].mxu0
        %v3923 = vadd.f32 0.0, %v3922
        %v3924 = vpop.f32.mrb[0].mxu0
        %v3925 = vpop.f32.mrb[0].mxu0
        %v3926 = vadd.f32 0.0, %v3925
        %v3927 = vpop.f32.mrb[0].mxu0
        %3928 = vmatprep.mubr.bf16.mxu0 0
        %3929 = vmatmul.mubr.bf16.gmra.mrb[0].mxu0 %v3814
        %v3930 = vpop.f32.mrb[0].mxu0
        %v3931 = vadd.f32 0.0, %v3930
        %v3932 = vpop.f32.mrb[0].mxu0
        %v3933 = vpop.f32.mrb[0].mxu0
        %v3934 = vadd.f32 0.0, %v3933
        %v3935 = vpop.f32.mrb[0].mxu0
        %3936 = vmatprep.mubr.bf16.mxu0 0
        %3937 = vmatmul.mubr.bf16.gmra.mrb[0].mxu0 %v3817
        %v3938 = vpop.f32.mrb[0].mxu0
        %v3939 = vadd.f32 0.0, %v3938
        %v3940 = vpop.f32.mrb[0].mxu0
        %v3941 = vpop.f32.mrb[0].mxu0
        %v3942 = vadd.f32 0.0, %v3941
        %v3943 = vpop.f32.mrb[0].mxu0
        %3944 = vmatprep.mubr.bf16.mxu0 0
        %3945 = vmatmul.mubr.bf16.gmra.mrb[0].mxu0 %v3820
        %v3946 = vpop.f32.mrb[0].mxu0
        %v3947 = vadd.f32 0.0, %v3946
        %v3948 = vpop.f32.mrb[0].mxu0
        %v3949 = vpop.f32.mrb[0].mxu0
        %v3950 = vadd.f32 0.0, %v3949
        %v3951 = vpop.f32.mrb[0].mxu0
        %3952 = vmatprep.mubr.bf16.mxu0 0
        %3953 = vmatmul.mubr.bf16.gmra.mrb[0].mxu0 %v3823
        %v3954 = vpop.f32.mrb[0].mxu0
        %v3955 = vadd.f32 0.0, %v3954
        %v3956 = vpop.f32.mrb[0].mxu0
        %v3957 = vpop.f32.mrb[0].mxu0
        %v3958 = vadd.f32 0.0, %v3957
        %v3959 = vpop.f32.mrb[0].mxu0
        %3960 = vmatprep.mubr.bf16.mxu0 0
        %3961 = vmatmul.mubr.bf16.gmra.mrb[0].mxu0 %v3826
        %v3962 = vpop.f32.mrb[0].mxu0
        %v3963 = vadd.f32 0.0, %v3962
        %v3964 = vpop.f32.mrb[0].mxu0
        %v3965 = vpop.f32.mrb[0].mxu0
        %v3966 = vadd.f32 0.0, %v3965
        %v3967 = vpop.f32.mrb[0].mxu0
        %3968 = vmatprep.mubr.bf16.mxu0 0
        %3969 = vmatmul.mubr.bf16.gmra.mrb[0].mxu0 %v3829
        %v3970 = vpop.f32.mrb[0].mxu0
        %v3971 = vadd.f32 0.0, %v3970
        %v3972 = vpop.f32.mrb[0].mxu0
        %v3973 = vpop.f32.mrb[0].mxu0
        %v3974 = vadd.f32 0.0, %v3973
        %v3975 = vpop.f32.mrb[0].mxu0
        %3976 = vmatprep.mubr.bf16.mxu0 0
        %3977 = vmatmul.mubr.bf16.gmra.mrb[0].mxu0 %v3832
        %v3978 = vpop.f32.mrb[0].mxu0
        %v3979 = vadd.f32 0.0, %v3978
        %v3980 = vpop.f32.mrb[0].mxu0
        %v3981 = vpop.f32.mrb[0].mxu0
        %v3982 = vadd.f32 0.0, %v3981
        %v3983 = vpop.f32.mrb[0].mxu0
        %3984 = vmatprep.mubr.bf16.mxu0 0
        %3985 = vmatmul.mubr.bf16.gmra.mrb[0].mxu0 %v3835
        %v3986 = vpop.f32.mrb[0].mxu0
        %v3987 = vadd.f32 0.0, %v3986
        %v3988 = vpop.f32.mrb[0].mxu0
        %v3989 = vpop.f32.mrb[0].mxu0
        %v3990 = vadd.f32 0.0, %v3989
        %v3991 = vpop.f32.mrb[0].mxu0
        %3992 = vmatprep.mubr.bf16.mxu0 0
        %3993 = vmatmul.mubr.bf16.gmra.mrb[0].mxu0 %v3838
        %v3994 = vpop.f32.mrb[0].mxu0
        %v3995 = vadd.f32 0.0, %v3994
        %v3996 = vpop.f32.mrb[0].mxu0
        %v3997 = vpop.f32.mrb[0].mxu0
        %v3998 = vadd.f32 0.0, %v3997
        %v3999 = vpop.f32.mrb[0].mxu0
        %4000 = vdwg.mxu0
        %v4001 = vadd.f32 %v3519, %v3875
        %v4002 = vadd.f32 %v3520, %v3878
        %v4003 = vadd.f32 %v3521, %v3883
        %v4004 = vadd.f32 %v3522, %v3886
        %v4005 = vadd.f32 %v3523, %v3891
        %v4006 = vadd.f32 %v3524, %v3894
        %v4007 = vadd.f32 %v3525, %v3899
        %v4008 = vadd.f32 %v3526, %v3902
        %v4009 = vadd.f32 %v3527, %v3907
        %v4010 = vadd.f32 %v3528, %v3910
        %v4011 = vadd.f32 %v3529, %v3915
        %v4012 = vadd.f32 %v3530, %v3918
        %v4013 = vadd.f32 %v3531, %v3923
        %v4014 = vadd.f32 %v3532, %v3926
        %v4015 = vadd.f32 %v3533, %v3931
        %v4016 = vadd.f32 %v3534, %v3934
        %v4017 = vadd.f32 %v3535, %v3939
        %v4018 = vadd.f32 %v3536, %v3942
        %v4019 = vadd.f32 %v3537, %v3947
        %v4020 = vadd.f32 %v3538, %v3950
        %v4021 = vadd.f32 %v3539, %v3955
        %v4022 = vadd.f32 %v3540, %v3958
        %v4023 = vadd.f32 %v3541, %v3963
        %v4024 = vadd.f32 %v3542, %v3966
        %v4025 = vadd.f32 %v3543, %v3971
        %v4026 = vadd.f32 %v3544, %v3974
        %v4027 = vadd.f32 %v3545, %v3979
        %v4028 = vadd.f32 %v3546, %v3982
        %v4029 = vadd.f32 %v3547, %v3987
        %v4030 = vadd.f32 %v3548, %v3990
        %v4031 = vadd.f32 %v3549, %v3995
        %v4032 = vadd.f32 %v3550, %v3998
        %v4033 = vld [vmem:[#allocation2 + $0x30] sm:$0xff]
        %v4034 = vld [vmem:[#allocation2 + $0x38] sm:$0xff]
        %v4035 = vld [vmem:[#allocation2 + $0x40] sm:$0xff]
        %v4036 = vld [vmem:[#allocation2 + $0x48] sm:$0xff]
        %v4037 = vld [vmem:[#allocation2 + $0x50] sm:$0xff]
        %v4038 = vld [vmem:[#allocation2 + $0x58] sm:$0xff]
        %v4039 = vld [vmem:[#allocation2 + $0x60] sm:$0xff]
        %v4040 = vld [vmem:[#allocation2 + $0x68] sm:$0xff]
        %v4041 = vld [vmem:[#allocation2 + $0x70] sm:$0xff]
        %v4042 = vld [vmem:[#allocation2 + $0x78] sm:$0xff]
        %v4043 = vld [vmem:[#allocation2 + $0x80] sm:$0xff]
        %v4044 = vld [vmem:[#allocation2 + $0x88] sm:$0xff]
        %v4045 = vld [vmem:[#allocation2 + $0x90] sm:$0xff]
        %v4046 = vld [vmem:[#allocation2 + $0x98] sm:$0xff]
        %v4047 = vld [vmem:[#allocation2 + $0xa0] sm:$0xff]
        %v4048 = vld [vmem:[#allocation2 + $0xa8] sm:$0xff]
        %v4049 = vld [vmem:[#allocation2 + $0xb0] sm:$0xff]
        %v4050 = vld [vmem:[#allocation2 + $0xb8] sm:$0xff]
        %v4051 = vld [vmem:[#allocation2 + $0xc0] sm:$0xff]
        %v4052 = vld [vmem:[#allocation2 + $0xc8] sm:$0xff]
        %v4053 = vld [vmem:[#allocation2 + $0xd0] sm:$0xff]
        %v4054 = vld [vmem:[#allocation2 + $0xd8] sm:$0xff]
        %v4055 = vld [vmem:[#allocation2 + $0xe0] sm:$0xff]
        %v4056 = vld [vmem:[#allocation2 + $0xe8] sm:$0xff]
        %v4057 = vld [vmem:[#allocation2 + $0xf0] sm:$0xff]
        %v4058 = vld [vmem:[#allocation2 + $0xf8] sm:$0xff]
        %v4059 = vld [vmem:[#allocation2 + $0x100] sm:$0xff]
        %v4060 = vld [vmem:[#allocation2 + $0x108] sm:$0xff]
        %v4061 = vld [vmem:[#allocation2 + $0x110] sm:$0xff]
        %v4062 = vld [vmem:[#allocation2 + $0x118] sm:$0xff]
        %v4063 = vld [vmem:[#allocation2 + $0x120] sm:$0xff]
        %v4064 = vld [vmem:[#allocation2 + $0x128] sm:$0xff]
        %4065 = vset.pattern.permute.xlu0 7
        %4066 = vperm.xlu0 %4065, %v852
        %v4067 = vpop.permute.xlu0 %4066
        %4069 = vset.pattern.permute.xlu0 7
        %4070 = vperm.xlu0 %4069, %v853
        %v4071 = vpop.permute.xlu0 %4070
        %4073 = vset.pattern.permute.xlu0 7
        %4074 = vperm.xlu0 %4073, %v854
        %v4075 = vpop.permute.xlu0 %4074
        %4077 = vset.pattern.permute.xlu0 7
        %4078 = vperm.xlu0 %4077, %v855
        %v4079 = vpop.permute.xlu0 %4078
        %4081 = vset.pattern.permute.xlu0 7
        %4082 = vperm.xlu0 %4081, %v856
        %v4083 = vpop.permute.xlu0 %4082
        %4085 = vset.pattern.permute.xlu0 7
        %4086 = vperm.xlu0 %4085, %v857
        %v4087 = vpop.permute.xlu0 %4086
        %4089 = vset.pattern.permute.xlu0 7
        %4090 = vperm.xlu0 %4089, %v858
        %v4091 = vpop.permute.xlu0 %4090
        %4093 = vset.pattern.permute.xlu0 7
        %4094 = vperm.xlu0 %4093, %v859
        %v4095 = vpop.permute.xlu0 %4094
        %4097 = vset.pattern.permute.xlu0 7
        %4098 = vperm.xlu0 %4097, %v860
        %v4099 = vpop.permute.xlu0 %4098
        %4101 = vset.pattern.permute.xlu0 7
        %4102 = vperm.xlu0 %4101, %v861
        %v4103 = vpop.permute.xlu0 %4102
        %4105 = vset.pattern.permute.xlu0 7
        %4106 = vperm.xlu0 %4105, %v862
        %v4107 = vpop.permute.xlu0 %4106
        %4109 = vset.pattern.permute.xlu0 7
        %4110 = vperm.xlu0 %4109, %v863
        %v4111 = vpop.permute.xlu0 %4110
        %4113 = vset.pattern.permute.xlu0 7
        %4114 = vperm.xlu0 %4113, %v864
        %v4115 = vpop.permute.xlu0 %4114
        %4117 = vset.pattern.permute.xlu0 7
        %4118 = vperm.xlu0 %4117, %v865
        %v4119 = vpop.permute.xlu0 %4118
        %4121 = vset.pattern.permute.xlu0 7
        %4122 = vperm.xlu0 %4121, %v866
        %v4123 = vpop.permute.xlu0 %4122
        %4125 = vset.pattern.permute.xlu0 7
        %4126 = vperm.xlu0 %4125, %v867
        %v4127 = vpop.permute.xlu0 %4126
        %4129 = vset.pattern.permute.xlu0 7
        %4130 = vperm.xlu0 %4129, %v868
        %v4131 = vpop.permute.xlu0 %4130
        %4133 = vset.pattern.permute.xlu0 7
        %4134 = vperm.xlu0 %4133, %v869
        %v4135 = vpop.permute.xlu0 %4134
        %4137 = vset.pattern.permute.xlu0 7
        %4138 = vperm.xlu0 %4137, %v870
        %v4139 = vpop.permute.xlu0 %4138
        %4141 = vset.pattern.permute.xlu0 7
        %4142 = vperm.xlu0 %4141, %v871
        %v4143 = vpop.permute.xlu0 %4142
        %4145 = vset.pattern.permute.xlu0 7
        %4146 = vperm.xlu0 %4145, %v872
        %v4147 = vpop.permute.xlu0 %4146
        %4149 = vset.pattern.permute.xlu0 7
        %4150 = vperm.xlu0 %4149, %v873
        %v4151 = vpop.permute.xlu0 %4150
        %4153 = vset.pattern.permute.xlu0 7
        %4154 = vperm.xlu0 %4153, %v874
        %v4155 = vpop.permute.xlu0 %4154
        %4157 = vset.pattern.permute.xlu0 7
        %4158 = vperm.xlu0 %4157, %v875
        %v4159 = vpop.permute.xlu0 %4158
        %4161 = vset.pattern.permute.xlu0 7
        %4162 = vperm.xlu0 %4161, %v876
        %v4163 = vpop.permute.xlu0 %4162
        %4165 = vset.pattern.permute.xlu0 7
        %4166 = vperm.xlu0 %4165, %v877
        %v4167 = vpop.permute.xlu0 %4166
        %4169 = vset.pattern.permute.xlu0 7
        %4170 = vperm.xlu0 %4169, %v878
        %v4171 = vpop.permute.xlu0 %4170
        %4173 = vset.pattern.permute.xlu0 7
        %4174 = vperm.xlu0 %4173, %v879
        %v4175 = vpop.permute.xlu0 %4174
        %4177 = vset.pattern.permute.xlu0 7
        %4178 = vperm.xlu0 %4177, %v880
        %v4179 = vpop.permute.xlu0 %4178
        %4181 = vset.pattern.permute.xlu0 7
        %4182 = vperm.xlu0 %4181, %v881
        %v4183 = vpop.permute.xlu0 %4182
        %4185 = vset.pattern.permute.xlu0 7
        %4186 = vperm.xlu0 %4185, %v882
        %v4187 = vpop.permute.xlu0 %4186
        %4189 = vset.pattern.permute.xlu0 7
        %4190 = vperm.xlu0 %4189, %v883
        %v4191 = vpop.permute.xlu0 %4190
        %v4193 = vmul.f32 %v4033, %v4067
        %v4194 = vmul.f32 %v4034, %v4071
        %v4195 = vmul.f32 %v4035, %v4075
        %v4196 = vmul.f32 %v4036, %v4079
        %v4197 = vmul.f32 %v4037, %v4083
        %v4198 = vmul.f32 %v4038, %v4087
        %v4199 = vmul.f32 %v4039, %v4091
        %v4200 = vmul.f32 %v4040, %v4095
        %v4201 = vmul.f32 %v4041, %v4099
        %v4202 = vmul.f32 %v4042, %v4103
        %v4203 = vmul.f32 %v4043, %v4107
        %v4204 = vmul.f32 %v4044, %v4111
        %v4205 = vmul.f32 %v4045, %v4115
        %v4206 = vmul.f32 %v4046, %v4119
        %v4207 = vmul.f32 %v4047, %v4123
        %v4208 = vmul.f32 %v4048, %v4127
        %v4209 = vmul.f32 %v4049, %v4131
        %v4210 = vmul.f32 %v4050, %v4135
        %v4211 = vmul.f32 %v4051, %v4139
        %v4212 = vmul.f32 %v4052, %v4143
        %v4213 = vmul.f32 %v4053, %v4147
        %v4214 = vmul.f32 %v4054, %v4151
        %v4215 = vmul.f32 %v4055, %v4155
        %v4216 = vmul.f32 %v4056, %v4159
        %v4217 = vmul.f32 %v4057, %v4163
        %v4218 = vmul.f32 %v4058, %v4167
        %v4219 = vmul.f32 %v4059, %v4171
        %v4220 = vmul.f32 %v4060, %v4175
        %v4221 = vmul.f32 %v4061, %v4179
        %v4222 = vmul.f32 %v4062, %v4183
        %v4223 = vmul.f32 %v4063, %v4187
        %v4224 = vmul.f32 %v4064, %v4191
        %v4225 = vpack.c.bf16 %v4194, %v4193
        %v4226 = vpack.c.bf16 %v4196, %v4195
        %v4227 = vpack.c.bf16 %v4198, %v4197
        %v4228 = vpack.c.bf16 %v4200, %v4199
        %v4229 = vpack.c.bf16 %v4202, %v4201
        %v4230 = vpack.c.bf16 %v4204, %v4203
        %v4231 = vpack.c.bf16 %v4206, %v4205
        %v4232 = vpack.c.bf16 %v4208, %v4207
        %v4233 = vpack.c.bf16 %v4210, %v4209
        %v4234 = vpack.c.bf16 %v4212, %v4211
        %v4235 = vpack.c.bf16 %v4214, %v4213
        %v4236 = vpack.c.bf16 %v4216, %v4215
        %v4237 = vpack.c.bf16 %v4218, %v4217
        %v4238 = vpack.c.bf16 %v4220, %v4219
        %v4239 = vpack.c.bf16 %v4222, %v4221
        %v4240 = vpack.c.bf16 %v4224, %v4223
        %s4241 = scalar_lea.vmem %s4, 224
        %v4242 = vld [vmem:[%s4241] sm:$0xf]
        %v4243 = vld [vmem:[%s4241 + $0x4] sm:$0xf]
        %v4244 = vld [vmem:[%s4241 + $0x8] sm:$0xf]
        %v4245 = vld [vmem:[%s4241 + $0xc] sm:$0xf]
        %v4246 = vld [vmem:[%s4241 + $0x10] sm:$0xf]
        %v4247 = vld [vmem:[%s4241 + $0x14] sm:$0xf]
        %v4248 = vld [vmem:[%s4241 + $0x18] sm:$0xf]
        %v4249 = vld [vmem:[%s4241 + $0x1c] sm:$0xf]
        %v4258 = vunpack.c.l.b16 %v4242
        %v4259 = vunpack.c.l.b16 %v4243
        %v4260 = vunpack.c.l.b16 %v4244
        %v4261 = vunpack.c.l.b16 %v4245
        %v4262 = vunpack.c.l.b16 %v4246
        %v4263 = vunpack.c.l.b16 %v4247
        %v4264 = vunpack.c.l.b16 %v4248
        %v4265 = vunpack.c.l.b16 %v4249
        %v4266 = vpack.c.b16 %v4259, %v4258
        %v4267 = vpack.c.b16 %v4261, %v4260
        %v4268 = vpack.c.b16 %v4263, %v4262
        %v4269 = vpack.c.b16 %v4265, %v4264
        %v4275 = vsel %vm811, %v4225, 0
        %v4278 = vsel %vm811, %v4226, 0
        %v4281 = vsel %vm811, %v4227, 0
        %v4284 = vsel %vm811, %v4228, 0
        %v4287 = vsel %vm811, %v4229, 0
        %v4290 = vsel %vm811, %v4230, 0
        %v4293 = vsel %vm811, %v4231, 0
        %v4296 = vsel %vm811, %v4232, 0
        %v4299 = vsel %vm811, %v4233, 0
        %v4302 = vsel %vm811, %v4234, 0
        %v4305 = vsel %vm811, %v4235, 0
        %v4308 = vsel %vm811, %v4236, 0
        %v4311 = vsel %vm811, %v4237, 0
        %v4314 = vsel %vm811, %v4238, 0
        %v4317 = vsel %vm811, %v4239, 0
        %v4320 = vsel %vm811, %v4240, 0
        %4322 = vmatprep.subr.bf16.mxu0 0
        %4323 = vmatpush1.bf16.msra.mxu0 %v4266
        %4324 = vmatprep.subr.bf16.mxu0 0
        %4325 = vmatpush1.bf16.msra.mxu0 %v4267
        %4326 = vmatprep.subr.bf16.mxu0 0
        %4327 = vmatpush1.bf16.msra.mxu0 %v4268
        %4328 = vmatprep.subr.bf16.mxu0 0
        %4329 = vmatpush1.bf16.msra.mxu0 %v4269
        %4330 = vmatprep.subr.bf16.mxu0 0
        %4331 = vmatpush1.bf16.msra.mxu0 0
        %4332 = vmatprep.subr.bf16.mxu0 0
        %4333 = vmatpush1.bf16.msra.mxu0 0
        %4334 = vmatprep.subr.bf16.mxu0 0
        %4335 = vmatpush1.bf16.msra.mxu0 0
        %4336 = vmatprep.subr.bf16.mxu0 0
        %4337 = vmatpush1.bf16.msra.mxu0 0
        %4338 = vmatprep.subr.bf16.mxu0 0
        %4339 = vmatpush1.bf16.msra.mxu0 0
        %4340 = vmatprep.subr.bf16.mxu0 0
        %4341 = vmatpush1.bf16.msra.mxu0 0
        %4342 = vmatprep.subr.bf16.mxu0 0
        %4343 = vmatpush1.bf16.msra.mxu0 0
        %4344 = vmatprep.subr.bf16.mxu0 0
        %4345 = vmatpush1.bf16.msra.mxu0 0
        %4346 = vmatprep.subr.bf16.mxu0 0
        %4347 = vmatpush1.bf16.msra.mxu0 0
        %4348 = vmatprep.subr.bf16.mxu0 0
        %4349 = vmatpush1.bf16.msra.mxu0 0
        %4350 = vmatprep.subr.bf16.mxu0 0
        %4351 = vmatpush1.bf16.msra.mxu0 0
        %4352 = vmatprep.subr.bf16.mxu0 0
        %4353 = vmatpush1.bf16.msra.mxu0 0
        %4354 = vmatprep.mubr.bf16.mxu0 0
        %4355 = vmatmul.mubr.bf16.gmra.mrb[0].mxu0 %v4275
        %v4356 = vpop.f32.mrb[0].mxu0
        %v4357 = vadd.f32 0.0, %v4356
        %v4358 = vpop.f32.mrb[0].mxu0
        %v4359 = vpop.f32.mrb[0].mxu0
        %v4360 = vadd.f32 0.0, %v4359
        %v4361 = vpop.f32.mrb[0].mxu0
        %4362 = vmatprep.mubr.bf16.mxu0 0
        %4363 = vmatmul.mubr.bf16.gmra.mrb[0].mxu0 %v4278
        %v4364 = vpop.f32.mrb[0].mxu0
        %v4365 = vadd.f32 0.0, %v4364
        %v4366 = vpop.f32.mrb[0].mxu0
        %v4367 = vpop.f32.mrb[0].mxu0
        %v4368 = vadd.f32 0.0, %v4367
        %v4369 = vpop.f32.mrb[0].mxu0
        %4370 = vmatprep.mubr.bf16.mxu0 0
        %4371 = vmatmul.mubr.bf16.gmra.mrb[0].mxu0 %v4281
        %v4372 = vpop.f32.mrb[0].mxu0
        %v4373 = vadd.f32 0.0, %v4372
        %v4374 = vpop.f32.mrb[0].mxu0
        %v4375 = vpop.f32.mrb[0].mxu0
        %v4376 = vadd.f32 0.0, %v4375
        %v4377 = vpop.f32.mrb[0].mxu0
        %4378 = vmatprep.mubr.bf16.mxu0 0
        %4379 = vmatmul.mubr.bf16.gmra.mrb[0].mxu0 %v4284
        %v4380 = vpop.f32.mrb[0].mxu0
        %v4381 = vadd.f32 0.0, %v4380
        %v4382 = vpop.f32.mrb[0].mxu0
        %v4383 = vpop.f32.mrb[0].mxu0
        %v4384 = vadd.f32 0.0, %v4383
        %v4385 = vpop.f32.mrb[0].mxu0
        %4386 = vmatprep.mubr.bf16.mxu0 0
        %4387 = vmatmul.mubr.bf16.gmra.mrb[0].mxu0 %v4287
        %v4388 = vpop.f32.mrb[0].mxu0
        %v4389 = vadd.f32 0.0, %v4388
        %v4390 = vpop.f32.mrb[0].mxu0
        %v4391 = vpop.f32.mrb[0].mxu0
        %v4392 = vadd.f32 0.0, %v4391
        %v4393 = vpop.f32.mrb[0].mxu0
        %4394 = vmatprep.mubr.bf16.mxu0 0
        %4395 = vmatmul.mubr.bf16.gmra.mrb[0].mxu0 %v4290
        %v4396 = vpop.f32.mrb[0].mxu0
        %v4397 = vadd.f32 0.0, %v4396
        %v4398 = vpop.f32.mrb[0].mxu0
        %v4399 = vpop.f32.mrb[0].mxu0
        %v4400 = vadd.f32 0.0, %v4399
        %v4401 = vpop.f32.mrb[0].mxu0
        %4402 = vmatprep.mubr.bf16.mxu0 0
        %4403 = vmatmul.mubr.bf16.gmra.mrb[0].mxu0 %v4293
        %v4404 = vpop.f32.mrb[0].mxu0
        %v4405 = vadd.f32 0.0, %v4404
        %v4406 = vpop.f32.mrb[0].mxu0
        %v4407 = vpop.f32.mrb[0].mxu0
        %v4408 = vadd.f32 0.0, %v4407
        %v4409 = vpop.f32.mrb[0].mxu0
        %4410 = vmatprep.mubr.bf16.mxu0 0
        %4411 = vmatmul.mubr.bf16.gmra.mrb[0].mxu0 %v4296
        %v4412 = vpop.f32.mrb[0].mxu0
        %v4413 = vadd.f32 0.0, %v4412
        %v4414 = vpop.f32.mrb[0].mxu0
        %v4415 = vpop.f32.mrb[0].mxu0
        %v4416 = vadd.f32 0.0, %v4415
        %v4417 = vpop.f32.mrb[0].mxu0
        %4418 = vmatprep.mubr.bf16.mxu0 0
        %4419 = vmatmul.mubr.bf16.gmra.mrb[0].mxu0 %v4299
        %v4420 = vpop.f32.mrb[0].mxu0
        %v4421 = vadd.f32 0.0, %v4420
        %v4422 = vpop.f32.mrb[0].mxu0
        %v4423 = vpop.f32.mrb[0].mxu0
        %v4424 = vadd.f32 0.0, %v4423
        %v4425 = vpop.f32.mrb[0].mxu0
        %4426 = vmatprep.mubr.bf16.mxu0 0
        %4427 = vmatmul.mubr.bf16.gmra.mrb[0].mxu0 %v4302
        %v4428 = vpop.f32.mrb[0].mxu0
        %v4429 = vadd.f32 0.0, %v4428
        %v4430 = vpop.f32.mrb[0].mxu0
        %v4431 = vpop.f32.mrb[0].mxu0
        %v4432 = vadd.f32 0.0, %v4431
        %v4433 = vpop.f32.mrb[0].mxu0
        %4434 = vmatprep.mubr.bf16.mxu0 0
        %4435 = vmatmul.mubr.bf16.gmra.mrb[0].mxu0 %v4305
        %v4436 = vpop.f32.mrb[0].mxu0
        %v4437 = vadd.f32 0.0, %v4436
        %v4438 = vpop.f32.mrb[0].mxu0
        %v4439 = vpop.f32.mrb[0].mxu0
        %v4440 = vadd.f32 0.0, %v4439
        %v4441 = vpop.f32.mrb[0].mxu0
        %4442 = vmatprep.mubr.bf16.mxu0 0
        %4443 = vmatmul.mubr.bf16.gmra.mrb[0].mxu0 %v4308
        %v4444 = vpop.f32.mrb[0].mxu0
        %v4445 = vadd.f32 0.0, %v4444
        %v4446 = vpop.f32.mrb[0].mxu0
        %v4447 = vpop.f32.mrb[0].mxu0
        %v4448 = vadd.f32 0.0, %v4447
        %v4449 = vpop.f32.mrb[0].mxu0
        %4450 = vmatprep.mubr.bf16.mxu0 0
        %4451 = vmatmul.mubr.bf16.gmra.mrb[0].mxu0 %v4311
        %v4452 = vpop.f32.mrb[0].mxu0
        %v4453 = vadd.f32 0.0, %v4452
        %v4454 = vpop.f32.mrb[0].mxu0
        %v4455 = vpop.f32.mrb[0].mxu0
        %v4456 = vadd.f32 0.0, %v4455
        %v4457 = vpop.f32.mrb[0].mxu0
        %4458 = vmatprep.mubr.bf16.mxu0 0
        %4459 = vmatmul.mubr.bf16.gmra.mrb[0].mxu0 %v4314
        %v4460 = vpop.f32.mrb[0].mxu0
        %v4461 = vadd.f32 0.0, %v4460
        %v4462 = vpop.f32.mrb[0].mxu0
        %v4463 = vpop.f32.mrb[0].mxu0
        %v4464 = vadd.f32 0.0, %v4463
        %v4465 = vpop.f32.mrb[0].mxu0
        %4466 = vmatprep.mubr.bf16.mxu0 0
        %4467 = vmatmul.mubr.bf16.gmra.mrb[0].mxu0 %v4317
        %v4468 = vpop.f32.mrb[0].mxu0
        %v4469 = vadd.f32 0.0, %v4468
        %v4470 = vpop.f32.mrb[0].mxu0
        %v4471 = vpop.f32.mrb[0].mxu0
        %v4472 = vadd.f32 0.0, %v4471
        %v4473 = vpop.f32.mrb[0].mxu0
        %4474 = vmatprep.mubr.bf16.mxu0 0
        %4475 = vmatmul.mubr.bf16.gmra.mrb[0].mxu0 %v4320
        %v4476 = vpop.f32.mrb[0].mxu0
        %v4477 = vadd.f32 0.0, %v4476
        %v4478 = vpop.f32.mrb[0].mxu0
        %v4479 = vpop.f32.mrb[0].mxu0
        %v4480 = vadd.f32 0.0, %v4479
        %v4481 = vpop.f32.mrb[0].mxu0
        %4482 = vdwg.mxu0
        %v4483 = vadd.f32 %v4001, %v4357
        %v4484 = vadd.f32 %v4002, %v4360
        %v4485 = vadd.f32 %v4003, %v4365
        %v4486 = vadd.f32 %v4004, %v4368
        %v4487 = vadd.f32 %v4005, %v4373
        %v4488 = vadd.f32 %v4006, %v4376
        %v4489 = vadd.f32 %v4007, %v4381
        %v4490 = vadd.f32 %v4008, %v4384
        %v4491 = vadd.f32 %v4009, %v4389
        %v4492 = vadd.f32 %v4010, %v4392
        %v4493 = vadd.f32 %v4011, %v4397
        %v4494 = vadd.f32 %v4012, %v4400
        %v4495 = vadd.f32 %v4013, %v4405
        %v4496 = vadd.f32 %v4014, %v4408
        %v4497 = vadd.f32 %v4015, %v4413
        %v4498 = vadd.f32 %v4016, %v4416
        %v4499 = vadd.f32 %v4017, %v4421
        %v4500 = vadd.f32 %v4018, %v4424
        %v4501 = vadd.f32 %v4019, %v4429
        %v4502 = vadd.f32 %v4020, %v4432
        %v4503 = vadd.f32 %v4021, %v4437
        %v4504 = vadd.f32 %v4022, %v4440
        %v4505 = vadd.f32 %v4023, %v4445
        %v4506 = vadd.f32 %v4024, %v4448
        %v4507 = vadd.f32 %v4025, %v4453
        %v4508 = vadd.f32 %v4026, %v4456
        %v4509 = vadd.f32 %v4027, %v4461
        %v4510 = vadd.f32 %v4028, %v4464
        %v4511 = vadd.f32 %v4029, %v4469
        %v4512 = vadd.f32 %v4030, %v4472
        %v4513 = vadd.f32 %v4031, %v4477
        %v4514 = vadd.f32 %v4032, %v4480
        %v4515 = vld [vmem:[#allocation2 + $0x31] sm:$0xff]
        %v4516 = vld [vmem:[#allocation2 + $0x39] sm:$0xff]
        %v4517 = vld [vmem:[#allocation2 + $0x41] sm:$0xff]
        %v4518 = vld [vmem:[#allocation2 + $0x49] sm:$0xff]
        %v4519 = vld [vmem:[#allocation2 + $0x51] sm:$0xff]
        %v4520 = vld [vmem:[#allocation2 + $0x59] sm:$0xff]
        %v4521 = vld [vmem:[#allocation2 + $0x61] sm:$0xff]
        %v4522 = vld [vmem:[#allocation2 + $0x69] sm:$0xff]
        %v4523 = vld [vmem:[#allocation2 + $0x71] sm:$0xff]
        %v4524 = vld [vmem:[#allocation2 + $0x79] sm:$0xff]
        %v4525 = vld [vmem:[#allocation2 + $0x81] sm:$0xff]
        %v4526 = vld [vmem:[#allocation2 + $0x89] sm:$0xff]
        %v4527 = vld [vmem:[#allocation2 + $0x91] sm:$0xff]
        %v4528 = vld [vmem:[#allocation2 + $0x99] sm:$0xff]
        %v4529 = vld [vmem:[#allocation2 + $0xa1] sm:$0xff]
        %v4530 = vld [vmem:[#allocation2 + $0xa9] sm:$0xff]
        %v4531 = vld [vmem:[#allocation2 + $0xb1] sm:$0xff]
        %v4532 = vld [vmem:[#allocation2 + $0xb9] sm:$0xff]
        %v4533 = vld [vmem:[#allocation2 + $0xc1] sm:$0xff]
        %v4534 = vld [vmem:[#allocation2 + $0xc9] sm:$0xff]
        %v4535 = vld [vmem:[#allocation2 + $0xd1] sm:$0xff]
        %v4536 = vld [vmem:[#allocation2 + $0xd9] sm:$0xff]
        %v4537 = vld [vmem:[#allocation2 + $0xe1] sm:$0xff]
        %v4538 = vld [vmem:[#allocation2 + $0xe9] sm:$0xff]
        %v4539 = vld [vmem:[#allocation2 + $0xf1] sm:$0xff]
        %v4540 = vld [vmem:[#allocation2 + $0xf9] sm:$0xff]
        %v4541 = vld [vmem:[#allocation2 + $0x101] sm:$0xff]
        %v4542 = vld [vmem:[#allocation2 + $0x109] sm:$0xff]
        %v4543 = vld [vmem:[#allocation2 + $0x111] sm:$0xff]
        %v4544 = vld [vmem:[#allocation2 + $0x119] sm:$0xff]
        %v4545 = vld [vmem:[#allocation2 + $0x121] sm:$0xff]
        %v4546 = vld [vmem:[#allocation2 + $0x129] sm:$0xff]
        %4547 = vset.pattern.permute.xlu0 8
        %4548 = vperm.xlu0 %4547, %v852
        %v4549 = vpop.permute.xlu0 %4548
        %4551 = vset.pattern.permute.xlu0 8
        %4552 = vperm.xlu0 %4551, %v853
        %v4553 = vpop.permute.xlu0 %4552
        %4555 = vset.pattern.permute.xlu0 8
        %4556 = vperm.xlu0 %4555, %v854
        %v4557 = vpop.permute.xlu0 %4556
        %4559 = vset.pattern.permute.xlu0 8
        %4560 = vperm.xlu0 %4559, %v855
        %v4561 = vpop.permute.xlu0 %4560
        %4563 = vset.pattern.permute.xlu0 8
        %4564 = vperm.xlu0 %4563, %v856
        %v4565 = vpop.permute.xlu0 %4564
        %4567 = vset.pattern.permute.xlu0 8
        %4568 = vperm.xlu0 %4567, %v857
        %v4569 = vpop.permute.xlu0 %4568
        %4571 = vset.pattern.permute.xlu0 8
        %4572 = vperm.xlu0 %4571, %v858
        %v4573 = vpop.permute.xlu0 %4572
        %4575 = vset.pattern.permute.xlu0 8
        %4576 = vperm.xlu0 %4575, %v859
        %v4577 = vpop.permute.xlu0 %4576
        %4579 = vset.pattern.permute.xlu0 8
        %4580 = vperm.xlu0 %4579, %v860
        %v4581 = vpop.permute.xlu0 %4580
        %4583 = vset.pattern.permute.xlu0 8
        %4584 = vperm.xlu0 %4583, %v861
        %v4585 = vpop.permute.xlu0 %4584
        %4587 = vset.pattern.permute.xlu0 8
        %4588 = vperm.xlu0 %4587, %v862
        %v4589 = vpop.permute.xlu0 %4588
        %4591 = vset.pattern.permute.xlu0 8
        %4592 = vperm.xlu0 %4591, %v863
        %v4593 = vpop.permute.xlu0 %4592
        %4595 = vset.pattern.permute.xlu0 8
        %4596 = vperm.xlu0 %4595, %v864
        %v4597 = vpop.permute.xlu0 %4596
        %4599 = vset.pattern.permute.xlu0 8
        %4600 = vperm.xlu0 %4599, %v865
        %v4601 = vpop.permute.xlu0 %4600
        %4603 = vset.pattern.permute.xlu0 8
        %4604 = vperm.xlu0 %4603, %v866
        %v4605 = vpop.permute.xlu0 %4604
        %4607 = vset.pattern.permute.xlu0 8
        %4608 = vperm.xlu0 %4607, %v867
        %v4609 = vpop.permute.xlu0 %4608
        %4611 = vset.pattern.permute.xlu0 8
        %4612 = vperm.xlu0 %4611, %v868
        %v4613 = vpop.permute.xlu0 %4612
        %4615 = vset.pattern.permute.xlu0 8
        %4616 = vperm.xlu0 %4615, %v869
        %v4617 = vpop.permute.xlu0 %4616
        %4619 = vset.pattern.permute.xlu0 8
        %4620 = vperm.xlu0 %4619, %v870
        %v4621 = vpop.permute.xlu0 %4620
        %4623 = vset.pattern.permute.xlu0 8
        %4624 = vperm.xlu0 %4623, %v871
        %v4625 = vpop.permute.xlu0 %4624
        %4627 = vset.pattern.permute.xlu0 8
        %4628 = vperm.xlu0 %4627, %v872
        %v4629 = vpop.permute.xlu0 %4628
        %4631 = vset.pattern.permute.xlu0 8
        %4632 = vperm.xlu0 %4631, %v873
        %v4633 = vpop.permute.xlu0 %4632
        %4635 = vset.pattern.permute.xlu0 8
        %4636 = vperm.xlu0 %4635, %v874
        %v4637 = vpop.permute.xlu0 %4636
        %4639 = vset.pattern.permute.xlu0 8
        %4640 = vperm.xlu0 %4639, %v875
        %v4641 = vpop.permute.xlu0 %4640
        %4643 = vset.pattern.permute.xlu0 8
        %4644 = vperm.xlu0 %4643, %v876
        %v4645 = vpop.permute.xlu0 %4644
        %4647 = vset.pattern.permute.xlu0 8
        %4648 = vperm.xlu0 %4647, %v877
        %v4649 = vpop.permute.xlu0 %4648
        %4651 = vset.pattern.permute.xlu0 8
        %4652 = vperm.xlu0 %4651, %v878
        %v4653 = vpop.permute.xlu0 %4652
        %4655 = vset.pattern.permute.xlu0 8
        %4656 = vperm.xlu0 %4655, %v879
        %v4657 = vpop.permute.xlu0 %4656
        %4659 = vset.pattern.permute.xlu0 8
        %4660 = vperm.xlu0 %4659, %v880
        %v4661 = vpop.permute.xlu0 %4660
        %4663 = vset.pattern.permute.xlu0 8
        %4664 = vperm.xlu0 %4663, %v881
        %v4665 = vpop.permute.xlu0 %4664
        %4667 = vset.pattern.permute.xlu0 8
        %4668 = vperm.xlu0 %4667, %v882
        %v4669 = vpop.permute.xlu0 %4668
        %4671 = vset.pattern.permute.xlu0 8
        %4672 = vperm.xlu0 %4671, %v883
        %v4673 = vpop.permute.xlu0 %4672
        %v4675 = vmul.f32 %v4515, %v4549
        %v4676 = vmul.f32 %v4516, %v4553
        %v4677 = vmul.f32 %v4517, %v4557
        %v4678 = vmul.f32 %v4518, %v4561
        %v4679 = vmul.f32 %v4519, %v4565
        %v4680 = vmul.f32 %v4520, %v4569
        %v4681 = vmul.f32 %v4521, %v4573
        %v4682 = vmul.f32 %v4522, %v4577
        %v4683 = vmul.f32 %v4523, %v4581
        %v4684 = vmul.f32 %v4524, %v4585
        %v4685 = vmul.f32 %v4525, %v4589
        %v4686 = vmul.f32 %v4526, %v4593
        %v4687 = vmul.f32 %v4527, %v4597
        %v4688 = vmul.f32 %v4528, %v4601
        %v4689 = vmul.f32 %v4529, %v4605
        %v4690 = vmul.f32 %v4530, %v4609
        %v4691 = vmul.f32 %v4531, %v4613
        %v4692 = vmul.f32 %v4532, %v4617
        %v4693 = vmul.f32 %v4533, %v4621
        %v4694 = vmul.f32 %v4534, %v4625
        %v4695 = vmul.f32 %v4535, %v4629
        %v4696 = vmul.f32 %v4536, %v4633
        %v4697 = vmul.f32 %v4537, %v4637
        %v4698 = vmul.f32 %v4538, %v4641
        %v4699 = vmul.f32 %v4539, %v4645
        %v4700 = vmul.f32 %v4540, %v4649
        %v4701 = vmul.f32 %v4541, %v4653
        %v4702 = vmul.f32 %v4542, %v4657
        %v4703 = vmul.f32 %v4543, %v4661
        %v4704 = vmul.f32 %v4544, %v4665
        %v4705 = vmul.f32 %v4545, %v4669
        %v4706 = vmul.f32 %v4546, %v4673
        %v4707 = vpack.c.bf16 %v4676, %v4675
        %v4708 = vpack.c.bf16 %v4678, %v4677
        %v4709 = vpack.c.bf16 %v4680, %v4679
        %v4710 = vpack.c.bf16 %v4682, %v4681
        %v4711 = vpack.c.bf16 %v4684, %v4683
        %v4712 = vpack.c.bf16 %v4686, %v4685
        %v4713 = vpack.c.bf16 %v4688, %v4687
        %v4714 = vpack.c.bf16 %v4690, %v4689
        %v4715 = vpack.c.bf16 %v4692, %v4691
        %v4716 = vpack.c.bf16 %v4694, %v4693
        %v4717 = vpack.c.bf16 %v4696, %v4695
        %v4718 = vpack.c.bf16 %v4698, %v4697
        %v4719 = vpack.c.bf16 %v4700, %v4699
        %v4720 = vpack.c.bf16 %v4702, %v4701
        %v4721 = vpack.c.bf16 %v4704, %v4703
        %v4722 = vpack.c.bf16 %v4706, %v4705
        %s4723 = scalar_lea.vmem %s4, 256
        %v4724 = vld [vmem:[%s4723] sm:$0xf]
        %v4725 = vld [vmem:[%s4723 + $0x4] sm:$0xf]
        %v4726 = vld [vmem:[%s4723 + $0x8] sm:$0xf]
        %v4727 = vld [vmem:[%s4723 + $0xc] sm:$0xf]
        %v4728 = vld [vmem:[%s4723 + $0x10] sm:$0xf]
        %v4729 = vld [vmem:[%s4723 + $0x14] sm:$0xf]
        %v4730 = vld [vmem:[%s4723 + $0x18] sm:$0xf]
        %v4731 = vld [vmem:[%s4723 + $0x1c] sm:$0xf]
        %v4740 = vunpack.c.l.b16 %v4724
        %v4741 = vunpack.c.l.b16 %v4725
        %v4742 = vunpack.c.l.b16 %v4726
        %v4743 = vunpack.c.l.b16 %v4727
        %v4744 = vunpack.c.l.b16 %v4728
        %v4745 = vunpack.c.l.b16 %v4729
        %v4746 = vunpack.c.l.b16 %v4730
        %v4747 = vunpack.c.l.b16 %v4731
        %v4748 = vpack.c.b16 %v4741, %v4740
        %v4749 = vpack.c.b16 %v4743, %v4742
        %v4750 = vpack.c.b16 %v4745, %v4744
        %v4751 = vpack.c.b16 %v4747, %v4746
        %v4757 = vsel %vm811, %v4707, 0
        %v4760 = vsel %vm811, %v4708, 0
        %v4763 = vsel %vm811, %v4709, 0
        %v4766 = vsel %vm811, %v4710, 0
        %v4769 = vsel %vm811, %v4711, 0
        %v4772 = vsel %vm811, %v4712, 0
        %v4775 = vsel %vm811, %v4713, 0
        %v4778 = vsel %vm811, %v4714, 0
        %v4781 = vsel %vm811, %v4715, 0
        %v4784 = vsel %vm811, %v4716, 0
        %v4787 = vsel %vm811, %v4717, 0
        %v4790 = vsel %vm811, %v4718, 0
        %v4793 = vsel %vm811, %v4719, 0
        %v4796 = vsel %vm811, %v4720, 0
        %v4799 = vsel %vm811, %v4721, 0
        %v4802 = vsel %vm811, %v4722, 0
        %4804 = vmatprep.subr.bf16.mxu0 0
        %4805 = vmatpush1.bf16.msra.mxu0 %v4748
        %4806 = vmatprep.subr.bf16.mxu0 0
        %4807 = vmatpush1.bf16.msra.mxu0 %v4749
        %4808 = vmatprep.subr.bf16.mxu0 0
        %4809 = vmatpush1.bf16.msra.mxu0 %v4750
        %4810 = vmatprep.subr.bf16.mxu0 0
        %4811 = vmatpush1.bf16.msra.mxu0 %v4751
        %4812 = vmatprep.subr.bf16.mxu0 0
        %4813 = vmatpush1.bf16.msra.mxu0 0
        %4814 = vmatprep.subr.bf16.mxu0 0
        %4815 = vmatpush1.bf16.msra.mxu0 0
        %4816 = vmatprep.subr.bf16.mxu0 0
        %4817 = vmatpush1.bf16.msra.mxu0 0
        %4818 = vmatprep.subr.bf16.mxu0 0
        %4819 = vmatpush1.bf16.msra.mxu0 0
        %4820 = vmatprep.subr.bf16.mxu0 0
        %4821 = vmatpush1.bf16.msra.mxu0 0
        %4822 = vmatprep.subr.bf16.mxu0 0
        %4823 = vmatpush1.bf16.msra.mxu0 0
        %4824 = vmatprep.subr.bf16.mxu0 0
        %4825 = vmatpush1.bf16.msra.mxu0 0
        %4826 = vmatprep.subr.bf16.mxu0 0
        %4827 = vmatpush1.bf16.msra.mxu0 0
        %4828 = vmatprep.subr.bf16.mxu0 0
        %4829 = vmatpush1.bf16.msra.mxu0 0
        %4830 = vmatprep.subr.bf16.mxu0 0
        %4831 = vmatpush1.bf16.msra.mxu0 0
        %4832 = vmatprep.subr.bf16.mxu0 0
        %4833 = vmatpush1.bf16.msra.mxu0 0
        %4834 = vmatprep.subr.bf16.mxu0 0
        %4835 = vmatpush1.bf16.msra.mxu0 0
        %4836 = vmatprep.mubr.bf16.mxu0 0
        %4837 = vmatmul.mubr.bf16.gmra.mrb[0].mxu0 %v4757
        %v4838 = vpop.f32.mrb[0].mxu0
        %v4839 = vadd.f32 0.0, %v4838
        %v4840 = vpop.f32.mrb[0].mxu0
        %v4841 = vpop.f32.mrb[0].mxu0
        %v4842 = vadd.f32 0.0, %v4841
        %v4843 = vpop.f32.mrb[0].mxu0
        %4844 = vmatprep.mubr.bf16.mxu0 0
        %4845 = vmatmul.mubr.bf16.gmra.mrb[0].mxu0 %v4760
        %v4846 = vpop.f32.mrb[0].mxu0
        %v4847 = vadd.f32 0.0, %v4846
        %v4848 = vpop.f32.mrb[0].mxu0
        %v4849 = vpop.f32.mrb[0].mxu0
        %v4850 = vadd.f32 0.0, %v4849
        %v4851 = vpop.f32.mrb[0].mxu0
        %4852 = vmatprep.mubr.bf16.mxu0 0
        %4853 = vmatmul.mubr.bf16.gmra.mrb[0].mxu0 %v4763
        %v4854 = vpop.f32.mrb[0].mxu0
        %v4855 = vadd.f32 0.0, %v4854
        %v4856 = vpop.f32.mrb[0].mxu0
        %v4857 = vpop.f32.mrb[0].mxu0
        %v4858 = vadd.f32 0.0, %v4857
        %v4859 = vpop.f32.mrb[0].mxu0
        %4860 = vmatprep.mubr.bf16.mxu0 0
        %4861 = vmatmul.mubr.bf16.gmra.mrb[0].mxu0 %v4766
        %v4862 = vpop.f32.mrb[0].mxu0
        %v4863 = vadd.f32 0.0, %v4862
        %v4864 = vpop.f32.mrb[0].mxu0
        %v4865 = vpop.f32.mrb[0].mxu0
        %v4866 = vadd.f32 0.0, %v4865
        %v4867 = vpop.f32.mrb[0].mxu0
        %4868 = vmatprep.mubr.bf16.mxu0 0
        %4869 = vmatmul.mubr.bf16.gmra.mrb[0].mxu0 %v4769
        %v4870 = vpop.f32.mrb[0].mxu0
        %v4871 = vadd.f32 0.0, %v4870
        %v4872 = vpop.f32.mrb[0].mxu0
        %v4873 = vpop.f32.mrb[0].mxu0
        %v4874 = vadd.f32 0.0, %v4873
        %v4875 = vpop.f32.mrb[0].mxu0
        %4876 = vmatprep.mubr.bf16.mxu0 0
        %4877 = vmatmul.mubr.bf16.gmra.mrb[0].mxu0 %v4772
        %v4878 = vpop.f32.mrb[0].mxu0
        %v4879 = vadd.f32 0.0, %v4878
        %v4880 = vpop.f32.mrb[0].mxu0
        %v4881 = vpop.f32.mrb[0].mxu0
        %v4882 = vadd.f32 0.0, %v4881
        %v4883 = vpop.f32.mrb[0].mxu0
        %4884 = vmatprep.mubr.bf16.mxu0 0
        %4885 = vmatmul.mubr.bf16.gmra.mrb[0].mxu0 %v4775
        %v4886 = vpop.f32.mrb[0].mxu0
        %v4887 = vadd.f32 0.0, %v4886
        %v4888 = vpop.f32.mrb[0].mxu0
        %v4889 = vpop.f32.mrb[0].mxu0
        %v4890 = vadd.f32 0.0, %v4889
        %v4891 = vpop.f32.mrb[0].mxu0
        %4892 = vmatprep.mubr.bf16.mxu0 0
        %4893 = vmatmul.mubr.bf16.gmra.mrb[0].mxu0 %v4778
        %v4894 = vpop.f32.mrb[0].mxu0
        %v4895 = vadd.f32 0.0, %v4894
        %v4896 = vpop.f32.mrb[0].mxu0
        %v4897 = vpop.f32.mrb[0].mxu0
        %v4898 = vadd.f32 0.0, %v4897
        %v4899 = vpop.f32.mrb[0].mxu0
        %4900 = vmatprep.mubr.bf16.mxu0 0
        %4901 = vmatmul.mubr.bf16.gmra.mrb[0].mxu0 %v4781
        %v4902 = vpop.f32.mrb[0].mxu0
        %v4903 = vadd.f32 0.0, %v4902
        %v4904 = vpop.f32.mrb[0].mxu0
        %v4905 = vpop.f32.mrb[0].mxu0
        %v4906 = vadd.f32 0.0, %v4905
        %v4907 = vpop.f32.mrb[0].mxu0
        %4908 = vmatprep.mubr.bf16.mxu0 0
        %4909 = vmatmul.mubr.bf16.gmra.mrb[0].mxu0 %v4784
        %v4910 = vpop.f32.mrb[0].mxu0
        %v4911 = vadd.f32 0.0, %v4910
        %v4912 = vpop.f32.mrb[0].mxu0
        %v4913 = vpop.f32.mrb[0].mxu0
        %v4914 = vadd.f32 0.0, %v4913
        %v4915 = vpop.f32.mrb[0].mxu0
        %4916 = vmatprep.mubr.bf16.mxu0 0
        %4917 = vmatmul.mubr.bf16.gmra.mrb[0].mxu0 %v4787
        %v4918 = vpop.f32.mrb[0].mxu0
        %v4919 = vadd.f32 0.0, %v4918
        %v4920 = vpop.f32.mrb[0].mxu0
        %v4921 = vpop.f32.mrb[0].mxu0
        %v4922 = vadd.f32 0.0, %v4921
        %v4923 = vpop.f32.mrb[0].mxu0
        %4924 = vmatprep.mubr.bf16.mxu0 0
        %4925 = vmatmul.mubr.bf16.gmra.mrb[0].mxu0 %v4790
        %v4926 = vpop.f32.mrb[0].mxu0
        %v4927 = vadd.f32 0.0, %v4926
        %v4928 = vpop.f32.mrb[0].mxu0
        %v4929 = vpop.f32.mrb[0].mxu0
        %v4930 = vadd.f32 0.0, %v4929
        %v4931 = vpop.f32.mrb[0].mxu0
        %4932 = vmatprep.mubr.bf16.mxu0 0
        %4933 = vmatmul.mubr.bf16.gmra.mrb[0].mxu0 %v4793
        %v4934 = vpop.f32.mrb[0].mxu0
        %v4935 = vadd.f32 0.0, %v4934
        %v4936 = vpop.f32.mrb[0].mxu0
        %v4937 = vpop.f32.mrb[0].mxu0
        %v4938 = vadd.f32 0.0, %v4937
        %v4939 = vpop.f32.mrb[0].mxu0
        %4940 = vmatprep.mubr.bf16.mxu0 0
        %4941 = vmatmul.mubr.bf16.gmra.mrb[0].mxu0 %v4796
        %v4942 = vpop.f32.mrb[0].mxu0
        %v4943 = vadd.f32 0.0, %v4942
        %v4944 = vpop.f32.mrb[0].mxu0
        %v4945 = vpop.f32.mrb[0].mxu0
        %v4946 = vadd.f32 0.0, %v4945
        %v4947 = vpop.f32.mrb[0].mxu0
        %4948 = vmatprep.mubr.bf16.mxu0 0
        %4949 = vmatmul.mubr.bf16.gmra.mrb[0].mxu0 %v4799
        %v4950 = vpop.f32.mrb[0].mxu0
        %v4951 = vadd.f32 0.0, %v4950
        %v4952 = vpop.f32.mrb[0].mxu0
        %v4953 = vpop.f32.mrb[0].mxu0
        %v4954 = vadd.f32 0.0, %v4953
        %v4955 = vpop.f32.mrb[0].mxu0
        %4956 = vmatprep.mubr.bf16.mxu0 0
        %4957 = vmatmul.mubr.bf16.gmra.mrb[0].mxu0 %v4802
        %v4958 = vpop.f32.mrb[0].mxu0
        %v4959 = vadd.f32 0.0, %v4958
        %v4960 = vpop.f32.mrb[0].mxu0
        %v4961 = vpop.f32.mrb[0].mxu0
        %v4962 = vadd.f32 0.0, %v4961
        %v4963 = vpop.f32.mrb[0].mxu0
        %4964 = vdwg.mxu0
        %v4965 = vadd.f32 %v4483, %v4839
        %v4966 = vadd.f32 %v4484, %v4842
        %v4967 = vadd.f32 %v4485, %v4847
        %v4968 = vadd.f32 %v4486, %v4850
        %v4969 = vadd.f32 %v4487, %v4855
        %v4970 = vadd.f32 %v4488, %v4858
        %v4971 = vadd.f32 %v4489, %v4863
        %v4972 = vadd.f32 %v4490, %v4866
        %v4973 = vadd.f32 %v4491, %v4871
        %v4974 = vadd.f32 %v4492, %v4874
        %v4975 = vadd.f32 %v4493, %v4879
        %v4976 = vadd.f32 %v4494, %v4882
        %v4977 = vadd.f32 %v4495, %v4887
        %v4978 = vadd.f32 %v4496, %v4890
        %v4979 = vadd.f32 %v4497, %v4895
        %v4980 = vadd.f32 %v4498, %v4898
        %v4981 = vadd.f32 %v4499, %v4903
        %v4982 = vadd.f32 %v4500, %v4906
        %v4983 = vadd.f32 %v4501, %v4911
        %v4984 = vadd.f32 %v4502, %v4914
        %v4985 = vadd.f32 %v4503, %v4919
        %v4986 = vadd.f32 %v4504, %v4922
        %v4987 = vadd.f32 %v4505, %v4927
        %v4988 = vadd.f32 %v4506, %v4930
        %v4989 = vadd.f32 %v4507, %v4935
        %v4990 = vadd.f32 %v4508, %v4938
        %v4991 = vadd.f32 %v4509, %v4943
        %v4992 = vadd.f32 %v4510, %v4946
        %v4993 = vadd.f32 %v4511, %v4951
        %v4994 = vadd.f32 %v4512, %v4954
        %v4995 = vadd.f32 %v4513, %v4959
        %v4996 = vadd.f32 %v4514, %v4962
        %v4997 = vld [vmem:[%s5] sm:$0x1]
        %v4999 = vlaneseq
        %v5000 = vshrl.u32 %v4999, 7
        %v5001 = vsub.s32 0, %v5000
        %v5002 = vrot.slane %v4997, %v5001
        %v5004 = vadd.f32 %v4965, %v5002
        %v5005 = vadd.f32 %v4966, %v5002
        %v5006 = vadd.f32 %v4967, %v5002
        %v5007 = vadd.f32 %v4968, %v5002
        %v5008 = vadd.f32 %v4969, %v5002
        %v5009 = vadd.f32 %v4970, %v5002
        %v5010 = vadd.f32 %v4971, %v5002
        %v5011 = vadd.f32 %v4972, %v5002
        %v5012 = vadd.f32 %v4973, %v5002
        %v5013 = vadd.f32 %v4974, %v5002
        %v5014 = vadd.f32 %v4975, %v5002
        %v5015 = vadd.f32 %v4976, %v5002
        %v5016 = vadd.f32 %v4977, %v5002
        %v5017 = vadd.f32 %v4978, %v5002
        %v5018 = vadd.f32 %v4979, %v5002
        %v5019 = vadd.f32 %v4980, %v5002
        %v5020 = vadd.f32 %v4981, %v5002
        %v5021 = vadd.f32 %v4982, %v5002
        %v5022 = vadd.f32 %v4983, %v5002
        %v5023 = vadd.f32 %v4984, %v5002
        %v5024 = vadd.f32 %v4985, %v5002
        %v5025 = vadd.f32 %v4986, %v5002
        %v5026 = vadd.f32 %v4987, %v5002
        %v5027 = vadd.f32 %v4988, %v5002
        %v5028 = vadd.f32 %v4989, %v5002
        %v5029 = vadd.f32 %v4990, %v5002
        %v5030 = vadd.f32 %v4991, %v5002
        %v5031 = vadd.f32 %v4992, %v5002
        %v5032 = vadd.f32 %v4993, %v5002
        %v5033 = vadd.f32 %v4994, %v5002
        %v5034 = vadd.f32 %v4995, %v5002
        %v5035 = vadd.f32 %v4996, %v5002
        %v5036 = vld [vmem:[%s363] sm:$0xff]
        %v5037 = vld [vmem:[%s363 + $0x8] sm:$0xff]
        %v5038 = vld [vmem:[%s363 + $0x10] sm:$0xff]
        %v5039 = vld [vmem:[%s363 + $0x18] sm:$0xff]
        %v5040 = vld [vmem:[%s363 + $0x20] sm:$0xff]
        %v5041 = vld [vmem:[%s363 + $0x28] sm:$0xff]
        %v5042 = vld [vmem:[%s363 + $0x30] sm:$0xff]
        %v5043 = vld [vmem:[%s363 + $0x38] sm:$0xff]
        %v5044 = vld [vmem:[%s363 + $0x40] sm:$0xff]
        %v5045 = vld [vmem:[%s363 + $0x48] sm:$0xff]
        %v5046 = vld [vmem:[%s363 + $0x50] sm:$0xff]
        %v5047 = vld [vmem:[%s363 + $0x58] sm:$0xff]
        %v5048 = vld [vmem:[%s363 + $0x60] sm:$0xff]
        %v5049 = vld [vmem:[%s363 + $0x68] sm:$0xff]
        %v5050 = vld [vmem:[%s363 + $0x70] sm:$0xff]
        %v5051 = vld [vmem:[%s363 + $0x78] sm:$0xff]
        %v5052 = vld [vmem:[%s363 + $0x80] sm:$0xff]
        %v5053 = vld [vmem:[%s363 + $0x88] sm:$0xff]
        %v5054 = vld [vmem:[%s363 + $0x90] sm:$0xff]
        %v5055 = vld [vmem:[%s363 + $0x98] sm:$0xff]
        %v5056 = vld [vmem:[%s363 + $0xa0] sm:$0xff]
        %v5057 = vld [vmem:[%s363 + $0xa8] sm:$0xff]
        %v5058 = vld [vmem:[%s363 + $0xb0] sm:$0xff]
        %v5059 = vld [vmem:[%s363 + $0xb8] sm:$0xff]
        %v5060 = vld [vmem:[%s363 + $0xc0] sm:$0xff]
        %v5061 = vld [vmem:[%s363 + $0xc8] sm:$0xff]
        %v5062 = vld [vmem:[%s363 + $0xd0] sm:$0xff]
        %v5063 = vld [vmem:[%s363 + $0xd8] sm:$0xff]
        %v5064 = vld [vmem:[%s363 + $0xe0] sm:$0xff]
        %v5065 = vld [vmem:[%s363 + $0xe8] sm:$0xff]
        %v5066 = vld [vmem:[%s363 + $0xf0] sm:$0xff]
        %v5067 = vld [vmem:[%s363 + $0xf8] sm:$0xff]
        %v5068 = vadd.f32 %v5004, 1.0
        %v5069 = vadd.f32 %v5005, 1.0
        %v5070 = vadd.f32 %v5006, 1.0
        %v5071 = vadd.f32 %v5007, 1.0
        %v5072 = vadd.f32 %v5008, 1.0
        %v5073 = vadd.f32 %v5009, 1.0
        %v5074 = vadd.f32 %v5010, 1.0
        %v5075 = vadd.f32 %v5011, 1.0
        %v5076 = vadd.f32 %v5012, 1.0
        %v5077 = vadd.f32 %v5013, 1.0
        %v5078 = vadd.f32 %v5014, 1.0
        %v5079 = vadd.f32 %v5015, 1.0
        %v5080 = vadd.f32 %v5016, 1.0
        %v5081 = vadd.f32 %v5017, 1.0
        %v5082 = vadd.f32 %v5018, 1.0
        %v5083 = vadd.f32 %v5019, 1.0
        %v5084 = vadd.f32 %v5020, 1.0
        %v5085 = vadd.f32 %v5021, 1.0
        %v5086 = vadd.f32 %v5022, 1.0
        %v5087 = vadd.f32 %v5023, 1.0
        %v5088 = vadd.f32 %v5024, 1.0
        %v5089 = vadd.f32 %v5025, 1.0
        %v5090 = vadd.f32 %v5026, 1.0
        %v5091 = vadd.f32 %v5027, 1.0
        %v5092 = vadd.f32 %v5028, 1.0
        %v5093 = vadd.f32 %v5029, 1.0
        %v5094 = vadd.f32 %v5030, 1.0
        %v5095 = vadd.f32 %v5031, 1.0
        %v5096 = vadd.f32 %v5032, 1.0
        %v5097 = vadd.f32 %v5033, 1.0
        %v5098 = vadd.f32 %v5034, 1.0
        %v5099 = vadd.f32 %v5035, 1.0
        %v5100 = vmul.f32 %v5036, %v5068
        %v5101 = vmul.f32 %v5037, %v5069
        %v5102 = vmul.f32 %v5038, %v5070
        %v5103 = vmul.f32 %v5039, %v5071
        %v5104 = vmul.f32 %v5040, %v5072
        %v5105 = vmul.f32 %v5041, %v5073
        %v5106 = vmul.f32 %v5042, %v5074
        %v5107 = vmul.f32 %v5043, %v5075
        %v5108 = vmul.f32 %v5044, %v5076
        %v5109 = vmul.f32 %v5045, %v5077
        %v5110 = vmul.f32 %v5046, %v5078
        %v5111 = vmul.f32 %v5047, %v5079
        %v5112 = vmul.f32 %v5048, %v5080
        %v5113 = vmul.f32 %v5049, %v5081
        %v5114 = vmul.f32 %v5050, %v5082
        %v5115 = vmul.f32 %v5051, %v5083
        %v5116 = vmul.f32 %v5052, %v5084
        %v5117 = vmul.f32 %v5053, %v5085
        %v5118 = vmul.f32 %v5054, %v5086
        %v5119 = vmul.f32 %v5055, %v5087
        %v5120 = vmul.f32 %v5056, %v5088
        %v5121 = vmul.f32 %v5057, %v5089
        %v5122 = vmul.f32 %v5058, %v5090
        %v5123 = vmul.f32 %v5059, %v5091
        %v5124 = vmul.f32 %v5060, %v5092
        %v5125 = vmul.f32 %v5061, %v5093
        %v5126 = vmul.f32 %v5062, %v5094
        %v5127 = vmul.f32 %v5063, %v5095
        %v5128 = vmul.f32 %v5064, %v5096
        %v5129 = vmul.f32 %v5065, %v5097
        %v5130 = vmul.f32 %v5066, %v5098
        %v5131 = vmul.f32 %v5067, %v5099
        %5164 = vrot.lane.b32.xlu0 %v5004, 64
        %v5165 = vpop.permute.xlu0 %5164
        %5166 = vrot.lane.b32.xlu0 %v5005, 64
        %v5167 = vpop.permute.xlu0 %5166
        %5168 = vrot.lane.b32.xlu0 %v5006, 64
        %v5169 = vpop.permute.xlu0 %5168
        %5170 = vrot.lane.b32.xlu0 %v5007, 64
        %v5171 = vpop.permute.xlu0 %5170
        %5172 = vrot.lane.b32.xlu0 %v5008, 64
        %v5173 = vpop.permute.xlu0 %5172
        %5174 = vrot.lane.b32.xlu0 %v5009, 64
        %v5175 = vpop.permute.xlu0 %5174
        %5176 = vrot.lane.b32.xlu0 %v5010, 64
        %v5177 = vpop.permute.xlu0 %5176
        %5178 = vrot.lane.b32.xlu0 %v5011, 64
        %v5179 = vpop.permute.xlu0 %5178
        %5180 = vrot.lane.b32.xlu0 %v5012, 64
        %v5181 = vpop.permute.xlu0 %5180
        %5182 = vrot.lane.b32.xlu0 %v5013, 64
        %v5183 = vpop.permute.xlu0 %5182
        %5184 = vrot.lane.b32.xlu0 %v5014, 64
        %v5185 = vpop.permute.xlu0 %5184
        %5186 = vrot.lane.b32.xlu0 %v5015, 64
        %v5187 = vpop.permute.xlu0 %5186
        %5188 = vrot.lane.b32.xlu0 %v5016, 64
        %v5189 = vpop.permute.xlu0 %5188
        %5190 = vrot.lane.b32.xlu0 %v5017, 64
        %v5191 = vpop.permute.xlu0 %5190
        %5192 = vrot.lane.b32.xlu0 %v5018, 64
        %v5193 = vpop.permute.xlu0 %5192
        %5194 = vrot.lane.b32.xlu0 %v5019, 64
        %v5195 = vpop.permute.xlu0 %5194
        %5196 = vrot.lane.b32.xlu0 %v5020, 64
        %v5197 = vpop.permute.xlu0 %5196
        %5198 = vrot.lane.b32.xlu0 %v5021, 64
        %v5199 = vpop.permute.xlu0 %5198
        %5200 = vrot.lane.b32.xlu0 %v5022, 64
        %v5201 = vpop.permute.xlu0 %5200
        %5202 = vrot.lane.b32.xlu0 %v5023, 64
        %v5203 = vpop.permute.xlu0 %5202
        %5204 = vrot.lane.b32.xlu0 %v5024, 64
        %v5205 = vpop.permute.xlu0 %5204
        %5206 = vrot.lane.b32.xlu0 %v5025, 64
        %v5207 = vpop.permute.xlu0 %5206
        %5208 = vrot.lane.b32.xlu0 %v5026, 64
        %v5209 = vpop.permute.xlu0 %5208
        %5210 = vrot.lane.b32.xlu0 %v5027, 64
        %v5211 = vpop.permute.xlu0 %5210
        %5212 = vrot.lane.b32.xlu0 %v5028, 64
        %v5213 = vpop.permute.xlu0 %5212
        %5214 = vrot.lane.b32.xlu0 %v5029, 64
        %v5215 = vpop.permute.xlu0 %5214
        %5216 = vrot.lane.b32.xlu0 %v5030, 64
        %v5217 = vpop.permute.xlu0 %5216
        %5218 = vrot.lane.b32.xlu0 %v5031, 64
        %v5219 = vpop.permute.xlu0 %5218
        %5220 = vrot.lane.b32.xlu0 %v5032, 64
        %v5221 = vpop.permute.xlu0 %5220
        %5222 = vrot.lane.b32.xlu0 %v5033, 64
        %v5223 = vpop.permute.xlu0 %5222
        %5224 = vrot.lane.b32.xlu0 %v5034, 64
        %v5225 = vpop.permute.xlu0 %5224
        %5226 = vrot.lane.b32.xlu0 %v5035, 64
        %v5227 = vpop.permute.xlu0 %5226
        %v5260 = vadd.f32 %v5100, %v5165
        %v5261 = vadd.f32 %v5101, %v5167
        %v5262 = vadd.f32 %v5102, %v5169
        %v5263 = vadd.f32 %v5103, %v5171
        %v5264 = vadd.f32 %v5104, %v5173
        %v5265 = vadd.f32 %v5105, %v5175
        %v5266 = vadd.f32 %v5106, %v5177
        %v5267 = vadd.f32 %v5107, %v5179
        %v5268 = vadd.f32 %v5108, %v5181
        %v5269 = vadd.f32 %v5109, %v5183
        %v5270 = vadd.f32 %v5110, %v5185
        %v5271 = vadd.f32 %v5111, %v5187
        %v5272 = vadd.f32 %v5112, %v5189
        %v5273 = vadd.f32 %v5113, %v5191
        %v5274 = vadd.f32 %v5114, %v5193
        %v5275 = vadd.f32 %v5115, %v5195
        %v5276 = vadd.f32 %v5116, %v5197
        %v5277 = vadd.f32 %v5117, %v5199
        %v5278 = vadd.f32 %v5118, %v5201
        %v5279 = vadd.f32 %v5119, %v5203
        %v5280 = vadd.f32 %v5120, %v5205
        %v5281 = vadd.f32 %v5121, %v5207
        %v5282 = vadd.f32 %v5122, %v5209
        %v5283 = vadd.f32 %v5123, %v5211
        %v5284 = vadd.f32 %v5124, %v5213
        %v5285 = vadd.f32 %v5125, %v5215
        %v5286 = vadd.f32 %v5126, %v5217
        %v5287 = vadd.f32 %v5127, %v5219
        %v5288 = vadd.f32 %v5128, %v5221
        %v5289 = vadd.f32 %v5129, %v5223
        %v5290 = vadd.f32 %v5130, %v5225
        %v5291 = vadd.f32 %v5131, %v5227
        %5292 = vst.msk [vmem:[%s344] sm:$0xff] %vm811, %v5260
        %5293 = vst.msk [vmem:[%s344 + $0x8] sm:$0xff] %vm811, %v5261
        %5294 = vst.msk [vmem:[%s344 + $0x10] sm:$0xff] %vm811, %v5262
        %5295 = vst.msk [vmem:[%s344 + $0x18] sm:$0xff] %vm811, %v5263
        %5296 = vst.msk [vmem:[%s344 + $0x20] sm:$0xff] %vm811, %v5264
        %5297 = vst.msk [vmem:[%s344 + $0x28] sm:$0xff] %vm811, %v5265
        %5298 = vst.msk [vmem:[%s344 + $0x30] sm:$0xff] %vm811, %v5266
        %5299 = vst.msk [vmem:[%s344 + $0x38] sm:$0xff] %vm811, %v5267
        %5300 = vst.msk [vmem:[%s344 + $0x40] sm:$0xff] %vm811, %v5268
        %5301 = vst.msk [vmem:[%s344 + $0x48] sm:$0xff] %vm811, %v5269
        %5302 = vst.msk [vmem:[%s344 + $0x50] sm:$0xff] %vm811, %v5270
        %5303 = vst.msk [vmem:[%s344 + $0x58] sm:$0xff] %vm811, %v5271
        %5304 = vst.msk [vmem:[%s344 + $0x60] sm:$0xff] %vm811, %v5272
        %5305 = vst.msk [vmem:[%s344 + $0x68] sm:$0xff] %vm811, %v5273
        %5306 = vst.msk [vmem:[%s344 + $0x70] sm:$0xff] %vm811, %v5274
        %5307 = vst.msk [vmem:[%s344 + $0x78] sm:$0xff] %vm811, %v5275
        %5308 = vst.msk [vmem:[%s344 + $0x80] sm:$0xff] %vm811, %v5276
        %5309 = vst.msk [vmem:[%s344 + $0x88] sm:$0xff] %vm811, %v5277
        %5310 = vst.msk [vmem:[%s344 + $0x90] sm:$0xff] %vm811, %v5278
        %5311 = vst.msk [vmem:[%s344 + $0x98] sm:$0xff] %vm811, %v5279
        %5312 = vst.msk [vmem:[%s344 + $0xa0] sm:$0xff] %vm811, %v5280
        %5313 = vst.msk [vmem:[%s344 + $0xa8] sm:$0xff] %vm811, %v5281
        %5314 = vst.msk [vmem:[%s344 + $0xb0] sm:$0xff] %vm811, %v5282
        %5315 = vst.msk [vmem:[%s344 + $0xb8] sm:$0xff] %vm811, %v5283
        %5316 = vst.msk [vmem:[%s344 + $0xc0] sm:$0xff] %vm811, %v5284
        %5317 = vst.msk [vmem:[%s344 + $0xc8] sm:$0xff] %vm811, %v5285
        %5318 = vst.msk [vmem:[%s344 + $0xd0] sm:$0xff] %vm811, %v5286
        %5319 = vst.msk [vmem:[%s344 + $0xd8] sm:$0xff] %vm811, %v5287
        %5320 = vst.msk [vmem:[%s344 + $0xe0] sm:$0xff] %vm811, %v5288
        %5321 = vst.msk [vmem:[%s344 + $0xe8] sm:$0xff] %vm811, %v5289
        %5322 = vst.msk [vmem:[%s344 + $0xf0] sm:$0xff] %vm811, %v5290
        %5323 = vst.msk [vmem:[%s344 + $0xf8] sm:$0xff] %vm811, %v5291
        %5324 = vst.msk [vmem:[%s351] sm:$0xff] %vm811, %v5004
        %5325 = vst.msk [vmem:[%s351 + $0x8] sm:$0xff] %vm811, %v5005
        %5326 = vst.msk [vmem:[%s351 + $0x10] sm:$0xff] %vm811, %v5006
        %5327 = vst.msk [vmem:[%s351 + $0x18] sm:$0xff] %vm811, %v5007
        %5328 = vst.msk [vmem:[%s351 + $0x20] sm:$0xff] %vm811, %v5008
        %5329 = vst.msk [vmem:[%s351 + $0x28] sm:$0xff] %vm811, %v5009
        %5330 = vst.msk [vmem:[%s351 + $0x30] sm:$0xff] %vm811, %v5010
        %5331 = vst.msk [vmem:[%s351 + $0x38] sm:$0xff] %vm811, %v5011
        %5332 = vst.msk [vmem:[%s351 + $0x40] sm:$0xff] %vm811, %v5012
        %5333 = vst.msk [vmem:[%s351 + $0x48] sm:$0xff] %vm811, %v5013
        %5334 = vst.msk [vmem:[%s351 + $0x50] sm:$0xff] %vm811, %v5014
        %5335 = vst.msk [vmem:[%s351 + $0x58] sm:$0xff] %vm811, %v5015
        %5336 = vst.msk [vmem:[%s351 + $0x60] sm:$0xff] %vm811, %v5016
        %5337 = vst.msk [vmem:[%s351 + $0x68] sm:$0xff] %vm811, %v5017
        %5338 = vst.msk [vmem:[%s351 + $0x70] sm:$0xff] %vm811, %v5018
        %5339 = vst.msk [vmem:[%s351 + $0x78] sm:$0xff] %vm811, %v5019
        %5340 = vst.msk [vmem:[%s351 + $0x80] sm:$0xff] %vm811, %v5020
        %5341 = vst.msk [vmem:[%s351 + $0x88] sm:$0xff] %vm811, %v5021
        %5342 = vst.msk [vmem:[%s351 + $0x90] sm:$0xff] %vm811, %v5022
        %5343 = vst.msk [vmem:[%s351 + $0x98] sm:$0xff] %vm811, %v5023
        %5344 = vst.msk [vmem:[%s351 + $0xa0] sm:$0xff] %vm811, %v5024
        %5345 = vst.msk [vmem:[%s351 + $0xa8] sm:$0xff] %vm811, %v5025
        %5346 = vst.msk [vmem:[%s351 + $0xb0] sm:$0xff] %vm811, %v5026
        %5347 = vst.msk [vmem:[%s351 + $0xb8] sm:$0xff] %vm811, %v5027
        %5348 = vst.msk [vmem:[%s351 + $0xc0] sm:$0xff] %vm811, %v5028
        %5349 = vst.msk [vmem:[%s351 + $0xc8] sm:$0xff] %vm811, %v5029
        %5350 = vst.msk [vmem:[%s351 + $0xd0] sm:$0xff] %vm811, %v5030
        %5351 = vst.msk [vmem:[%s351 + $0xd8] sm:$0xff] %vm811, %v5031
        %5352 = vst.msk [vmem:[%s351 + $0xe0] sm:$0xff] %vm811, %v5032
        %5353 = vst.msk [vmem:[%s351 + $0xe8] sm:$0xff] %vm811, %v5033
        %5354 = vst.msk [vmem:[%s351 + $0xf0] sm:$0xff] %vm811, %v5034
        %5355 = vst.msk [vmem:[%s351 + $0xf8] sm:$0xff] %vm811, %v5035
        %5356 = vst.msk [vmem:[%s358] sm:$0xff] %vm811, %v5165
        %5357 = vst.msk [vmem:[%s358 + $0x8] sm:$0xff] %vm811, %v5167
        %5358 = vst.msk [vmem:[%s358 + $0x10] sm:$0xff] %vm811, %v5169
        %5359 = vst.msk [vmem:[%s358 + $0x18] sm:$0xff] %vm811, %v5171
        %5360 = vst.msk [vmem:[%s358 + $0x20] sm:$0xff] %vm811, %v5173
        %5361 = vst.msk [vmem:[%s358 + $0x28] sm:$0xff] %vm811, %v5175
        %5362 = vst.msk [vmem:[%s358 + $0x30] sm:$0xff] %vm811, %v5177
        %5363 = vst.msk [vmem:[%s358 + $0x38] sm:$0xff] %vm811, %v5179
        %5364 = vst.msk [vmem:[%s358 + $0x40] sm:$0xff] %vm811, %v5181
        %5365 = vst.msk [vmem:[%s358 + $0x48] sm:$0xff] %vm811, %v5183
        %5366 = vst.msk [vmem:[%s358 + $0x50] sm:$0xff] %vm811, %v5185
        %5367 = vst.msk [vmem:[%s358 + $0x58] sm:$0xff] %vm811, %v5187
        %5368 = vst.msk [vmem:[%s358 + $0x60] sm:$0xff] %vm811, %v5189
        %5369 = vst.msk [vmem:[%s358 + $0x68] sm:$0xff] %vm811, %v5191
        %5370 = vst.msk [vmem:[%s358 + $0x70] sm:$0xff] %vm811, %v5193
        %5371 = vst.msk [vmem:[%s358 + $0x78] sm:$0xff] %vm811, %v5195
        %5372 = vst.msk [vmem:[%s358 + $0x80] sm:$0xff] %vm811, %v5197
        %5373 = vst.msk [vmem:[%s358 + $0x88] sm:$0xff] %vm811, %v5199
        %5374 = vst.msk [vmem:[%s358 + $0x90] sm:$0xff] %vm811, %v5201
        %5375 = vst.msk [vmem:[%s358 + $0x98] sm:$0xff] %vm811, %v5203
        %5376 = vst.msk [vmem:[%s358 + $0xa0] sm:$0xff] %vm811, %v5205
        %5377 = vst.msk [vmem:[%s358 + $0xa8] sm:$0xff] %vm811, %v5207
        %5378 = vst.msk [vmem:[%s358 + $0xb0] sm:$0xff] %vm811, %v5209
        %5379 = vst.msk [vmem:[%s358 + $0xb8] sm:$0xff] %vm811, %v5211
        %5380 = vst.msk [vmem:[%s358 + $0xc0] sm:$0xff] %vm811, %v5213
        %5381 = vst.msk [vmem:[%s358 + $0xc8] sm:$0xff] %vm811, %v5215
        %5382 = vst.msk [vmem:[%s358 + $0xd0] sm:$0xff] %vm811, %v5217
        %5383 = vst.msk [vmem:[%s358 + $0xd8] sm:$0xff] %vm811, %v5219
        %5384 = vst.msk [vmem:[%s358 + $0xe0] sm:$0xff] %vm811, %v5221
        %5385 = vst.msk [vmem:[%s358 + $0xe8] sm:$0xff] %vm811, %v5223
        %5386 = vst.msk [vmem:[%s358 + $0xf0] sm:$0xff] %vm811, %v5225
        %5387 = vst.msk [vmem:[%s358 + $0xf8] sm:$0xff] %vm811, %v5227
        %s5388 = sand.u32 %s192, 1
        %s5389 = scalar_lea.sflag [#allocation4], %s5388
        %s5390 = sand.u32 %s192, 1
        %s5391 = smul.addr %s5390, 256
        %s5392 = scalar_lea.vmem [#allocation3], %s5391
        %s5393 = sand.u32 %s27, 1
        %s5394 = scalar_lea.sflag [#allocation6], %s5393
        %s5395 = sand.u32 %s218, 1
        %s5396 = smul.addr %s5395, 256
        %s5397 = scalar_lea.vmem [#allocation5], %s5396
        %s5398 = sand.u32 %s27, 1
        %s5399 = scalar_lea.sflag [#allocation6], %s5398
        %s5400 = sand.u32 %s244, 1
        %s5401 = smul.addr %s5400, 256
        %s5402 = scalar_lea.vmem [#allocation7], %s5401
        // Predicated region
        $region49: #{sft_layer.1} parent=47 // pred_check
          %p5403 = pneg %p202
        $region50: #{sft_layer.1} parent=47 // pred_check_branch
          %5405 = sbr.rel (%p5403) target = $region52
        $region51: #{sft_layer.1} parent=47 // pred_region
          %s5407 = ssub.s32 4096, 4096
          %5408 = vsyncadd %s5389, %s5407
          %s5409 = smul.addr %s27, 32
          %s5410 = smul.addr %s5409, 128
          %s5411 = scalar_lea.hbm %s7, %s5410
          %s5412 = sshll.u32 %s5392, 4
          %s5413 = int_to_ptr.vmem [resolvable:$true] %s5412
          %5418 = dma.vmem_to_hbm [thread:$0]  %s5413, 4096, %s5411, %s5389, 128, 128, 8
        $region52: #{sft_layer.1} parent=47 // pred_fallthru
          _
        // Predicated region
        $region53: #{sft_layer.1} parent=47 // pred_check
          %p5419 = pneg %p228
        $region54: #{sft_layer.1} parent=47 // pred_check_branch
          %5421 = sbr.rel (%p5419) target = $region56
        $region55: #{sft_layer.1} parent=47 // pred_region
          %s5423 = ssub.s32 4096, 4096
          %5424 = vsyncadd %s5394, %s5423
          %s5425 = smul.addr %s27, 32
          %s5426 = smul.addr %s5425, 128
          %s5427 = scalar_lea.hbm %s8, %s5426
          %s5428 = sshll.u32 %s5397, 4
          %s5429 = int_to_ptr.vmem [resolvable:$true] %s5428
          %5434 = dma.vmem_to_hbm [thread:$0]  %s5429, 4096, %s5427, %s5394, 128, 128, 8
        $region56: #{sft_layer.1} parent=47 // pred_fallthru
          _
        // Predicated region
        $region57: #{sft_layer.1} parent=47 // pred_check
          %p5435 = pneg %p254
        $region58: #{sft_layer.1} parent=47 // pred_check_branch
          %5437 = sbr.rel (%p5435) target = $region60
        $region59: #{sft_layer.1} parent=47 // pred_region
          %s5439 = ssub.s32 4096, 4096
          %5440 = vsyncadd %s5399, %s5439
          %s5441 = smul.addr %s27, 32
          %s5442 = smul.addr %s5441, 128
          %s5443 = scalar_lea.hbm %s9, %s5442
          %s5444 = sshll.u32 %s5402, 4
          %s5445 = int_to_ptr.vmem [resolvable:$true] %s5444
          %5450 = dma.vmem_to_hbm [thread:$0]  %s5445, 4096, %s5443, %s5399, 128, 128, 8
        $region60: #{sft_layer.1} parent=47 // pred_fallthru
          _
      $region48: #{sft_layer.1} parent=5 // pred_fallthru
        _
      %p5451 = scmp.le.s32.totalorder 2, %s22
      // Predicated region
      $region61: #{sft_layer.1} parent=5 // pred_check
        %p5452 = pneg %p5451
      $region62: #{sft_layer.1} parent=5 // pred_check_branch
        %5454 = sbr.rel (%p5452) target = $region64
      $region63: #{sft_layer.1} parent=5 // pred_region
        %s5455 = ssub.s32 %s22, 2
        // Predicated region
        $region65: #{sft_layer.1} parent=63 // pred_check
          %p5456 = pneg %p208
        $region66: #{sft_layer.1} parent=63 // pred_check_branch
          %5458 = sbr.rel (%p5456) target = $region68
        $region67: #{sft_layer.1} parent=63 // pred_region
          %s5459 = sand.u32 %s193, 1
          %s5460 = scalar_lea.sflag [#allocation4], %s5459
          %s5461 = sand.u32 %s193, 1
          %s5462 = smul.addr %s5461, 256
          %s5463 = scalar_lea.vmem [#allocation3], %s5462
          %5464 = dma.done %s5460, 4096
        $region68: #{sft_layer.1} parent=63 // pred_fallthru
          _
        // Predicated region
        $region69: #{sft_layer.1} parent=63 // pred_check
          %p5465 = pneg %p234
        $region70: #{sft_layer.1} parent=63 // pred_check_branch
          %5467 = sbr.rel (%p5465) target = $region72
        $region71: #{sft_layer.1} parent=63 // pred_region
          %s5468 = sand.u32 %s28, 1
          %s5469 = scalar_lea.sflag [#allocation6], %s5468
          %s5470 = sand.u32 %s219, 1
          %s5471 = smul.addr %s5470, 256
          %s5472 = scalar_lea.vmem [#allocation5], %s5471
          %5473 = dma.done %s5469, 4096
        $region72: #{sft_layer.1} parent=63 // pred_fallthru
          _
        // Predicated region
        $region73: #{sft_layer.1} parent=63 // pred_check
          %p5474 = pneg %p260
        $region74: #{sft_layer.1} parent=63 // pred_check_branch
          %5476 = sbr.rel (%p5474) target = $region76
        $region75: #{sft_layer.1} parent=63 // pred_region
          %s5477 = sand.u32 %s28, 1
          %s5478 = scalar_lea.sflag [#allocation6], %s5477
          %s5479 = sand.u32 %s245, 1
          %s5480 = smul.addr %s5479, 256
          %s5481 = scalar_lea.vmem [#allocation7], %s5480
          %5482 = dma.done %s5478, 4096
        $region76: #{sft_layer.1} parent=63 // pred_fallthru
          _
      $region64: #{sft_layer.1} parent=5 // pred_fallthru
        _
    $region6: #{sft_layer.1} parent=1 // loop_footer
      %s26 = sadd.s32 1, %s22
    $region7: #{sft_layer.1} parent=1 // loop_footer_branch
      %21 = sbr.rel target = $region3
    $region8: #{sft_layer.1} parent=1 // loop_exit
      _
    %5483 = vsyncpa [#allocation4], 1
    %s5484 = scalar_lea.sflag [#allocation4], 1
    %5485 = vsyncpa %s5484, 1
    %5486 = vsyncpa [#allocation6], 1
    %s5487 = scalar_lea.sflag [#allocation6], 1
    %5488 = vsyncpa %s5487, 1

</llo_original>
